<compile_context>
chip_gen: v7x
topology: tpu7x:2x2x1
jax: 0.10.0
libtpu: 0.0.40
codegen_flags: <defaults>
</compile_context>

<pallas_src>
import functools

import jax
import jax.numpy as jnp
import numpy as np
from jax.experimental import pallas as pl
from jax.experimental.pallas import tpu as pltpu


D_PAD = 128  # hidden dim padded to one full lane width


# ----------------------------------------------------------------------------
# Pallas kernel: one scale per grid step (all regions / bags / instances fused)
# ----------------------------------------------------------------------------
def _mil_kernel(x_ref,               # VMEM (R, C_aug) bf16: flattened instances (+ ones col)
                w1_ref,              # VMEM (C_aug, D_PAD) bf16: proj∘enc with bias row, /N_s
                pool_ref,            # VMEM (G, R) bf16: block-diag ones (instance mean-pool)
                w2_ref,              # VMEM (D_PAD, D_PAD) bf16: region encoder weights / P
                b2_ref,              # VMEM (1, D_PAD) f32: region encoder bias / P
                out_ref,             # VMEM (B, D_PAD) f32: this scale's bag embedding slice
                *, n_regions):
    # Side encoder: ReLU(x_aug @ W1_aug).  Projection, bias and 1/N_s are all
    # folded into W1_aug; padded instance rows (zero ones-column) are exactly 0.
    h1 = jnp.maximum(
        jnp.dot(x_ref[...], w1_ref[...], preferred_element_type=jnp.float32), 0.0)

    # Instance mean-pool on the MXU: (G, R) ones-blocks @ h1 -> (G, D_PAD).
    # No masking needed (padded h1 rows are exactly zero); 1/N_s already in W1.
    r = jnp.dot(pool_ref[...], h1.astype(jnp.bfloat16),
                preferred_element_type=jnp.float32)

    # Region encoder: ReLU(r @ (W2/P) + b2/P); G = P*B rows = one sublane tile.
    h2 = jnp.maximum(
        jnp.dot(r.astype(jnp.bfloat16), w2_ref[...],
                preferred_element_type=jnp.float32) + b2_ref[...], 0.0)

    # Region mean over P (1/P already folded into W2/b2): static slice-adds,
    # stays 2-D, written straight into the scale's lane-dense 128-wide slice.
    b = out_ref.shape[0]
    acc = h2[0:b, :]
    for p in range(1, n_regions):
        acc = acc + h2[p * b:(p + 1) * b, :]
    out_ref[...] = acc


# ----------------------------------------------------------------------------
# Forward pass (Pallas for the MIL hot path, XLA for glue + tiny classifier)
# ----------------------------------------------------------------------------
def nested_pyramidal_mil_forward(x, params, scales):
    B, P, C, H, W = x.shape
    S = len(scales)
    E = params["enc_ws"][0].shape[1]
    D = params["reg_w"].shape[1]
    # region encoder is Linear(E, D) applied to the D-dim side output
    assert params["reg_w"].shape[0] == E and E == D, \
        "region encoder input dim must equal side encoder output dim"

    # -- glue: stand-in inst_encoder pyramid = per-scale spatial average pool --
    # (its Linear projection is folded into the kernel's side-encoder weights)
    n_per_scale = [(H // 2 ** s) * (W // 2 ** s) for s in scales]
    n_max = max(n_per_scale)
    C_aug = ((C + 1 + 7) // 8) * 8        # features + ones(bias) column, padded to 8
    R = P * B * n_max                     # flattened instance rows per scale
    G = P * B                             # (region, bag) groups

    x_blocks = []
    for si, s in enumerate(scales):
        f = 2 ** s
        n_s = n_per_scale[si]
        xp = x.reshape(B, P, C, H // f, f, W // f, f).mean(axis=(4, 6))   # (B,P,C,h,w)
        xp = jnp.transpose(xp, (1, 0, 3, 4, 2)).reshape(P, B, n_s, C)     # (P,B,N_s,C)
        ones = jnp.ones((P, B, n_s, 1), xp.dtype)                         # bias column
        xa = jnp.concatenate([xp, ones], axis=-1)
        xa = jnp.pad(xa, ((0, 0), (0, 0), (0, n_max - n_s), (0, C_aug - (C + 1))))
        x_blocks.append(xa.reshape(R, C_aug))
    x_all = jnp.stack(x_blocks, axis=0).astype(jnp.bfloat16)              # (S,R,C_aug)

    # Fused side-encoder weights: inst_encoder projection folded in, bias as an
    # extra row (matched to the ones column), 1/N_s folded in (ReLU(a)/N ==
    # ReLU(a/N) for N>0), hidden dim zero-padded to 128 lanes (exact padding).
    w1_blocks = []
    for si in range(S):
        w_eff = params["proj_ws"][si] @ params["enc_ws"][si]              # (C, D)
        b_eff = params["proj_bs"][si] @ params["enc_ws"][si] + params["enc_bs"][si]
        w1 = jnp.concatenate([w_eff, b_eff[None, :]], axis=0) / n_per_scale[si]
        w1 = jnp.pad(w1, ((0, C_aug - (C + 1)), (0, D_PAD - D)))
        w1_blocks.append(w1)
    w1_all = jnp.stack(w1_blocks, axis=0).astype(jnp.bfloat16)            # (S,C_aug,128)

    # Instance mean-pool as an MXU matmul: block-diagonal ones, shared by all
    # scales (padded instance rows of h1 are exactly zero -> no masking needed).
    pool = jnp.asarray(
        np.kron(np.eye(G, dtype=np.float32), np.ones((1, n_max), np.float32)),
        jnp.bfloat16)                                                      # (G, R)

    # Region encoder weights with 1/P folded in (ReLU homogeneity again).
    w2 = jnp.pad(params["reg_w"] / P,
                 ((0, D_PAD - E), (0, D_PAD - D))).astype(jnp.bfloat16)    # (128,128)
    b2 = jnp.pad(params["reg_b"][None, :] / P, ((0, 0), (0, D_PAD - D)))   # (1,128) f32

    kernel = functools.partial(_mil_kernel, n_regions=P)

    flops = 2 * S * (R * C_aug * D_PAD + G * R * D_PAD + G * D_PAD * D_PAD)
    bytes_accessed = (S * R * C_aug * 2 + S * C_aug * D_PAD * 2 + G * R * 2
                      + D_PAD * D_PAD * 2 + D_PAD * 4 + B * S * D_PAD * 4)

    grid_spec = pltpu.PrefetchScalarGridSpec(
        num_scalar_prefetch=0,
        grid=(S,),
        in_specs=[
            pl.BlockSpec((None, R, C_aug), lambda s: (s, 0, 0)),
            pl.BlockSpec((None, C_aug, D_PAD), lambda s: (s, 0, 0)),
            pl.BlockSpec((G, R), lambda s: (0, 0)),
            pl.BlockSpec((D_PAD, D_PAD), lambda s: (0, 0)),
            pl.BlockSpec((1, D_PAD), lambda s: (0, 0)),
        ],
        # each scale's bag embedding goes straight into its slice of (B, S*128)
        out_specs=pl.BlockSpec((B, D_PAD), lambda s: (0, s)),
    )

    bags = pl.pallas_call(
        kernel,
        grid_spec=grid_spec,
        out_shape=jax.ShapeDtypeStruct((B, S * D_PAD), jnp.float32),
        compiler_params=pltpu.CompilerParams(
            dimension_semantics=("parallel",),      # scales -> v7x TensorCores
            vmem_limit_bytes=32 * 1024 * 1024),
        cost_estimate=pl.CostEstimate(flops=flops, transcendentals=0,
                                      bytes_accessed=bytes_accessed),
    )(x_all, w1_all, pool, w2, b2)

    # drop hidden-dim padding -> (B, S*D) scale-concatenated features
    z = bags.reshape(B, S, D_PAD)[:, :, :D].reshape(B, S * D)

    # classifier head (dropout p=0 => identity): tiny GEMM + sigmoid in XLA.
    logits = z @ params["cls_w"] + params["cls_b"]
    return jax.nn.sigmoid(logits)[:, 0]                       # .squeeze(1)


# ----------------------------------------------------------------------------
# Pure-JAX f32 reference (module semantics, unfused)
# ----------------------------------------------------------------------------
def reference_forward(x, params, scales):
    B, P, C, H, W = x.shape
    bags = []
    for si, s in enumerate(scales):
        f = 2 ** s
        xp = x.reshape(B, P, C, H // f, f, W // f, f).mean(axis=(4, 6))
        xp = jnp.transpose(xp, (0, 1, 3, 4, 2)).reshape(B, P, (H // f) * (W // f), C)
        feat = xp @ params["proj_ws"][si] + params["proj_bs"][si]        # inst_encoder
        h1 = jax.nn.relu(feat @ params["enc_ws"][si] + params["enc_bs"][si])
        r = h1.mean(axis=2)                                              # MeanPooling
        h2 = jax.nn.relu(r @ params["reg_w"] + params["reg_b"])
        bags.append(h2.mean(axis=1))                                     # MeanPooling
    z = jnp.concatenate(bags, axis=1)                                    # ConcatAggregator
    return jax.nn.sigmoid(z @ params["cls_w"] + params["cls_b"])[:, 0]


# ----------------------------------------------------------------------------
# Main
# ----------------------------------------------------------------------------
if __name__ == "__main__":
    B, P, C, H, W = 2, 4, 4, 16, 16     # bags, regions/patches, NCHW per patch
    E = 32                              # embedding_size
    D = 32                              # fcl_encoder_dim (== E, per module)
    scales = [0, 1]
    num_classes = 1

    key = jax.random.PRNGKey(0)
    ks = jax.random.split(key, 16)

    def nrm(k, shape, scale=0.05):
        return (scale * jax.random.normal(k, shape)).astype(jnp.float32)

    params = {
        # external inst_encoder projections (one per scale)
        "proj_ws": [nrm(ks[0], (C, E)), nrm(ks[1], (C, E))],
        "proj_bs": [nrm(ks[2], (E,)), nrm(ks[3], (E,))],
        # side_inst_aggregator['encoders'][f'encoder_{scale}'] : Linear(E, D)
        "enc_ws": [nrm(ks[4], (E, D)), nrm(ks[5], (E, D))],
        "enc_bs": [nrm(ks[6], (D,)), nrm(ks[7], (D,))],
        # region_aggregator['encoder'] : Linear(E, D)
        "reg_w": nrm(ks[8], (E, D)),
        "reg_b": nrm(ks[9], (D,)),
        # classifier head: Linear(len(scales)*D, num_classes) + Sigmoid
        "cls_w": nrm(ks[10], (len(scales) * D, num_classes)),
        "cls_b": nrm(ks[11], (num_classes,)),
    }

    x = jax.random.normal(ks[12], (B, P, C, H, W), dtype=jnp.float32)

    fwd = jax.jit(lambda xx, pp: nested_pyramidal_mil_forward(xx, pp, tuple(scales)))
    out = jax.block_until_ready(fwd(x, params))

    ref = jax.block_until_ready(reference_forward(x, params, scales))
    assert out.shape == (B,), out.shape
    # bf16 matmul operands (f32 accumulation) => looser tolerance vs f32 ref
    np.testing.assert_allclose(np.asarray(out), np.asarray(ref),
                               rtol=1e-2, atol=1e-2)
    print("KERNEL_OK")
</pallas_src>

<mosaic_0001>
module attributes {stable_mosaic.version = 11 : i64} {
  func.func @_mil_kernel(%arg0: i32, %arg1: memref<1x2048x8xbf16, #tpu.memory_space<vmem>>, %arg2: memref<1x8x128xbf16, #tpu.memory_space<vmem>>, %arg3: memref<8x2048xbf16, #tpu.memory_space<vmem>>, %arg4: memref<128x128xbf16, #tpu.memory_space<vmem>>, %arg5: memref<1x128xf32, #tpu.memory_space<vmem>>, %arg6: memref<2x128xf32, #tpu.memory_space<vmem>>) attributes {dimension_semantics = [#tpu.dimension_semantics<parallel>], iteration_bounds = array<i64: 2>, scalar_prefetch = 0 : i64, scratch_operands = 0 : i64, tpu.core_type = #tpu.core_type<tc>, window_params = [{transform_indices = @transform_0, window_bounds = array<i64: 1, 2048, 8>}, {transform_indices = @transform_1, window_bounds = array<i64: 1, 8, 128>}, {pipeline_mode = #tpu.pipeline_mode<synchronous>, transform_indices = @transform_2, window_bounds = array<i64: 8, 2048>}, {pipeline_mode = #tpu.pipeline_mode<synchronous>, transform_indices = @transform_3, window_bounds = array<i64: 128, 128>}, {pipeline_mode = #tpu.pipeline_mode<synchronous>, transform_indices = @transform_4, window_bounds = array<i64: 1, 128>}, {transform_indices = @transform_5, window_bounds = array<i64: 2, 128>}]} {
    %c0 = arith.constant 0 : index
    %c0_0 = arith.constant 0 : index
    %c0_1 = arith.constant 0 : index
    %0 = vector.load %arg1[%c0, %c0_0, %c0_1] : memref<1x2048x8xbf16, #tpu.memory_space<vmem>>, vector<1x2048x8xbf16>
    %1 = vector.shape_cast %0 : vector<1x2048x8xbf16> to vector<2048x8xbf16>
    %c0_2 = arith.constant 0 : index
    %c0_3 = arith.constant 0 : index
    %c0_4 = arith.constant 0 : index
    %2 = vector.load %arg2[%c0_2, %c0_3, %c0_4] : memref<1x8x128xbf16, #tpu.memory_space<vmem>>, vector<1x8x128xbf16>
    %3 = vector.shape_cast %2 : vector<1x8x128xbf16> to vector<8x128xbf16>
    %cst = arith.constant dense<0.000000e+00> : vector<2048x128xf32>
    %4 = tpu.matmul %1, %3, %cst {dimension_numbers = #tpu.dot_dimension_numbers<[1], [0], [0], [1], [0, 0, 1, 1], [], []>} : vector<2048x8xbf16>, vector<8x128xbf16>, vector<2048x128xf32> -> vector<2048x128xf32>
    %cst_5 = arith.constant 0.000000e+00 : f32
    %5 = vector.broadcast %cst_5 : f32 to vector<2048x128xf32>
    %6 = arith.maximumf %4, %5 : vector<2048x128xf32>
    %c0_6 = arith.constant 0 : index
    %c0_7 = arith.constant 0 : index
    %7 = vector.load %arg3[%c0_6, %c0_7] : memref<8x2048xbf16, #tpu.memory_space<vmem>>, vector<8x2048xbf16>
    %8 = arith.truncf %6 : vector<2048x128xf32> to vector<2048x128xbf16>
    %cst_8 = arith.constant dense<0.000000e+00> : vector<8x128xf32>
    %9 = tpu.matmul %7, %8, %cst_8 {dimension_numbers = #tpu.dot_dimension_numbers<[1], [0], [0], [1], [0, 0, 1, 1], [], []>} : vector<8x2048xbf16>, vector<2048x128xbf16>, vector<8x128xf32> -> vector<8x128xf32>
    %10 = arith.truncf %9 : vector<8x128xf32> to vector<8x128xbf16>
    %c0_9 = arith.constant 0 : index
    %c0_10 = arith.constant 0 : index
    %11 = vector.load %arg4[%c0_9, %c0_10] : memref<128x128xbf16, #tpu.memory_space<vmem>>, vector<128x128xbf16>
    %cst_11 = arith.constant dense<0.000000e+00> : vector<8x128xf32>
    %12 = tpu.matmul %10, %11, %cst_11 {dimension_numbers = #tpu.dot_dimension_numbers<[1], [0], [0], [1], [0, 0, 1, 1], [], []>} : vector<8x128xbf16>, vector<128x128xbf16>, vector<8x128xf32> -> vector<8x128xf32>
    %c0_12 = arith.constant 0 : index
    %c0_13 = arith.constant 0 : index
    %13 = vector.load %arg5[%c0_12, %c0_13] : memref<1x128xf32, #tpu.memory_space<vmem>>, vector<1x128xf32>
    %14 = vector.broadcast %13 : vector<1x128xf32> to vector<8x128xf32>
    %15 = arith.addf %12, %14 : vector<8x128xf32>
    %cst_14 = arith.constant 0.000000e+00 : f32
    %16 = vector.broadcast %cst_14 : f32 to vector<8x128xf32>
    %17 = arith.maximumf %15, %16 : vector<8x128xf32>
    %18 = vector.extract_strided_slice %17 {offsets = [0, 0], sizes = [2, 128], strides = [1, 1]} : vector<8x128xf32> to vector<2x128xf32>
    %19 = vector.extract_strided_slice %17 {offsets = [2, 0], sizes = [2, 128], strides = [1, 1]} : vector<8x128xf32> to vector<2x128xf32>
    %20 = arith.addf %18, %19 : vector<2x128xf32>
    %21 = vector.extract_strided_slice %17 {offsets = [4, 0], sizes = [2, 128], strides = [1, 1]} : vector<8x128xf32> to vector<2x128xf32>
    %22 = arith.addf %20, %21 : vector<2x128xf32>
    %23 = vector.extract_strided_slice %17 {offsets = [6, 0], sizes = [2, 128], strides = [1, 1]} : vector<8x128xf32> to vector<2x128xf32>
    %24 = arith.addf %22, %23 : vector<2x128xf32>
    %c0_15 = arith.constant 0 : index
    %c0_16 = arith.constant 0 : index
    %25 = vector.load %arg6[%c0_15, %c0_16] : memref<2x128xf32, #tpu.memory_space<vmem>>, vector<2x128xf32>
    tpu.vector_store %arg6[%c0_15, %c0_16], %24 {strides = array<i32>} : memref<2x128xf32, #tpu.memory_space<vmem>>, vector<2x128xf32>,
    return
  }
  func.func @transform_0(%arg0: i32) -> (i32, i32, i32) {
    %c0_i32 = arith.constant 0 : i32
    %c0_i32_0 = arith.constant 0 : i32
    %c0_i32_1 = arith.constant 0 : i32
    return %arg0, %c0_i32, %c0_i32_0 : i32, i32, i32
  }
  func.func @transform_1(%arg0: i32) -> (i32, i32, i32) {
    %c0_i32 = arith.constant 0 : i32
    %c0_i32_0 = arith.constant 0 : i32
    %c0_i32_1 = arith.constant 0 : i32
    return %arg0, %c0_i32, %c0_i32_0 : i32, i32, i32
  }
  func.func @transform_2(%arg0: i32) -> (i32, i32) {
    %c0_i32 = arith.constant 0 : i32
    %c0_i32_0 = arith.constant 0 : i32
    %c0_i32_1 = arith.constant 0 : i32
    return %c0_i32, %c0_i32_0 : i32, i32
  }
  func.func @transform_3(%arg0: i32) -> (i32, i32) {
    %c0_i32 = arith.constant 0 : i32
    %c0_i32_0 = arith.constant 0 : i32
    %c0_i32_1 = arith.constant 0 : i32
    return %c0_i32, %c0_i32_0 : i32, i32
  }
  func.func @transform_4(%arg0: i32) -> (i32, i32) {
    %c0_i32 = arith.constant 0 : i32
    %c0_i32_0 = arith.constant 0 : i32
    %c0_i32_1 = arith.constant 0 : i32
    return %c0_i32, %c0_i32_0 : i32, i32
  }
  func.func @transform_5(%arg0: i32) -> (i32, i32) {
    %c0_i32 = arith.constant 0 : i32
    %c0_i32_0 = arith.constant 0 : i32
    return %c0_i32, %arg0 : i32, i32
  }
}

</mosaic_0001>

<llo_original>
// kernel: _lambda_.1
$region0: #{_lambda_.1}
  #allocation0 [shape = 'u32[]', space=smem, size = 0x4, offset = 0x4, fixed_abs, tag = 'smem constant byte address 0x4 - core index']
  #allocation1 [shape = 'u32[144,128]{1,0:T(1,128)}', space=vmem, size = 0x12000, scoped, tag = 'internal scratch']
  %s0 = inlined_call_operand.vmem [shape: bf16[2,2048,8], index: 0, kind: input, shape index: {}]
  %s1 = inlined_call_operand.vmem [shape: bf16[2,8,128], index: 1, kind: input, shape index: {}]
  %s2 = inlined_call_operand.vmem [shape: bf16[8,2048], index: 2, kind: input, shape index: {}]
  %s3 = inlined_call_operand.vmem [shape: bf16[128,128], index: 3, kind: input, shape index: {}]
  %s4 = inlined_call_operand.vmem [shape: f32[1,128], index: 4, kind: input, shape index: {}]
  %s5 = inlined_call_operand.vmem [shape: f32[2,256], index: 5, kind: output, shape index: {}]
  %s6 = sld [smem:[#allocation0]]
  $region53: #{_lambda_.1} parent=0
    _
  %s8 = ssub.s32 1, %s6
  %s9 = scalar_select 0, %s8, %s6
  loop: start=0, step=1, limit=4
  $region2: #{_lambda_.1} parent=0 // loop_pre_header
    _
  $region3: #{_lambda_.1} parent=0 // loop_header
    %s11 = sphi 0, %s15
    %p12 = scmp.ge.s32.totalorder %s11, 4
    %s21 = sphi 0, %s23
    %s24 = sphi 0, %s21
    %s25 = sphi 0, %s24
    %s41 = sphi 0, %s25
    %s47 = sphi 0, %s49
    %s50 = sphi 0, %s47
    %s51 = sphi 0, %s50
    %s67 = sphi 0, %s51
    %s71 = sphi 0, %s71
    %s73 = sphi 0, %s71
    %s74 = sphi 0, %s73
    %s88 = sphi 0, %s74
    %s92 = sphi 0, %s92
    %s94 = sphi 0, %s92
    %s95 = sphi 0, %s94
    %s109 = sphi 0, %s95
    %s113 = sphi 0, %s113
    %s115 = sphi 0, %s113
    %s116 = sphi 0, %s115
    %s130 = sphi 0, %s116
    %s136 = sphi 0, %s138
    %s139 = sphi 0, %s136
    %s140 = sphi 0, %s139
    %s156 = sphi 0, %s140
  $region4: #{_lambda_.1} parent=0 // loop_header_branch
    %14 = sbr.rel (%p12) target = $region8
  $region5: #{_lambda_.1} parent=0 // loop_body
    %s16 = ssub.s32 %s11, 1
    %s17 = ssub.s32 %s11, 2
    %s18 = sadd.s32 %s11, 1
    %s19 = ssub.s32 %s11, %s18
    %p20 = scmp.eq.s32.totalorder %s19, 0
    %s22 = sadd.s32 %s21, 1
    %s23 = scalar_select %p20, %s21, %s22
    %p26 = pneg %p20
    %p27 = scmp.eq.s32.totalorder %s11, 1
    %p28 = por %p26, %p27
    %p29 = scmp.ne.s32.totalorder %s21, %s24
    %p30 = scmp.eq.s32.totalorder %s11, 0
    %p31 = por %p29, %p30
    %p32 = scmp.ne.s32.totalorder %s21, %s24
    %p33 = scmp.eq.s32.totalorder %s16, 1
    %p34 = por %p32, %p33
    %p35 = scmp.ne.s32.totalorder %s24, %s25
    %p36 = scmp.eq.s32.totalorder %s16, 0
    %p37 = por %p35, %p36
    %p38 = scmp.ne.s32.totalorder %s24, %s25
    %p39 = scmp.eq.s32.totalorder %s17, 1
    %p40 = por %p38, %p39
    %p42 = scmp.ne.s32.totalorder %s25, %s41
    %p43 = scmp.eq.s32.totalorder %s17, 0
    %p44 = por %p42, %p43
    %s45 = ssub.s32 %s11, %s18
    %p46 = scmp.eq.s32.totalorder %s45, 0
    %s48 = sadd.s32 %s47, 1
    %s49 = scalar_select %p46, %s47, %s48
    %p52 = pneg %p46
    %p53 = scmp.eq.s32.totalorder %s11, 1
    %p54 = por %p52, %p53
    %p55 = scmp.ne.s32.totalorder %s47, %s50
    %p56 = scmp.eq.s32.totalorder %s11, 0
    %p57 = por %p55, %p56
    %p58 = scmp.ne.s32.totalorder %s47, %s50
    %p59 = scmp.eq.s32.totalorder %s16, 1
    %p60 = por %p58, %p59
    %p61 = scmp.ne.s32.totalorder %s50, %s51
    %p62 = scmp.eq.s32.totalorder %s16, 0
    %p63 = por %p61, %p62
    %p64 = scmp.ne.s32.totalorder %s50, %s51
    %p65 = scmp.eq.s32.totalorder %s17, 1
    %p66 = por %p64, %p65
    %p68 = scmp.ne.s32.totalorder %s51, %s67
    %p69 = scmp.eq.s32.totalorder %s17, 0
    %p70 = por %p68, %p69
    %s72 = sadd.s32 %s71, 1
    %p75 = scmp.eq.s32.totalorder %s11, 1
    %p76 = scmp.ne.s32.totalorder %s71, %s73
    %p77 = scmp.eq.s32.totalorder %s11, 0
    %p78 = por %p76, %p77
    %p79 = scmp.ne.s32.totalorder %s71, %s73
    %p80 = scmp.eq.s32.totalorder %s16, 1
    %p81 = por %p79, %p80
    %p82 = scmp.ne.s32.totalorder %s73, %s74
    %p83 = scmp.eq.s32.totalorder %s16, 0
    %p84 = por %p82, %p83
    %p85 = scmp.ne.s32.totalorder %s73, %s74
    %p86 = scmp.eq.s32.totalorder %s17, 1
    %p87 = por %p85, %p86
    %p89 = scmp.ne.s32.totalorder %s74, %s88
    %p90 = scmp.eq.s32.totalorder %s17, 0
    %p91 = por %p89, %p90
    %s93 = sadd.s32 %s92, 1
    %p96 = scmp.eq.s32.totalorder %s11, 1
    %p97 = scmp.ne.s32.totalorder %s92, %s94
    %p98 = scmp.eq.s32.totalorder %s11, 0
    %p99 = por %p97, %p98
    %p100 = scmp.ne.s32.totalorder %s92, %s94
    %p101 = scmp.eq.s32.totalorder %s16, 1
    %p102 = por %p100, %p101
    %p103 = scmp.ne.s32.totalorder %s94, %s95
    %p104 = scmp.eq.s32.totalorder %s16, 0
    %p105 = por %p103, %p104
    %p106 = scmp.ne.s32.totalorder %s94, %s95
    %p107 = scmp.eq.s32.totalorder %s17, 1
    %p108 = por %p106, %p107
    %p110 = scmp.ne.s32.totalorder %s95, %s109
    %p111 = scmp.eq.s32.totalorder %s17, 0
    %p112 = por %p110, %p111
    %s114 = sadd.s32 %s113, 1
    %p117 = scmp.eq.s32.totalorder %s11, 1
    %p118 = scmp.ne.s32.totalorder %s113, %s115
    %p119 = scmp.eq.s32.totalorder %s11, 0
    %p120 = por %p118, %p119
    %p121 = scmp.ne.s32.totalorder %s113, %s115
    %p122 = scmp.eq.s32.totalorder %s16, 1
    %p123 = por %p121, %p122
    %p124 = scmp.ne.s32.totalorder %s115, %s116
    %p125 = scmp.eq.s32.totalorder %s16, 0
    %p126 = por %p124, %p125
    %p127 = scmp.ne.s32.totalorder %s115, %s116
    %p128 = scmp.eq.s32.totalorder %s17, 1
    %p129 = por %p127, %p128
    %p131 = scmp.ne.s32.totalorder %s116, %s130
    %p132 = scmp.eq.s32.totalorder %s17, 0
    %p133 = por %p131, %p132
    %s134 = ssub.s32 %s11, %s18
    %p135 = scmp.eq.s32.totalorder %s134, 0
    %s137 = sadd.s32 %s136, 1
    %s138 = scalar_select %p135, %s136, %s137
    %p141 = pneg %p135
    %p142 = scmp.eq.s32.totalorder %s11, 1
    %p143 = por %p141, %p142
    %p144 = scmp.ne.s32.totalorder %s136, %s139
    %p145 = scmp.eq.s32.totalorder %s11, 0
    %p146 = por %p144, %p145
    %p147 = scmp.ne.s32.totalorder %s136, %s139
    %p148 = scmp.eq.s32.totalorder %s16, 1
    %p149 = por %p147, %p148
    %p150 = scmp.ne.s32.totalorder %s139, %s140
    %p151 = scmp.eq.s32.totalorder %s16, 0
    %p152 = por %p150, %p151
    %p153 = scmp.ne.s32.totalorder %s139, %s140
    %p154 = scmp.eq.s32.totalorder %s17, 1
    %p155 = por %p153, %p154
    %p157 = scmp.ne.s32.totalorder %s140, %s156
    %p158 = scmp.eq.s32.totalorder %s17, 0
    %p159 = por %p157, %p158
    %p160 = scmp.le.s32.totalorder 1, %s11
    %p161 = scmp.lt.s32.totalorder %s11, 3
    %p162 = pnand %p160, %p161
    %p163 = pneg %p162
    // Predicated region
    $region9: #{_lambda_.1} parent=5 // pred_check
      _
    $region10: #{_lambda_.1} parent=5 // pred_check_branch
      %165 = sbr.rel (%p162) target = $region12
    $region11: #{_lambda_.1} parent=5 // pred_region
      %s166 = ssub.s32 %s11, 1
      // Predicated region
      $region13: #{_lambda_.1} parent=11 // pred_check
        %p167 = pneg %p84
      $region14: #{_lambda_.1} parent=11 // pred_check_branch
        %169 = sbr.rel (%p167) target = $region16
      $region15: #{_lambda_.1} parent=11 // pred_region
        _
      $region16: #{_lambda_.1} parent=11 // pred_fallthru
        _
      // Predicated region
      $region17: #{_lambda_.1} parent=11 // pred_check
        %p170 = pneg %p105
      $region18: #{_lambda_.1} parent=11 // pred_check_branch
        %172 = sbr.rel (%p170) target = $region20
      $region19: #{_lambda_.1} parent=11 // pred_region
        _
      $region20: #{_lambda_.1} parent=11 // pred_fallthru
        _
      // Predicated region
      $region21: #{_lambda_.1} parent=11 // pred_check
        %p173 = pneg %p126
      $region22: #{_lambda_.1} parent=11 // pred_check_branch
        %175 = sbr.rel (%p173) target = $region24
      $region23: #{_lambda_.1} parent=11 // pred_region
        _
      $region24: #{_lambda_.1} parent=11 // pred_fallthru
        _
    $region12: #{_lambda_.1} parent=5 // pred_fallthru
      _
    %p176 = scmp.lt.s32.totalorder %s11, 2
    // Predicated region
    $region25: #{_lambda_.1} parent=5 // pred_check
      %p177 = pneg %p176
    $region26: #{_lambda_.1} parent=5 // pred_check_branch
      %179 = sbr.rel (%p177) target = $region28
    $region27: #{_lambda_.1} parent=5 // pred_region
      // Predicated region
      $region29: #{_lambda_.1} parent=27 // pred_check
        %p180 = pneg %p31
      $region30: #{_lambda_.1} parent=27 // pred_check_branch
        %182 = sbr.rel (%p180) target = $region32
      $region31: #{_lambda_.1} parent=27 // pred_region
        %p183 = scmp.lt.s32.totalorder %s11, 1
        %s184 = scalar_select %p183, %s11, 1
        %s185 = smul.addr %s184, 256
        %s186 = smul.addr %s185, 4
        %s187 = scalar_lea.vmem %s0, %s186
      $region32: #{_lambda_.1} parent=27 // pred_fallthru
        _
      // Predicated region
      $region33: #{_lambda_.1} parent=27 // pred_check
        %p188 = pneg %p57
      $region34: #{_lambda_.1} parent=27 // pred_check_branch
        %190 = sbr.rel (%p188) target = $region36
      $region35: #{_lambda_.1} parent=27 // pred_region
        %p191 = scmp.lt.s32.totalorder %s11, 1
        %s192 = scalar_select %p191, %s11, 1
        %s193 = smul.addr %s192, 4
        %s194 = scalar_lea.vmem %s1, %s193
      $region36: #{_lambda_.1} parent=27 // pred_fallthru
        _
    $region28: #{_lambda_.1} parent=5 // pred_fallthru
      _
    %p195 = scmp.le.s32.totalorder 1, %s11
    %p196 = scmp.lt.s32.totalorder %s11, 3
    %p197 = pnand %p195, %p196
    %p198 = pneg %p197
    // Predicated region
    $region37: #{_lambda_.1} parent=5 // pred_check
      _
    $region38: #{_lambda_.1} parent=5 // pred_check_branch
      %200 = sbr.rel (%p197) target = $region40
    $region39: #{_lambda_.1} parent=5 // pred_region
      %s201 = ssub.s32 %s11, 1
      %p202 = scmp.lt.s32.totalorder %s16, 1
      %s203 = scalar_select %p202, %s16, 1
      %s204 = smul.addr %s203, 256
      %s205 = smul.addr %s204, 4
      %s206 = scalar_lea.vmem %s0, %s205
      %p207 = pneg %p37
      %p208 = pneg %p34
      %p209 = scmp.lt.s32.totalorder %s16, 1
      %s210 = scalar_select %p209, %s16, 1
      %s211 = smul.addr %s210, 4
      %s212 = scalar_lea.vmem %s1, %s211
      %p213 = pneg %p63
      %p214 = pneg %p60
      %p215 = pneg %p84
      %p216 = pneg %p81
      %p217 = pneg %p105
      %p218 = pneg %p102
      %p219 = pneg %p126
      %p220 = pneg %p123
      %p221 = pneg %p152
      %p222 = pneg %p149
      %p223 = scmp.lt.s32.totalorder %s16, 1
      %s224 = scalar_select %p223, %s16, 1
      %s225 = smul.addr %s224, 2
      %s226 = scalar_lea.vmem %s5, %s225
      %p227 = scmp.lt.s32.totalorder %s16, 1
      %s228 = scalar_select %p227, %s16, 1
      %s229 = smul.addr %s228, 256
      %s230 = smul.addr %s229, 4
      %s231 = scalar_lea.vmem %s0, %s230
      %p232 = scmp.lt.s32.totalorder %s16, 1
      %s233 = scalar_select %p232, %s16, 1
      %s234 = smul.addr %s233, 4
      %s235 = scalar_lea.vmem %s1, %s234
      %p236 = scmp.lt.s32.totalorder %s16, 1
      %s237 = scalar_select %p236, %s16, 1
      %s238 = smul.addr %s237, 2
      %s239 = scalar_lea.vmem %s5, %s238
      %v241 = vld [vmem:[%s231] sm:$0xf]
      %v242 = vld [vmem:[%s231 + $0x4] sm:$0xf]
      %v243 = vld [vmem:[%s231 + $0x8] sm:$0xf]
      %v244 = vld [vmem:[%s231 + $0xc] sm:$0xf]
      %v245 = vld [vmem:[%s231 + $0x10] sm:$0xf]
      %v246 = vld [vmem:[%s231 + $0x14] sm:$0xf]
      %v247 = vld [vmem:[%s231 + $0x18] sm:$0xf]
      %v248 = vld [vmem:[%s231 + $0x1c] sm:$0xf]
      %v249 = vld [vmem:[%s231 + $0x20] sm:$0xf]
      %v250 = vld [vmem:[%s231 + $0x24] sm:$0xf]
      %v251 = vld [vmem:[%s231 + $0x28] sm:$0xf]
      %v252 = vld [vmem:[%s231 + $0x2c] sm:$0xf]
      %v253 = vld [vmem:[%s231 + $0x30] sm:$0xf]
      %v254 = vld [vmem:[%s231 + $0x34] sm:$0xf]
      %v255 = vld [vmem:[%s231 + $0x38] sm:$0xf]
      %v256 = vld [vmem:[%s231 + $0x3c] sm:$0xf]
      %v257 = vld [vmem:[%s231 + $0x40] sm:$0xf]
      %v258 = vld [vmem:[%s231 + $0x44] sm:$0xf]
      %v259 = vld [vmem:[%s231 + $0x48] sm:$0xf]
      %v260 = vld [vmem:[%s231 + $0x4c] sm:$0xf]
      %v261 = vld [vmem:[%s231 + $0x50] sm:$0xf]
      %v262 = vld [vmem:[%s231 + $0x54] sm:$0xf]
      %v263 = vld [vmem:[%s231 + $0x58] sm:$0xf]
      %v264 = vld [vmem:[%s231 + $0x5c] sm:$0xf]
      %v265 = vld [vmem:[%s231 + $0x60] sm:$0xf]
      %v266 = vld [vmem:[%s231 + $0x64] sm:$0xf]
      %v267 = vld [vmem:[%s231 + $0x68] sm:$0xf]
      %v268 = vld [vmem:[%s231 + $0x6c] sm:$0xf]
      %v269 = vld [vmem:[%s231 + $0x70] sm:$0xf]
      %v270 = vld [vmem:[%s231 + $0x74] sm:$0xf]
      %v271 = vld [vmem:[%s231 + $0x78] sm:$0xf]
      %v272 = vld [vmem:[%s231 + $0x7c] sm:$0xf]
      %v273 = vld [vmem:[%s231 + $0x80] sm:$0xf]
      %v274 = vld [vmem:[%s231 + $0x84] sm:$0xf]
      %v275 = vld [vmem:[%s231 + $0x88] sm:$0xf]
      %v276 = vld [vmem:[%s231 + $0x8c] sm:$0xf]
      %v277 = vld [vmem:[%s231 + $0x90] sm:$0xf]
      %v278 = vld [vmem:[%s231 + $0x94] sm:$0xf]
      %v279 = vld [vmem:[%s231 + $0x98] sm:$0xf]
      %v280 = vld [vmem:[%s231 + $0x9c] sm:$0xf]
      %v281 = vld [vmem:[%s231 + $0xa0] sm:$0xf]
      %v282 = vld [vmem:[%s231 + $0xa4] sm:$0xf]
      %v283 = vld [vmem:[%s231 + $0xa8] sm:$0xf]
      %v284 = vld [vmem:[%s231 + $0xac] sm:$0xf]
      %v285 = vld [vmem:[%s231 + $0xb0] sm:$0xf]
      %v286 = vld [vmem:[%s231 + $0xb4] sm:$0xf]
      %v287 = vld [vmem:[%s231 + $0xb8] sm:$0xf]
      %v288 = vld [vmem:[%s231 + $0xbc] sm:$0xf]
      %v289 = vld [vmem:[%s231 + $0xc0] sm:$0xf]
      %v290 = vld [vmem:[%s231 + $0xc4] sm:$0xf]
      %v291 = vld [vmem:[%s231 + $0xc8] sm:$0xf]
      %v292 = vld [vmem:[%s231 + $0xcc] sm:$0xf]
      %v293 = vld [vmem:[%s231 + $0xd0] sm:$0xf]
      %v294 = vld [vmem:[%s231 + $0xd4] sm:$0xf]
      %v295 = vld [vmem:[%s231 + $0xd8] sm:$0xf]
      %v296 = vld [vmem:[%s231 + $0xdc] sm:$0xf]
      %v297 = vld [vmem:[%s231 + $0xe0] sm:$0xf]
      %v298 = vld [vmem:[%s231 + $0xe4] sm:$0xf]
      %v299 = vld [vmem:[%s231 + $0xe8] sm:$0xf]
      %v300 = vld [vmem:[%s231 + $0xec] sm:$0xf]
      %v301 = vld [vmem:[%s231 + $0xf0] sm:$0xf]
      %v302 = vld [vmem:[%s231 + $0xf4] sm:$0xf]
      %v303 = vld [vmem:[%s231 + $0xf8] sm:$0xf]
      %v304 = vld [vmem:[%s231 + $0xfc] sm:$0xf]
      %v305 = vld [vmem:[%s231 + $0x100] sm:$0xf]
      %v306 = vld [vmem:[%s231 + $0x104] sm:$0xf]
      %v307 = vld [vmem:[%s231 + $0x108] sm:$0xf]
      %v308 = vld [vmem:[%s231 + $0x10c] sm:$0xf]
      %v309 = vld [vmem:[%s231 + $0x110] sm:$0xf]
      %v310 = vld [vmem:[%s231 + $0x114] sm:$0xf]
      %v311 = vld [vmem:[%s231 + $0x118] sm:$0xf]
      %v312 = vld [vmem:[%s231 + $0x11c] sm:$0xf]
      %v313 = vld [vmem:[%s231 + $0x120] sm:$0xf]
      %v314 = vld [vmem:[%s231 + $0x124] sm:$0xf]
      %v315 = vld [vmem:[%s231 + $0x128] sm:$0xf]
      %v316 = vld [vmem:[%s231 + $0x12c] sm:$0xf]
      %v317 = vld [vmem:[%s231 + $0x130] sm:$0xf]
      %v318 = vld [vmem:[%s231 + $0x134] sm:$0xf]
      %v319 = vld [vmem:[%s231 + $0x138] sm:$0xf]
      %v320 = vld [vmem:[%s231 + $0x13c] sm:$0xf]
      %v321 = vld [vmem:[%s231 + $0x140] sm:$0xf]
      %v322 = vld [vmem:[%s231 + $0x144] sm:$0xf]
      %v323 = vld [vmem:[%s231 + $0x148] sm:$0xf]
      %v324 = vld [vmem:[%s231 + $0x14c] sm:$0xf]
      %v325 = vld [vmem:[%s231 + $0x150] sm:$0xf]
      %v326 = vld [vmem:[%s231 + $0x154] sm:$0xf]
      %v327 = vld [vmem:[%s231 + $0x158] sm:$0xf]
      %v328 = vld [vmem:[%s231 + $0x15c] sm:$0xf]
      %v329 = vld [vmem:[%s231 + $0x160] sm:$0xf]
      %v330 = vld [vmem:[%s231 + $0x164] sm:$0xf]
      %v331 = vld [vmem:[%s231 + $0x168] sm:$0xf]
      %v332 = vld [vmem:[%s231 + $0x16c] sm:$0xf]
      %v333 = vld [vmem:[%s231 + $0x170] sm:$0xf]
      %v334 = vld [vmem:[%s231 + $0x174] sm:$0xf]
      %v335 = vld [vmem:[%s231 + $0x178] sm:$0xf]
      %v336 = vld [vmem:[%s231 + $0x17c] sm:$0xf]
      %v337 = vld [vmem:[%s231 + $0x180] sm:$0xf]
      %v338 = vld [vmem:[%s231 + $0x184] sm:$0xf]
      %v339 = vld [vmem:[%s231 + $0x188] sm:$0xf]
      %v340 = vld [vmem:[%s231 + $0x18c] sm:$0xf]
      %v341 = vld [vmem:[%s231 + $0x190] sm:$0xf]
      %v342 = vld [vmem:[%s231 + $0x194] sm:$0xf]
      %v343 = vld [vmem:[%s231 + $0x198] sm:$0xf]
      %v344 = vld [vmem:[%s231 + $0x19c] sm:$0xf]
      %v345 = vld [vmem:[%s231 + $0x1a0] sm:$0xf]
      %v346 = vld [vmem:[%s231 + $0x1a4] sm:$0xf]
      %v347 = vld [vmem:[%s231 + $0x1a8] sm:$0xf]
      %v348 = vld [vmem:[%s231 + $0x1ac] sm:$0xf]
      %v349 = vld [vmem:[%s231 + $0x1b0] sm:$0xf]
      %v350 = vld [vmem:[%s231 + $0x1b4] sm:$0xf]
      %v351 = vld [vmem:[%s231 + $0x1b8] sm:$0xf]
      %v352 = vld [vmem:[%s231 + $0x1bc] sm:$0xf]
      %v353 = vld [vmem:[%s231 + $0x1c0] sm:$0xf]
      %v354 = vld [vmem:[%s231 + $0x1c4] sm:$0xf]
      %v355 = vld [vmem:[%s231 + $0x1c8] sm:$0xf]
      %v356 = vld [vmem:[%s231 + $0x1cc] sm:$0xf]
      %v357 = vld [vmem:[%s231 + $0x1d0] sm:$0xf]
      %v358 = vld [vmem:[%s231 + $0x1d4] sm:$0xf]
      %v359 = vld [vmem:[%s231 + $0x1d8] sm:$0xf]
      %v360 = vld [vmem:[%s231 + $0x1dc] sm:$0xf]
      %v361 = vld [vmem:[%s231 + $0x1e0] sm:$0xf]
      %v362 = vld [vmem:[%s231 + $0x1e4] sm:$0xf]
      %v363 = vld [vmem:[%s231 + $0x1e8] sm:$0xf]
      %v364 = vld [vmem:[%s231 + $0x1ec] sm:$0xf]
      %v365 = vld [vmem:[%s231 + $0x1f0] sm:$0xf]
      %v366 = vld [vmem:[%s231 + $0x1f4] sm:$0xf]
      %v367 = vld [vmem:[%s231 + $0x1f8] sm:$0xf]
      %v368 = vld [vmem:[%s231 + $0x1fc] sm:$0xf]
      %v369 = vld [vmem:[%s231 + $0x200] sm:$0xf]
      %v370 = vld [vmem:[%s231 + $0x204] sm:$0xf]
      %v371 = vld [vmem:[%s231 + $0x208] sm:$0xf]
      %v372 = vld [vmem:[%s231 + $0x20c] sm:$0xf]
      %v373 = vld [vmem:[%s231 + $0x210] sm:$0xf]
      %v374 = vld [vmem:[%s231 + $0x214] sm:$0xf]
      %v375 = vld [vmem:[%s231 + $0x218] sm:$0xf]
      %v376 = vld [vmem:[%s231 + $0x21c] sm:$0xf]
      %v377 = vld [vmem:[%s231 + $0x220] sm:$0xf]
      %v378 = vld [vmem:[%s231 + $0x224] sm:$0xf]
      %v379 = vld [vmem:[%s231 + $0x228] sm:$0xf]
      %v380 = vld [vmem:[%s231 + $0x22c] sm:$0xf]
      %v381 = vld [vmem:[%s231 + $0x230] sm:$0xf]
      %v382 = vld [vmem:[%s231 + $0x234] sm:$0xf]
      %v383 = vld [vmem:[%s231 + $0x238] sm:$0xf]
      %v384 = vld [vmem:[%s231 + $0x23c] sm:$0xf]
      %v385 = vld [vmem:[%s231 + $0x240] sm:$0xf]
      %v386 = vld [vmem:[%s231 + $0x244] sm:$0xf]
      %v387 = vld [vmem:[%s231 + $0x248] sm:$0xf]
      %v388 = vld [vmem:[%s231 + $0x24c] sm:$0xf]
      %v389 = vld [vmem:[%s231 + $0x250] sm:$0xf]
      %v390 = vld [vmem:[%s231 + $0x254] sm:$0xf]
      %v391 = vld [vmem:[%s231 + $0x258] sm:$0xf]
      %v392 = vld [vmem:[%s231 + $0x25c] sm:$0xf]
      %v393 = vld [vmem:[%s231 + $0x260] sm:$0xf]
      %v394 = vld [vmem:[%s231 + $0x264] sm:$0xf]
      %v395 = vld [vmem:[%s231 + $0x268] sm:$0xf]
      %v396 = vld [vmem:[%s231 + $0x26c] sm:$0xf]
      %v397 = vld [vmem:[%s231 + $0x270] sm:$0xf]
      %v398 = vld [vmem:[%s231 + $0x274] sm:$0xf]
      %v399 = vld [vmem:[%s231 + $0x278] sm:$0xf]
      %v400 = vld [vmem:[%s231 + $0x27c] sm:$0xf]
      %v401 = vld [vmem:[%s231 + $0x280] sm:$0xf]
      %v402 = vld [vmem:[%s231 + $0x284] sm:$0xf]
      %v403 = vld [vmem:[%s231 + $0x288] sm:$0xf]
      %v404 = vld [vmem:[%s231 + $0x28c] sm:$0xf]
      %v405 = vld [vmem:[%s231 + $0x290] sm:$0xf]
      %v406 = vld [vmem:[%s231 + $0x294] sm:$0xf]
      %v407 = vld [vmem:[%s231 + $0x298] sm:$0xf]
      %v408 = vld [vmem:[%s231 + $0x29c] sm:$0xf]
      %v409 = vld [vmem:[%s231 + $0x2a0] sm:$0xf]
      %v410 = vld [vmem:[%s231 + $0x2a4] sm:$0xf]
      %v411 = vld [vmem:[%s231 + $0x2a8] sm:$0xf]
      %v412 = vld [vmem:[%s231 + $0x2ac] sm:$0xf]
      %v413 = vld [vmem:[%s231 + $0x2b0] sm:$0xf]
      %v414 = vld [vmem:[%s231 + $0x2b4] sm:$0xf]
      %v415 = vld [vmem:[%s231 + $0x2b8] sm:$0xf]
      %v416 = vld [vmem:[%s231 + $0x2bc] sm:$0xf]
      %v417 = vld [vmem:[%s231 + $0x2c0] sm:$0xf]
      %v418 = vld [vmem:[%s231 + $0x2c4] sm:$0xf]
      %v419 = vld [vmem:[%s231 + $0x2c8] sm:$0xf]
      %v420 = vld [vmem:[%s231 + $0x2cc] sm:$0xf]
      %v421 = vld [vmem:[%s231 + $0x2d0] sm:$0xf]
      %v422 = vld [vmem:[%s231 + $0x2d4] sm:$0xf]
      %v423 = vld [vmem:[%s231 + $0x2d8] sm:$0xf]
      %v424 = vld [vmem:[%s231 + $0x2dc] sm:$0xf]
      %v425 = vld [vmem:[%s231 + $0x2e0] sm:$0xf]
      %v426 = vld [vmem:[%s231 + $0x2e4] sm:$0xf]
      %v427 = vld [vmem:[%s231 + $0x2e8] sm:$0xf]
      %v428 = vld [vmem:[%s231 + $0x2ec] sm:$0xf]
      %v429 = vld [vmem:[%s231 + $0x2f0] sm:$0xf]
      %v430 = vld [vmem:[%s231 + $0x2f4] sm:$0xf]
      %v431 = vld [vmem:[%s231 + $0x2f8] sm:$0xf]
      %v432 = vld [vmem:[%s231 + $0x2fc] sm:$0xf]
      %v433 = vld [vmem:[%s231 + $0x300] sm:$0xf]
      %v434 = vld [vmem:[%s231 + $0x304] sm:$0xf]
      %v435 = vld [vmem:[%s231 + $0x308] sm:$0xf]
      %v436 = vld [vmem:[%s231 + $0x30c] sm:$0xf]
      %v437 = vld [vmem:[%s231 + $0x310] sm:$0xf]
      %v438 = vld [vmem:[%s231 + $0x314] sm:$0xf]
      %v439 = vld [vmem:[%s231 + $0x318] sm:$0xf]
      %v440 = vld [vmem:[%s231 + $0x31c] sm:$0xf]
      %v441 = vld [vmem:[%s231 + $0x320] sm:$0xf]
      %v442 = vld [vmem:[%s231 + $0x324] sm:$0xf]
      %v443 = vld [vmem:[%s231 + $0x328] sm:$0xf]
      %v444 = vld [vmem:[%s231 + $0x32c] sm:$0xf]
      %v445 = vld [vmem:[%s231 + $0x330] sm:$0xf]
      %v446 = vld [vmem:[%s231 + $0x334] sm:$0xf]
      %v447 = vld [vmem:[%s231 + $0x338] sm:$0xf]
      %v448 = vld [vmem:[%s231 + $0x33c] sm:$0xf]
      %v449 = vld [vmem:[%s231 + $0x340] sm:$0xf]
      %v450 = vld [vmem:[%s231 + $0x344] sm:$0xf]
      %v451 = vld [vmem:[%s231 + $0x348] sm:$0xf]
      %v452 = vld [vmem:[%s231 + $0x34c] sm:$0xf]
      %v453 = vld [vmem:[%s231 + $0x350] sm:$0xf]
      %v454 = vld [vmem:[%s231 + $0x354] sm:$0xf]
      %v455 = vld [vmem:[%s231 + $0x358] sm:$0xf]
      %v456 = vld [vmem:[%s231 + $0x35c] sm:$0xf]
      %v457 = vld [vmem:[%s231 + $0x360] sm:$0xf]
      %v458 = vld [vmem:[%s231 + $0x364] sm:$0xf]
      %v459 = vld [vmem:[%s231 + $0x368] sm:$0xf]
      %v460 = vld [vmem:[%s231 + $0x36c] sm:$0xf]
      %v461 = vld [vmem:[%s231 + $0x370] sm:$0xf]
      %v462 = vld [vmem:[%s231 + $0x374] sm:$0xf]
      %v463 = vld [vmem:[%s231 + $0x378] sm:$0xf]
      %v464 = vld [vmem:[%s231 + $0x37c] sm:$0xf]
      %v465 = vld [vmem:[%s231 + $0x380] sm:$0xf]
      %v466 = vld [vmem:[%s231 + $0x384] sm:$0xf]
      %v467 = vld [vmem:[%s231 + $0x388] sm:$0xf]
      %v468 = vld [vmem:[%s231 + $0x38c] sm:$0xf]
      %v469 = vld [vmem:[%s231 + $0x390] sm:$0xf]
      %v470 = vld [vmem:[%s231 + $0x394] sm:$0xf]
      %v471 = vld [vmem:[%s231 + $0x398] sm:$0xf]
      %v472 = vld [vmem:[%s231 + $0x39c] sm:$0xf]
      %v473 = vld [vmem:[%s231 + $0x3a0] sm:$0xf]
      %v474 = vld [vmem:[%s231 + $0x3a4] sm:$0xf]
      %v475 = vld [vmem:[%s231 + $0x3a8] sm:$0xf]
      %v476 = vld [vmem:[%s231 + $0x3ac] sm:$0xf]
      %v477 = vld [vmem:[%s231 + $0x3b0] sm:$0xf]
      %v478 = vld [vmem:[%s231 + $0x3b4] sm:$0xf]
      %v479 = vld [vmem:[%s231 + $0x3b8] sm:$0xf]
      %v480 = vld [vmem:[%s231 + $0x3bc] sm:$0xf]
      %v481 = vld [vmem:[%s231 + $0x3c0] sm:$0xf]
      %v482 = vld [vmem:[%s231 + $0x3c4] sm:$0xf]
      %v483 = vld [vmem:[%s231 + $0x3c8] sm:$0xf]
      %v484 = vld [vmem:[%s231 + $0x3cc] sm:$0xf]
      %v485 = vld [vmem:[%s231 + $0x3d0] sm:$0xf]
      %v486 = vld [vmem:[%s231 + $0x3d4] sm:$0xf]
      %v487 = vld [vmem:[%s231 + $0x3d8] sm:$0xf]
      %v488 = vld [vmem:[%s231 + $0x3dc] sm:$0xf]
      %v489 = vld [vmem:[%s231 + $0x3e0] sm:$0xf]
      %v490 = vld [vmem:[%s231 + $0x3e4] sm:$0xf]
      %v491 = vld [vmem:[%s231 + $0x3e8] sm:$0xf]
      %v492 = vld [vmem:[%s231 + $0x3ec] sm:$0xf]
      %v493 = vld [vmem:[%s231 + $0x3f0] sm:$0xf]
      %v494 = vld [vmem:[%s231 + $0x3f4] sm:$0xf]
      %v495 = vld [vmem:[%s231 + $0x3f8] sm:$0xf]
      %v496 = vld [vmem:[%s231 + $0x3fc] sm:$0xf]
      %v497 = vld [vmem:[%s235] sm:$0xf]
      %v754 = vunpack.c.l.b16 %v241
      %v755 = vunpack.c.l.b16 %v242
      %v756 = vunpack.c.l.b16 %v243
      %v757 = vunpack.c.l.b16 %v244
      %v758 = vunpack.c.l.b16 %v245
      %v759 = vunpack.c.l.b16 %v246
      %v760 = vunpack.c.l.b16 %v247
      %v761 = vunpack.c.l.b16 %v248
      %v762 = vunpack.c.l.b16 %v249
      %v763 = vunpack.c.l.b16 %v250
      %v764 = vunpack.c.l.b16 %v251
      %v765 = vunpack.c.l.b16 %v252
      %v766 = vunpack.c.l.b16 %v253
      %v767 = vunpack.c.l.b16 %v254
      %v768 = vunpack.c.l.b16 %v255
      %v769 = vunpack.c.l.b16 %v256
      %v770 = vunpack.c.l.b16 %v257
      %v771 = vunpack.c.l.b16 %v258
      %v772 = vunpack.c.l.b16 %v259
      %v773 = vunpack.c.l.b16 %v260
      %v774 = vunpack.c.l.b16 %v261
      %v775 = vunpack.c.l.b16 %v262
      %v776 = vunpack.c.l.b16 %v263
      %v777 = vunpack.c.l.b16 %v264
      %v778 = vunpack.c.l.b16 %v265
      %v779 = vunpack.c.l.b16 %v266
      %v780 = vunpack.c.l.b16 %v267
      %v781 = vunpack.c.l.b16 %v268
      %v782 = vunpack.c.l.b16 %v269
      %v783 = vunpack.c.l.b16 %v270
      %v784 = vunpack.c.l.b16 %v271
      %v785 = vunpack.c.l.b16 %v272
      %v786 = vunpack.c.l.b16 %v273
      %v787 = vunpack.c.l.b16 %v274
      %v788 = vunpack.c.l.b16 %v275
      %v789 = vunpack.c.l.b16 %v276
      %v790 = vunpack.c.l.b16 %v277
      %v791 = vunpack.c.l.b16 %v278
      %v792 = vunpack.c.l.b16 %v279
      %v793 = vunpack.c.l.b16 %v280
      %v794 = vunpack.c.l.b16 %v281
      %v795 = vunpack.c.l.b16 %v282
      %v796 = vunpack.c.l.b16 %v283
      %v797 = vunpack.c.l.b16 %v284
      %v798 = vunpack.c.l.b16 %v285
      %v799 = vunpack.c.l.b16 %v286
      %v800 = vunpack.c.l.b16 %v287
      %v801 = vunpack.c.l.b16 %v288
      %v802 = vunpack.c.l.b16 %v289
      %v803 = vunpack.c.l.b16 %v290
      %v804 = vunpack.c.l.b16 %v291
      %v805 = vunpack.c.l.b16 %v292
      %v806 = vunpack.c.l.b16 %v293
      %v807 = vunpack.c.l.b16 %v294
      %v808 = vunpack.c.l.b16 %v295
      %v809 = vunpack.c.l.b16 %v296
      %v810 = vunpack.c.l.b16 %v297
      %v811 = vunpack.c.l.b16 %v298
      %v812 = vunpack.c.l.b16 %v299
      %v813 = vunpack.c.l.b16 %v300
      %v814 = vunpack.c.l.b16 %v301
      %v815 = vunpack.c.l.b16 %v302
      %v816 = vunpack.c.l.b16 %v303
      %v817 = vunpack.c.l.b16 %v304
      %v818 = vunpack.c.l.b16 %v305
      %v819 = vunpack.c.l.b16 %v306
      %v820 = vunpack.c.l.b16 %v307
      %v821 = vunpack.c.l.b16 %v308
      %v822 = vunpack.c.l.b16 %v309
      %v823 = vunpack.c.l.b16 %v310
      %v824 = vunpack.c.l.b16 %v311
      %v825 = vunpack.c.l.b16 %v312
      %v826 = vunpack.c.l.b16 %v313
      %v827 = vunpack.c.l.b16 %v314
      %v828 = vunpack.c.l.b16 %v315
      %v829 = vunpack.c.l.b16 %v316
      %v830 = vunpack.c.l.b16 %v317
      %v831 = vunpack.c.l.b16 %v318
      %v832 = vunpack.c.l.b16 %v319
      %v833 = vunpack.c.l.b16 %v320
      %v834 = vunpack.c.l.b16 %v321
      %v835 = vunpack.c.l.b16 %v322
      %v836 = vunpack.c.l.b16 %v323
      %v837 = vunpack.c.l.b16 %v324
      %v838 = vunpack.c.l.b16 %v325
      %v839 = vunpack.c.l.b16 %v326
      %v840 = vunpack.c.l.b16 %v327
      %v841 = vunpack.c.l.b16 %v328
      %v842 = vunpack.c.l.b16 %v329
      %v843 = vunpack.c.l.b16 %v330
      %v844 = vunpack.c.l.b16 %v331
      %v845 = vunpack.c.l.b16 %v332
      %v846 = vunpack.c.l.b16 %v333
      %v847 = vunpack.c.l.b16 %v334
      %v848 = vunpack.c.l.b16 %v335
      %v849 = vunpack.c.l.b16 %v336
      %v850 = vunpack.c.l.b16 %v337
      %v851 = vunpack.c.l.b16 %v338
      %v852 = vunpack.c.l.b16 %v339
      %v853 = vunpack.c.l.b16 %v340
      %v854 = vunpack.c.l.b16 %v341
      %v855 = vunpack.c.l.b16 %v342
      %v856 = vunpack.c.l.b16 %v343
      %v857 = vunpack.c.l.b16 %v344
      %v858 = vunpack.c.l.b16 %v345
      %v859 = vunpack.c.l.b16 %v346
      %v860 = vunpack.c.l.b16 %v347
      %v861 = vunpack.c.l.b16 %v348
      %v862 = vunpack.c.l.b16 %v349
      %v863 = vunpack.c.l.b16 %v350
      %v864 = vunpack.c.l.b16 %v351
      %v865 = vunpack.c.l.b16 %v352
      %v866 = vunpack.c.l.b16 %v353
      %v867 = vunpack.c.l.b16 %v354
      %v868 = vunpack.c.l.b16 %v355
      %v869 = vunpack.c.l.b16 %v356
      %v870 = vunpack.c.l.b16 %v357
      %v871 = vunpack.c.l.b16 %v358
      %v872 = vunpack.c.l.b16 %v359
      %v873 = vunpack.c.l.b16 %v360
      %v874 = vunpack.c.l.b16 %v361
      %v875 = vunpack.c.l.b16 %v362
      %v876 = vunpack.c.l.b16 %v363
      %v877 = vunpack.c.l.b16 %v364
      %v878 = vunpack.c.l.b16 %v365
      %v879 = vunpack.c.l.b16 %v366
      %v880 = vunpack.c.l.b16 %v367
      %v881 = vunpack.c.l.b16 %v368
      %v882 = vunpack.c.l.b16 %v369
      %v883 = vunpack.c.l.b16 %v370
      %v884 = vunpack.c.l.b16 %v371
      %v885 = vunpack.c.l.b16 %v372
      %v886 = vunpack.c.l.b16 %v373
      %v887 = vunpack.c.l.b16 %v374
      %v888 = vunpack.c.l.b16 %v375
      %v889 = vunpack.c.l.b16 %v376
      %v890 = vunpack.c.l.b16 %v377
      %v891 = vunpack.c.l.b16 %v378
      %v892 = vunpack.c.l.b16 %v379
      %v893 = vunpack.c.l.b16 %v380
      %v894 = vunpack.c.l.b16 %v381
      %v895 = vunpack.c.l.b16 %v382
      %v896 = vunpack.c.l.b16 %v383
      %v897 = vunpack.c.l.b16 %v384
      %v898 = vunpack.c.l.b16 %v385
      %v899 = vunpack.c.l.b16 %v386
      %v900 = vunpack.c.l.b16 %v387
      %v901 = vunpack.c.l.b16 %v388
      %v902 = vunpack.c.l.b16 %v389
      %v903 = vunpack.c.l.b16 %v390
      %v904 = vunpack.c.l.b16 %v391
      %v905 = vunpack.c.l.b16 %v392
      %v906 = vunpack.c.l.b16 %v393
      %v907 = vunpack.c.l.b16 %v394
      %v908 = vunpack.c.l.b16 %v395
      %v909 = vunpack.c.l.b16 %v396
      %v910 = vunpack.c.l.b16 %v397
      %v911 = vunpack.c.l.b16 %v398
      %v912 = vunpack.c.l.b16 %v399
      %v913 = vunpack.c.l.b16 %v400
      %v914 = vunpack.c.l.b16 %v401
      %v915 = vunpack.c.l.b16 %v402
      %v916 = vunpack.c.l.b16 %v403
      %v917 = vunpack.c.l.b16 %v404
      %v918 = vunpack.c.l.b16 %v405
      %v919 = vunpack.c.l.b16 %v406
      %v920 = vunpack.c.l.b16 %v407
      %v921 = vunpack.c.l.b16 %v408
      %v922 = vunpack.c.l.b16 %v409
      %v923 = vunpack.c.l.b16 %v410
      %v924 = vunpack.c.l.b16 %v411
      %v925 = vunpack.c.l.b16 %v412
      %v926 = vunpack.c.l.b16 %v413
      %v927 = vunpack.c.l.b16 %v414
      %v928 = vunpack.c.l.b16 %v415
      %v929 = vunpack.c.l.b16 %v416
      %v930 = vunpack.c.l.b16 %v417
      %v931 = vunpack.c.l.b16 %v418
      %v932 = vunpack.c.l.b16 %v419
      %v933 = vunpack.c.l.b16 %v420
      %v934 = vunpack.c.l.b16 %v421
      %v935 = vunpack.c.l.b16 %v422
      %v936 = vunpack.c.l.b16 %v423
      %v937 = vunpack.c.l.b16 %v424
      %v938 = vunpack.c.l.b16 %v425
      %v939 = vunpack.c.l.b16 %v426
      %v940 = vunpack.c.l.b16 %v427
      %v941 = vunpack.c.l.b16 %v428
      %v942 = vunpack.c.l.b16 %v429
      %v943 = vunpack.c.l.b16 %v430
      %v944 = vunpack.c.l.b16 %v431
      %v945 = vunpack.c.l.b16 %v432
      %v946 = vunpack.c.l.b16 %v433
      %v947 = vunpack.c.l.b16 %v434
      %v948 = vunpack.c.l.b16 %v435
      %v949 = vunpack.c.l.b16 %v436
      %v950 = vunpack.c.l.b16 %v437
      %v951 = vunpack.c.l.b16 %v438
      %v952 = vunpack.c.l.b16 %v439
      %v953 = vunpack.c.l.b16 %v440
      %v954 = vunpack.c.l.b16 %v441
      %v955 = vunpack.c.l.b16 %v442
      %v956 = vunpack.c.l.b16 %v443
      %v957 = vunpack.c.l.b16 %v444
      %v958 = vunpack.c.l.b16 %v445
      %v959 = vunpack.c.l.b16 %v446
      %v960 = vunpack.c.l.b16 %v447
      %v961 = vunpack.c.l.b16 %v448
      %v962 = vunpack.c.l.b16 %v449
      %v963 = vunpack.c.l.b16 %v450
      %v964 = vunpack.c.l.b16 %v451
      %v965 = vunpack.c.l.b16 %v452
      %v966 = vunpack.c.l.b16 %v453
      %v967 = vunpack.c.l.b16 %v454
      %v968 = vunpack.c.l.b16 %v455
      %v969 = vunpack.c.l.b16 %v456
      %v970 = vunpack.c.l.b16 %v457
      %v971 = vunpack.c.l.b16 %v458
      %v972 = vunpack.c.l.b16 %v459
      %v973 = vunpack.c.l.b16 %v460
      %v974 = vunpack.c.l.b16 %v461
      %v975 = vunpack.c.l.b16 %v462
      %v976 = vunpack.c.l.b16 %v463
      %v977 = vunpack.c.l.b16 %v464
      %v978 = vunpack.c.l.b16 %v465
      %v979 = vunpack.c.l.b16 %v466
      %v980 = vunpack.c.l.b16 %v467
      %v981 = vunpack.c.l.b16 %v468
      %v982 = vunpack.c.l.b16 %v469
      %v983 = vunpack.c.l.b16 %v470
      %v984 = vunpack.c.l.b16 %v471
      %v985 = vunpack.c.l.b16 %v472
      %v986 = vunpack.c.l.b16 %v473
      %v987 = vunpack.c.l.b16 %v474
      %v988 = vunpack.c.l.b16 %v475
      %v989 = vunpack.c.l.b16 %v476
      %v990 = vunpack.c.l.b16 %v477
      %v991 = vunpack.c.l.b16 %v478
      %v992 = vunpack.c.l.b16 %v479
      %v993 = vunpack.c.l.b16 %v480
      %v994 = vunpack.c.l.b16 %v481
      %v995 = vunpack.c.l.b16 %v482
      %v996 = vunpack.c.l.b16 %v483
      %v997 = vunpack.c.l.b16 %v484
      %v998 = vunpack.c.l.b16 %v485
      %v999 = vunpack.c.l.b16 %v486
      %v1000 = vunpack.c.l.b16 %v487
      %v1001 = vunpack.c.l.b16 %v488
      %v1002 = vunpack.c.l.b16 %v489
      %v1003 = vunpack.c.l.b16 %v490
      %v1004 = vunpack.c.l.b16 %v491
      %v1005 = vunpack.c.l.b16 %v492
      %v1006 = vunpack.c.l.b16 %v493
      %v1007 = vunpack.c.l.b16 %v494
      %v1008 = vunpack.c.l.b16 %v495
      %v1009 = vunpack.c.l.b16 %v496
      %v1010 = vpack.c.b16 %v755, %v754
      %v1011 = vpack.c.b16 %v757, %v756
      %v1012 = vpack.c.b16 %v759, %v758
      %v1013 = vpack.c.b16 %v761, %v760
      %v1014 = vpack.c.b16 %v763, %v762
      %v1015 = vpack.c.b16 %v765, %v764
      %v1016 = vpack.c.b16 %v767, %v766
      %v1017 = vpack.c.b16 %v769, %v768
      %v1018 = vpack.c.b16 %v771, %v770
      %v1019 = vpack.c.b16 %v773, %v772
      %v1020 = vpack.c.b16 %v775, %v774
      %v1021 = vpack.c.b16 %v777, %v776
      %v1022 = vpack.c.b16 %v779, %v778
      %v1023 = vpack.c.b16 %v781, %v780
      %v1024 = vpack.c.b16 %v783, %v782
      %v1025 = vpack.c.b16 %v785, %v784
      %v1026 = vpack.c.b16 %v787, %v786
      %v1027 = vpack.c.b16 %v789, %v788
      %v1028 = vpack.c.b16 %v791, %v790
      %v1029 = vpack.c.b16 %v793, %v792
      %v1030 = vpack.c.b16 %v795, %v794
      %v1031 = vpack.c.b16 %v797, %v796
      %v1032 = vpack.c.b16 %v799, %v798
      %v1033 = vpack.c.b16 %v801, %v800
      %v1034 = vpack.c.b16 %v803, %v802
      %v1035 = vpack.c.b16 %v805, %v804
      %v1036 = vpack.c.b16 %v807, %v806
      %v1037 = vpack.c.b16 %v809, %v808
      %v1038 = vpack.c.b16 %v811, %v810
      %v1039 = vpack.c.b16 %v813, %v812
      %v1040 = vpack.c.b16 %v815, %v814
      %v1041 = vpack.c.b16 %v817, %v816
      %v1042 = vpack.c.b16 %v819, %v818
      %v1043 = vpack.c.b16 %v821, %v820
      %v1044 = vpack.c.b16 %v823, %v822
      %v1045 = vpack.c.b16 %v825, %v824
      %v1046 = vpack.c.b16 %v827, %v826
      %v1047 = vpack.c.b16 %v829, %v828
      %v1048 = vpack.c.b16 %v831, %v830
      %v1049 = vpack.c.b16 %v833, %v832
      %v1050 = vpack.c.b16 %v835, %v834
      %v1051 = vpack.c.b16 %v837, %v836
      %v1052 = vpack.c.b16 %v839, %v838
      %v1053 = vpack.c.b16 %v841, %v840
      %v1054 = vpack.c.b16 %v843, %v842
      %v1055 = vpack.c.b16 %v845, %v844
      %v1056 = vpack.c.b16 %v847, %v846
      %v1057 = vpack.c.b16 %v849, %v848
      %v1058 = vpack.c.b16 %v851, %v850
      %v1059 = vpack.c.b16 %v853, %v852
      %v1060 = vpack.c.b16 %v855, %v854
      %v1061 = vpack.c.b16 %v857, %v856
      %v1062 = vpack.c.b16 %v859, %v858
      %v1063 = vpack.c.b16 %v861, %v860
      %v1064 = vpack.c.b16 %v863, %v862
      %v1065 = vpack.c.b16 %v865, %v864
      %v1066 = vpack.c.b16 %v867, %v866
      %v1067 = vpack.c.b16 %v869, %v868
      %v1068 = vpack.c.b16 %v871, %v870
      %v1069 = vpack.c.b16 %v873, %v872
      %v1070 = vpack.c.b16 %v875, %v874
      %v1071 = vpack.c.b16 %v877, %v876
      %v1072 = vpack.c.b16 %v879, %v878
      %v1073 = vpack.c.b16 %v881, %v880
      %v1074 = vpack.c.b16 %v883, %v882
      %v1075 = vpack.c.b16 %v885, %v884
      %v1076 = vpack.c.b16 %v887, %v886
      %v1077 = vpack.c.b16 %v889, %v888
      %v1078 = vpack.c.b16 %v891, %v890
      %v1079 = vpack.c.b16 %v893, %v892
      %v1080 = vpack.c.b16 %v895, %v894
      %v1081 = vpack.c.b16 %v897, %v896
      %v1082 = vpack.c.b16 %v899, %v898
      %v1083 = vpack.c.b16 %v901, %v900
      %v1084 = vpack.c.b16 %v903, %v902
      %v1085 = vpack.c.b16 %v905, %v904
      %v1086 = vpack.c.b16 %v907, %v906
      %v1087 = vpack.c.b16 %v909, %v908
      %v1088 = vpack.c.b16 %v911, %v910
      %v1089 = vpack.c.b16 %v913, %v912
      %v1090 = vpack.c.b16 %v915, %v914
      %v1091 = vpack.c.b16 %v917, %v916
      %v1092 = vpack.c.b16 %v919, %v918
      %v1093 = vpack.c.b16 %v921, %v920
      %v1094 = vpack.c.b16 %v923, %v922
      %v1095 = vpack.c.b16 %v925, %v924
      %v1096 = vpack.c.b16 %v927, %v926
      %v1097 = vpack.c.b16 %v929, %v928
      %v1098 = vpack.c.b16 %v931, %v930
      %v1099 = vpack.c.b16 %v933, %v932
      %v1100 = vpack.c.b16 %v935, %v934
      %v1101 = vpack.c.b16 %v937, %v936
      %v1102 = vpack.c.b16 %v939, %v938
      %v1103 = vpack.c.b16 %v941, %v940
      %v1104 = vpack.c.b16 %v943, %v942
      %v1105 = vpack.c.b16 %v945, %v944
      %v1106 = vpack.c.b16 %v947, %v946
      %v1107 = vpack.c.b16 %v949, %v948
      %v1108 = vpack.c.b16 %v951, %v950
      %v1109 = vpack.c.b16 %v953, %v952
      %v1110 = vpack.c.b16 %v955, %v954
      %v1111 = vpack.c.b16 %v957, %v956
      %v1112 = vpack.c.b16 %v959, %v958
      %v1113 = vpack.c.b16 %v961, %v960
      %v1114 = vpack.c.b16 %v963, %v962
      %v1115 = vpack.c.b16 %v965, %v964
      %v1116 = vpack.c.b16 %v967, %v966
      %v1117 = vpack.c.b16 %v969, %v968
      %v1118 = vpack.c.b16 %v971, %v970
      %v1119 = vpack.c.b16 %v973, %v972
      %v1120 = vpack.c.b16 %v975, %v974
      %v1121 = vpack.c.b16 %v977, %v976
      %v1122 = vpack.c.b16 %v979, %v978
      %v1123 = vpack.c.b16 %v981, %v980
      %v1124 = vpack.c.b16 %v983, %v982
      %v1125 = vpack.c.b16 %v985, %v984
      %v1126 = vpack.c.b16 %v987, %v986
      %v1127 = vpack.c.b16 %v989, %v988
      %v1128 = vpack.c.b16 %v991, %v990
      %v1129 = vpack.c.b16 %v993, %v992
      %v1130 = vpack.c.b16 %v995, %v994
      %v1131 = vpack.c.b16 %v997, %v996
      %v1132 = vpack.c.b16 %v999, %v998
      %v1133 = vpack.c.b16 %v1001, %v1000
      %v1134 = vpack.c.b16 %v1003, %v1002
      %v1135 = vpack.c.b16 %v1005, %v1004
      %v1136 = vpack.c.b16 %v1007, %v1006
      %v1137 = vpack.c.b16 %v1009, %v1008
      %vm1138 = vcmask 64512
      %v1140 = vsel %vm1138, %v1010, 0
      %v1143 = vsel %vm1138, %v1011, 0
      %v1146 = vsel %vm1138, %v1012, 0
      %v1149 = vsel %vm1138, %v1013, 0
      %v1152 = vsel %vm1138, %v1014, 0
      %v1155 = vsel %vm1138, %v1015, 0
      %v1158 = vsel %vm1138, %v1016, 0
      %v1161 = vsel %vm1138, %v1017, 0
      %v1164 = vsel %vm1138, %v1018, 0
      %v1167 = vsel %vm1138, %v1019, 0
      %v1170 = vsel %vm1138, %v1020, 0
      %v1173 = vsel %vm1138, %v1021, 0
      %v1176 = vsel %vm1138, %v1022, 0
      %v1179 = vsel %vm1138, %v1023, 0
      %v1182 = vsel %vm1138, %v1024, 0
      %v1185 = vsel %vm1138, %v1025, 0
      %v1188 = vsel %vm1138, %v1026, 0
      %v1191 = vsel %vm1138, %v1027, 0
      %v1194 = vsel %vm1138, %v1028, 0
      %v1197 = vsel %vm1138, %v1029, 0
      %v1200 = vsel %vm1138, %v1030, 0
      %v1203 = vsel %vm1138, %v1031, 0
      %v1206 = vsel %vm1138, %v1032, 0
      %v1209 = vsel %vm1138, %v1033, 0
      %v1212 = vsel %vm1138, %v1034, 0
      %v1215 = vsel %vm1138, %v1035, 0
      %v1218 = vsel %vm1138, %v1036, 0
      %v1221 = vsel %vm1138, %v1037, 0
      %v1224 = vsel %vm1138, %v1038, 0
      %v1227 = vsel %vm1138, %v1039, 0
      %v1230 = vsel %vm1138, %v1040, 0
      %v1233 = vsel %vm1138, %v1041, 0
      %v1236 = vsel %vm1138, %v1042, 0
      %v1239 = vsel %vm1138, %v1043, 0
      %v1242 = vsel %vm1138, %v1044, 0
      %v1245 = vsel %vm1138, %v1045, 0
      %v1248 = vsel %vm1138, %v1046, 0
      %v1251 = vsel %vm1138, %v1047, 0
      %v1254 = vsel %vm1138, %v1048, 0
      %v1257 = vsel %vm1138, %v1049, 0
      %v1260 = vsel %vm1138, %v1050, 0
      %v1263 = vsel %vm1138, %v1051, 0
      %v1266 = vsel %vm1138, %v1052, 0
      %v1269 = vsel %vm1138, %v1053, 0
      %v1272 = vsel %vm1138, %v1054, 0
      %v1275 = vsel %vm1138, %v1055, 0
      %v1278 = vsel %vm1138, %v1056, 0
      %v1281 = vsel %vm1138, %v1057, 0
      %v1284 = vsel %vm1138, %v1058, 0
      %v1287 = vsel %vm1138, %v1059, 0
      %v1290 = vsel %vm1138, %v1060, 0
      %v1293 = vsel %vm1138, %v1061, 0
      %v1296 = vsel %vm1138, %v1062, 0
      %v1299 = vsel %vm1138, %v1063, 0
      %v1302 = vsel %vm1138, %v1064, 0
      %v1305 = vsel %vm1138, %v1065, 0
      %v1308 = vsel %vm1138, %v1066, 0
      %v1311 = vsel %vm1138, %v1067, 0
      %v1314 = vsel %vm1138, %v1068, 0
      %v1317 = vsel %vm1138, %v1069, 0
      %v1320 = vsel %vm1138, %v1070, 0
      %v1323 = vsel %vm1138, %v1071, 0
      %v1326 = vsel %vm1138, %v1072, 0
      %v1329 = vsel %vm1138, %v1073, 0
      %v1332 = vsel %vm1138, %v1074, 0
      %v1335 = vsel %vm1138, %v1075, 0
      %v1338 = vsel %vm1138, %v1076, 0
      %v1341 = vsel %vm1138, %v1077, 0
      %v1344 = vsel %vm1138, %v1078, 0
      %v1347 = vsel %vm1138, %v1079, 0
      %v1350 = vsel %vm1138, %v1080, 0
      %v1353 = vsel %vm1138, %v1081, 0
      %v1356 = vsel %vm1138, %v1082, 0
      %v1359 = vsel %vm1138, %v1083, 0
      %v1362 = vsel %vm1138, %v1084, 0
      %v1365 = vsel %vm1138, %v1085, 0
      %v1368 = vsel %vm1138, %v1086, 0
      %v1371 = vsel %vm1138, %v1087, 0
      %v1374 = vsel %vm1138, %v1088, 0
      %v1377 = vsel %vm1138, %v1089, 0
      %v1380 = vsel %vm1138, %v1090, 0
      %v1383 = vsel %vm1138, %v1091, 0
      %v1386 = vsel %vm1138, %v1092, 0
      %v1389 = vsel %vm1138, %v1093, 0
      %v1392 = vsel %vm1138, %v1094, 0
      %v1395 = vsel %vm1138, %v1095, 0
      %v1398 = vsel %vm1138, %v1096, 0
      %v1401 = vsel %vm1138, %v1097, 0
      %v1404 = vsel %vm1138, %v1098, 0
      %v1407 = vsel %vm1138, %v1099, 0
      %v1410 = vsel %vm1138, %v1100, 0
      %v1413 = vsel %vm1138, %v1101, 0
      %v1416 = vsel %vm1138, %v1102, 0
      %v1419 = vsel %vm1138, %v1103, 0
      %v1422 = vsel %vm1138, %v1104, 0
      %v1425 = vsel %vm1138, %v1105, 0
      %v1428 = vsel %vm1138, %v1106, 0
      %v1431 = vsel %vm1138, %v1107, 0
      %v1434 = vsel %vm1138, %v1108, 0
      %v1437 = vsel %vm1138, %v1109, 0
      %v1440 = vsel %vm1138, %v1110, 0
      %v1443 = vsel %vm1138, %v1111, 0
      %v1446 = vsel %vm1138, %v1112, 0
      %v1449 = vsel %vm1138, %v1113, 0
      %v1452 = vsel %vm1138, %v1114, 0
      %v1455 = vsel %vm1138, %v1115, 0
      %v1458 = vsel %vm1138, %v1116, 0
      %v1461 = vsel %vm1138, %v1117, 0
      %v1464 = vsel %vm1138, %v1118, 0
      %v1467 = vsel %vm1138, %v1119, 0
      %v1470 = vsel %vm1138, %v1120, 0
      %v1473 = vsel %vm1138, %v1121, 0
      %v1476 = vsel %vm1138, %v1122, 0
      %v1479 = vsel %vm1138, %v1123, 0
      %v1482 = vsel %vm1138, %v1124, 0
      %v1485 = vsel %vm1138, %v1125, 0
      %v1488 = vsel %vm1138, %v1126, 0
      %v1491 = vsel %vm1138, %v1127, 0
      %v1494 = vsel %vm1138, %v1128, 0
      %v1497 = vsel %vm1138, %v1129, 0
      %v1500 = vsel %vm1138, %v1130, 0
      %v1503 = vsel %vm1138, %v1131, 0
      %v1506 = vsel %vm1138, %v1132, 0
      %v1509 = vsel %vm1138, %v1133, 0
      %v1512 = vsel %vm1138, %v1134, 0
      %v1515 = vsel %vm1138, %v1135, 0
      %v1518 = vsel %vm1138, %v1136, 0
      %v1521 = vsel %vm1138, %v1137, 0
      %vm1523 = vcmask 1043456
      %v1525 = vsel %vm1523, %v497, 0
      %1527 = vmatprep.subr.bf16.mxu0 0
      %1528 = vmatpush1.bf16.msra.mxu0 %v1525
      %1529 = vmatprep.subr.bf16.mxu0 0
      %1530 = vmatpush1.bf16.msra.mxu0 0
      %1531 = vmatprep.subr.bf16.mxu0 0
      %1532 = vmatpush1.bf16.msra.mxu0 0
      %1533 = vmatprep.subr.bf16.mxu0 0
      %1534 = vmatpush1.bf16.msra.mxu0 0
      %1535 = vmatprep.subr.bf16.mxu0 0
      %1536 = vmatpush1.bf16.msra.mxu0 0
      %1537 = vmatprep.subr.bf16.mxu0 0
      %1538 = vmatpush1.bf16.msra.mxu0 0
      %1539 = vmatprep.subr.bf16.mxu0 0
      %1540 = vmatpush1.bf16.msra.mxu0 0
      %1541 = vmatprep.subr.bf16.mxu0 0
      %1542 = vmatpush1.bf16.msra.mxu0 0
      %1543 = vmatprep.subr.bf16.mxu0 0
      %1544 = vmatpush1.bf16.msra.mxu0 0
      %1545 = vmatprep.subr.bf16.mxu0 0
      %1546 = vmatpush1.bf16.msra.mxu0 0
      %1547 = vmatprep.subr.bf16.mxu0 0
      %1548 = vmatpush1.bf16.msra.mxu0 0
      %1549 = vmatprep.subr.bf16.mxu0 0
      %1550 = vmatpush1.bf16.msra.mxu0 0
      %1551 = vmatprep.subr.bf16.mxu0 0
      %1552 = vmatpush1.bf16.msra.mxu0 0
      %1553 = vmatprep.subr.bf16.mxu0 0
      %1554 = vmatpush1.bf16.msra.mxu0 0
      %1555 = vmatprep.subr.bf16.mxu0 0
      %1556 = vmatpush1.bf16.msra.mxu0 0
      %1557 = vmatprep.subr.bf16.mxu0 0
      %1558 = vmatpush1.bf16.msra.mxu0 0
      %1559 = vmatprep.mubr.bf16.mxu0 0
      %1560 = vmatmul.mubr.bf16.gmra.mrb[0].mxu0 %v1140
      %v1561 = vpop.f32.mrb[0].mxu0
      %v1562 = vadd.f32 0.0, %v1561
      %v1563 = vpop.f32.mrb[0].mxu0
      %v1564 = vpop.f32.mrb[0].mxu0
      %v1565 = vadd.f32 0.0, %v1564
      %v1566 = vpop.f32.mrb[0].mxu0
      %1567 = vmatprep.mubr.bf16.mxu0 0
      %1568 = vmatmul.mubr.bf16.gmra.mrb[0].mxu0 %v1143
      %v1569 = vpop.f32.mrb[0].mxu0
      %v1570 = vadd.f32 0.0, %v1569
      %v1571 = vpop.f32.mrb[0].mxu0
      %v1572 = vpop.f32.mrb[0].mxu0
      %v1573 = vadd.f32 0.0, %v1572
      %v1574 = vpop.f32.mrb[0].mxu0
      %1575 = vmatprep.mubr.bf16.mxu0 0
      %1576 = vmatmul.mubr.bf16.gmra.mrb[0].mxu0 %v1146
      %v1577 = vpop.f32.mrb[0].mxu0
      %v1578 = vadd.f32 0.0, %v1577
      %v1579 = vpop.f32.mrb[0].mxu0
      %v1580 = vpop.f32.mrb[0].mxu0
      %v1581 = vadd.f32 0.0, %v1580
      %v1582 = vpop.f32.mrb[0].mxu0
      %1583 = vmatprep.mubr.bf16.mxu0 0
      %1584 = vmatmul.mubr.bf16.gmra.mrb[0].mxu0 %v1149
      %v1585 = vpop.f32.mrb[0].mxu0
      %v1586 = vadd.f32 0.0, %v1585
      %v1587 = vpop.f32.mrb[0].mxu0
      %v1588 = vpop.f32.mrb[0].mxu0
      %v1589 = vadd.f32 0.0, %v1588
      %v1590 = vpop.f32.mrb[0].mxu0
      %1591 = vmatprep.mubr.bf16.mxu0 0
      %1592 = vmatmul.mubr.bf16.gmra.mrb[0].mxu0 %v1152
      %v1593 = vpop.f32.mrb[0].mxu0
      %v1594 = vadd.f32 0.0, %v1593
      %v1595 = vpop.f32.mrb[0].mxu0
      %v1596 = vpop.f32.mrb[0].mxu0
      %v1597 = vadd.f32 0.0, %v1596
      %v1598 = vpop.f32.mrb[0].mxu0
      %1599 = vmatprep.mubr.bf16.mxu0 0
      %1600 = vmatmul.mubr.bf16.gmra.mrb[0].mxu0 %v1155
      %v1601 = vpop.f32.mrb[0].mxu0
      %v1602 = vadd.f32 0.0, %v1601
      %v1603 = vpop.f32.mrb[0].mxu0
      %v1604 = vpop.f32.mrb[0].mxu0
      %v1605 = vadd.f32 0.0, %v1604
      %v1606 = vpop.f32.mrb[0].mxu0
      %1607 = vmatprep.mubr.bf16.mxu0 0
      %1608 = vmatmul.mubr.bf16.gmra.mrb[0].mxu0 %v1158
      %v1609 = vpop.f32.mrb[0].mxu0
      %v1610 = vadd.f32 0.0, %v1609
      %v1611 = vpop.f32.mrb[0].mxu0
      %v1612 = vpop.f32.mrb[0].mxu0
      %v1613 = vadd.f32 0.0, %v1612
      %v1614 = vpop.f32.mrb[0].mxu0
      %1615 = vmatprep.mubr.bf16.mxu0 0
      %1616 = vmatmul.mubr.bf16.gmra.mrb[0].mxu0 %v1161
      %v1617 = vpop.f32.mrb[0].mxu0
      %v1618 = vadd.f32 0.0, %v1617
      %v1619 = vpop.f32.mrb[0].mxu0
      %v1620 = vpop.f32.mrb[0].mxu0
      %v1621 = vadd.f32 0.0, %v1620
      %v1622 = vpop.f32.mrb[0].mxu0
      %1623 = vmatprep.mubr.bf16.mxu0 0
      %1624 = vmatmul.mubr.bf16.gmra.mrb[0].mxu0 %v1164
      %v1625 = vpop.f32.mrb[0].mxu0
      %v1626 = vadd.f32 0.0, %v1625
      %v1627 = vpop.f32.mrb[0].mxu0
      %v1628 = vpop.f32.mrb[0].mxu0
      %v1629 = vadd.f32 0.0, %v1628
      %v1630 = vpop.f32.mrb[0].mxu0
      %1631 = vmatprep.mubr.bf16.mxu0 0
      %1632 = vmatmul.mubr.bf16.gmra.mrb[0].mxu0 %v1167
      %v1633 = vpop.f32.mrb[0].mxu0
      %v1634 = vadd.f32 0.0, %v1633
      %v1635 = vpop.f32.mrb[0].mxu0
      %v1636 = vpop.f32.mrb[0].mxu0
      %v1637 = vadd.f32 0.0, %v1636
      %v1638 = vpop.f32.mrb[0].mxu0
      %1639 = vmatprep.mubr.bf16.mxu0 0
      %1640 = vmatmul.mubr.bf16.gmra.mrb[0].mxu0 %v1170
      %v1641 = vpop.f32.mrb[0].mxu0
      %v1642 = vadd.f32 0.0, %v1641
      %v1643 = vpop.f32.mrb[0].mxu0
      %v1644 = vpop.f32.mrb[0].mxu0
      %v1645 = vadd.f32 0.0, %v1644
      %v1646 = vpop.f32.mrb[0].mxu0
      %1647 = vmatprep.mubr.bf16.mxu0 0
      %1648 = vmatmul.mubr.bf16.gmra.mrb[0].mxu0 %v1173
      %v1649 = vpop.f32.mrb[0].mxu0
      %v1650 = vadd.f32 0.0, %v1649
      %v1651 = vpop.f32.mrb[0].mxu0
      %v1652 = vpop.f32.mrb[0].mxu0
      %v1653 = vadd.f32 0.0, %v1652
      %v1654 = vpop.f32.mrb[0].mxu0
      %1655 = vmatprep.mubr.bf16.mxu0 0
      %1656 = vmatmul.mubr.bf16.gmra.mrb[0].mxu0 %v1176
      %v1657 = vpop.f32.mrb[0].mxu0
      %v1658 = vadd.f32 0.0, %v1657
      %v1659 = vpop.f32.mrb[0].mxu0
      %v1660 = vpop.f32.mrb[0].mxu0
      %v1661 = vadd.f32 0.0, %v1660
      %v1662 = vpop.f32.mrb[0].mxu0
      %1663 = vmatprep.mubr.bf16.mxu0 0
      %1664 = vmatmul.mubr.bf16.gmra.mrb[0].mxu0 %v1179
      %v1665 = vpop.f32.mrb[0].mxu0
      %v1666 = vadd.f32 0.0, %v1665
      %v1667 = vpop.f32.mrb[0].mxu0
      %v1668 = vpop.f32.mrb[0].mxu0
      %v1669 = vadd.f32 0.0, %v1668
      %v1670 = vpop.f32.mrb[0].mxu0
      %1671 = vmatprep.mubr.bf16.mxu0 0
      %1672 = vmatmul.mubr.bf16.gmra.mrb[0].mxu0 %v1182
      %v1673 = vpop.f32.mrb[0].mxu0
      %v1674 = vadd.f32 0.0, %v1673
      %v1675 = vpop.f32.mrb[0].mxu0
      %v1676 = vpop.f32.mrb[0].mxu0
      %v1677 = vadd.f32 0.0, %v1676
      %v1678 = vpop.f32.mrb[0].mxu0
      %1679 = vmatprep.mubr.bf16.mxu0 0
      %1680 = vmatmul.mubr.bf16.gmra.mrb[0].mxu0 %v1185
      %v1681 = vpop.f32.mrb[0].mxu0
      %v1682 = vadd.f32 0.0, %v1681
      %v1683 = vpop.f32.mrb[0].mxu0
      %v1684 = vpop.f32.mrb[0].mxu0
      %v1685 = vadd.f32 0.0, %v1684
      %v1686 = vpop.f32.mrb[0].mxu0
      %1687 = vmatprep.mubr.bf16.mxu0 0
      %1688 = vmatmul.mubr.bf16.gmra.mrb[0].mxu0 %v1188
      %v1689 = vpop.f32.mrb[0].mxu0
      %v1690 = vadd.f32 0.0, %v1689
      %v1691 = vpop.f32.mrb[0].mxu0
      %v1692 = vpop.f32.mrb[0].mxu0
      %v1693 = vadd.f32 0.0, %v1692
      %v1694 = vpop.f32.mrb[0].mxu0
      %1695 = vmatprep.mubr.bf16.mxu0 0
      %1696 = vmatmul.mubr.bf16.gmra.mrb[0].mxu0 %v1191
      %v1697 = vpop.f32.mrb[0].mxu0
      %v1698 = vadd.f32 0.0, %v1697
      %v1699 = vpop.f32.mrb[0].mxu0
      %v1700 = vpop.f32.mrb[0].mxu0
      %v1701 = vadd.f32 0.0, %v1700
      %v1702 = vpop.f32.mrb[0].mxu0
      %1703 = vmatprep.mubr.bf16.mxu0 0
      %1704 = vmatmul.mubr.bf16.gmra.mrb[0].mxu0 %v1194
      %v1705 = vpop.f32.mrb[0].mxu0
      %v1706 = vadd.f32 0.0, %v1705
      %v1707 = vpop.f32.mrb[0].mxu0
      %v1708 = vpop.f32.mrb[0].mxu0
      %v1709 = vadd.f32 0.0, %v1708
      %v1710 = vpop.f32.mrb[0].mxu0
      %1711 = vmatprep.mubr.bf16.mxu0 0
      %1712 = vmatmul.mubr.bf16.gmra.mrb[0].mxu0 %v1197
      %v1713 = vpop.f32.mrb[0].mxu0
      %v1714 = vadd.f32 0.0, %v1713
      %v1715 = vpop.f32.mrb[0].mxu0
      %v1716 = vpop.f32.mrb[0].mxu0
      %v1717 = vadd.f32 0.0, %v1716
      %v1718 = vpop.f32.mrb[0].mxu0
      %1719 = vmatprep.mubr.bf16.mxu0 0
      %1720 = vmatmul.mubr.bf16.gmra.mrb[0].mxu0 %v1200
      %v1721 = vpop.f32.mrb[0].mxu0
      %v1722 = vadd.f32 0.0, %v1721
      %v1723 = vpop.f32.mrb[0].mxu0
      %v1724 = vpop.f32.mrb[0].mxu0
      %v1725 = vadd.f32 0.0, %v1724
      %v1726 = vpop.f32.mrb[0].mxu0
      %1727 = vmatprep.mubr.bf16.mxu0 0
      %1728 = vmatmul.mubr.bf16.gmra.mrb[0].mxu0 %v1203
      %v1729 = vpop.f32.mrb[0].mxu0
      %v1730 = vadd.f32 0.0, %v1729
      %v1731 = vpop.f32.mrb[0].mxu0
      %v1732 = vpop.f32.mrb[0].mxu0
      %v1733 = vadd.f32 0.0, %v1732
      %v1734 = vpop.f32.mrb[0].mxu0
      %1735 = vmatprep.mubr.bf16.mxu0 0
      %1736 = vmatmul.mubr.bf16.gmra.mrb[0].mxu0 %v1206
      %v1737 = vpop.f32.mrb[0].mxu0
      %v1738 = vadd.f32 0.0, %v1737
      %v1739 = vpop.f32.mrb[0].mxu0
      %v1740 = vpop.f32.mrb[0].mxu0
      %v1741 = vadd.f32 0.0, %v1740
      %v1742 = vpop.f32.mrb[0].mxu0
      %1743 = vmatprep.mubr.bf16.mxu0 0
      %1744 = vmatmul.mubr.bf16.gmra.mrb[0].mxu0 %v1209
      %v1745 = vpop.f32.mrb[0].mxu0
      %v1746 = vadd.f32 0.0, %v1745
      %v1747 = vpop.f32.mrb[0].mxu0
      %v1748 = vpop.f32.mrb[0].mxu0
      %v1749 = vadd.f32 0.0, %v1748
      %v1750 = vpop.f32.mrb[0].mxu0
      %1751 = vmatprep.mubr.bf16.mxu0 0
      %1752 = vmatmul.mubr.bf16.gmra.mrb[0].mxu0 %v1212
      %v1753 = vpop.f32.mrb[0].mxu0
      %v1754 = vadd.f32 0.0, %v1753
      %v1755 = vpop.f32.mrb[0].mxu0
      %v1756 = vpop.f32.mrb[0].mxu0
      %v1757 = vadd.f32 0.0, %v1756
      %v1758 = vpop.f32.mrb[0].mxu0
      %1759 = vmatprep.mubr.bf16.mxu0 0
      %1760 = vmatmul.mubr.bf16.gmra.mrb[0].mxu0 %v1215
      %v1761 = vpop.f32.mrb[0].mxu0
      %v1762 = vadd.f32 0.0, %v1761
      %v1763 = vpop.f32.mrb[0].mxu0
      %v1764 = vpop.f32.mrb[0].mxu0
      %v1765 = vadd.f32 0.0, %v1764
      %v1766 = vpop.f32.mrb[0].mxu0
      %1767 = vmatprep.mubr.bf16.mxu0 0
      %1768 = vmatmul.mubr.bf16.gmra.mrb[0].mxu0 %v1218
      %v1769 = vpop.f32.mrb[0].mxu0
      %v1770 = vadd.f32 0.0, %v1769
      %v1771 = vpop.f32.mrb[0].mxu0
      %v1772 = vpop.f32.mrb[0].mxu0
      %v1773 = vadd.f32 0.0, %v1772
      %v1774 = vpop.f32.mrb[0].mxu0
      %1775 = vmatprep.mubr.bf16.mxu0 0
      %1776 = vmatmul.mubr.bf16.gmra.mrb[0].mxu0 %v1221
      %v1777 = vpop.f32.mrb[0].mxu0
      %v1778 = vadd.f32 0.0, %v1777
      %v1779 = vpop.f32.mrb[0].mxu0
      %v1780 = vpop.f32.mrb[0].mxu0
      %v1781 = vadd.f32 0.0, %v1780
      %v1782 = vpop.f32.mrb[0].mxu0
      %1783 = vmatprep.mubr.bf16.mxu0 0
      %1784 = vmatmul.mubr.bf16.gmra.mrb[0].mxu0 %v1224
      %v1785 = vpop.f32.mrb[0].mxu0
      %v1786 = vadd.f32 0.0, %v1785
      %v1787 = vpop.f32.mrb[0].mxu0
      %v1788 = vpop.f32.mrb[0].mxu0
      %v1789 = vadd.f32 0.0, %v1788
      %v1790 = vpop.f32.mrb[0].mxu0
      %1791 = vmatprep.mubr.bf16.mxu0 0
      %1792 = vmatmul.mubr.bf16.gmra.mrb[0].mxu0 %v1227
      %v1793 = vpop.f32.mrb[0].mxu0
      %v1794 = vadd.f32 0.0, %v1793
      %v1795 = vpop.f32.mrb[0].mxu0
      %v1796 = vpop.f32.mrb[0].mxu0
      %v1797 = vadd.f32 0.0, %v1796
      %v1798 = vpop.f32.mrb[0].mxu0
      %1799 = vmatprep.mubr.bf16.mxu0 0
      %1800 = vmatmul.mubr.bf16.gmra.mrb[0].mxu0 %v1230
      %v1801 = vpop.f32.mrb[0].mxu0
      %v1802 = vadd.f32 0.0, %v1801
      %v1803 = vpop.f32.mrb[0].mxu0
      %v1804 = vpop.f32.mrb[0].mxu0
      %v1805 = vadd.f32 0.0, %v1804
      %v1806 = vpop.f32.mrb[0].mxu0
      %1807 = vmatprep.mubr.bf16.mxu0 0
      %1808 = vmatmul.mubr.bf16.gmra.mrb[0].mxu0 %v1233
      %v1809 = vpop.f32.mrb[0].mxu0
      %v1810 = vadd.f32 0.0, %v1809
      %v1811 = vpop.f32.mrb[0].mxu0
      %v1812 = vpop.f32.mrb[0].mxu0
      %v1813 = vadd.f32 0.0, %v1812
      %v1814 = vpop.f32.mrb[0].mxu0
      %1815 = vmatprep.mubr.bf16.mxu0 0
      %1816 = vmatmul.mubr.bf16.gmra.mrb[0].mxu0 %v1236
      %v1817 = vpop.f32.mrb[0].mxu0
      %v1818 = vadd.f32 0.0, %v1817
      %v1819 = vpop.f32.mrb[0].mxu0
      %v1820 = vpop.f32.mrb[0].mxu0
      %v1821 = vadd.f32 0.0, %v1820
      %v1822 = vpop.f32.mrb[0].mxu0
      %1823 = vmatprep.mubr.bf16.mxu0 0
      %1824 = vmatmul.mubr.bf16.gmra.mrb[0].mxu0 %v1239
      %v1825 = vpop.f32.mrb[0].mxu0
      %v1826 = vadd.f32 0.0, %v1825
      %v1827 = vpop.f32.mrb[0].mxu0
      %v1828 = vpop.f32.mrb[0].mxu0
      %v1829 = vadd.f32 0.0, %v1828
      %v1830 = vpop.f32.mrb[0].mxu0
      %1831 = vmatprep.mubr.bf16.mxu0 0
      %1832 = vmatmul.mubr.bf16.gmra.mrb[0].mxu0 %v1242
      %v1833 = vpop.f32.mrb[0].mxu0
      %v1834 = vadd.f32 0.0, %v1833
      %v1835 = vpop.f32.mrb[0].mxu0
      %v1836 = vpop.f32.mrb[0].mxu0
      %v1837 = vadd.f32 0.0, %v1836
      %v1838 = vpop.f32.mrb[0].mxu0
      %1839 = vmatprep.mubr.bf16.mxu0 0
      %1840 = vmatmul.mubr.bf16.gmra.mrb[0].mxu0 %v1245
      %v1841 = vpop.f32.mrb[0].mxu0
      %v1842 = vadd.f32 0.0, %v1841
      %v1843 = vpop.f32.mrb[0].mxu0
      %v1844 = vpop.f32.mrb[0].mxu0
      %v1845 = vadd.f32 0.0, %v1844
      %v1846 = vpop.f32.mrb[0].mxu0
      %1847 = vmatprep.mubr.bf16.mxu0 0
      %1848 = vmatmul.mubr.bf16.gmra.mrb[0].mxu0 %v1248
      %v1849 = vpop.f32.mrb[0].mxu0
      %v1850 = vadd.f32 0.0, %v1849
      %v1851 = vpop.f32.mrb[0].mxu0
      %v1852 = vpop.f32.mrb[0].mxu0
      %v1853 = vadd.f32 0.0, %v1852
      %v1854 = vpop.f32.mrb[0].mxu0
      %1855 = vmatprep.mubr.bf16.mxu0 0
      %1856 = vmatmul.mubr.bf16.gmra.mrb[0].mxu0 %v1251
      %v1857 = vpop.f32.mrb[0].mxu0
      %v1858 = vadd.f32 0.0, %v1857
      %v1859 = vpop.f32.mrb[0].mxu0
      %v1860 = vpop.f32.mrb[0].mxu0
      %v1861 = vadd.f32 0.0, %v1860
      %v1862 = vpop.f32.mrb[0].mxu0
      %1863 = vmatprep.mubr.bf16.mxu0 0
      %1864 = vmatmul.mubr.bf16.gmra.mrb[0].mxu0 %v1254
      %v1865 = vpop.f32.mrb[0].mxu0
      %v1866 = vadd.f32 0.0, %v1865
      %v1867 = vpop.f32.mrb[0].mxu0
      %v1868 = vpop.f32.mrb[0].mxu0
      %v1869 = vadd.f32 0.0, %v1868
      %v1870 = vpop.f32.mrb[0].mxu0
      %1871 = vmatprep.mubr.bf16.mxu0 0
      %1872 = vmatmul.mubr.bf16.gmra.mrb[0].mxu0 %v1257
      %v1873 = vpop.f32.mrb[0].mxu0
      %v1874 = vadd.f32 0.0, %v1873
      %v1875 = vpop.f32.mrb[0].mxu0
      %v1876 = vpop.f32.mrb[0].mxu0
      %v1877 = vadd.f32 0.0, %v1876
      %v1878 = vpop.f32.mrb[0].mxu0
      %1879 = vmatprep.mubr.bf16.mxu0 0
      %1880 = vmatmul.mubr.bf16.gmra.mrb[0].mxu0 %v1260
      %v1881 = vpop.f32.mrb[0].mxu0
      %v1882 = vadd.f32 0.0, %v1881
      %v1883 = vpop.f32.mrb[0].mxu0
      %v1884 = vpop.f32.mrb[0].mxu0
      %v1885 = vadd.f32 0.0, %v1884
      %v1886 = vpop.f32.mrb[0].mxu0
      %1887 = vmatprep.mubr.bf16.mxu0 0
      %1888 = vmatmul.mubr.bf16.gmra.mrb[0].mxu0 %v1263
      %v1889 = vpop.f32.mrb[0].mxu0
      %v1890 = vadd.f32 0.0, %v1889
      %v1891 = vpop.f32.mrb[0].mxu0
      %v1892 = vpop.f32.mrb[0].mxu0
      %v1893 = vadd.f32 0.0, %v1892
      %v1894 = vpop.f32.mrb[0].mxu0
      %1895 = vmatprep.mubr.bf16.mxu0 0
      %1896 = vmatmul.mubr.bf16.gmra.mrb[0].mxu0 %v1266
      %v1897 = vpop.f32.mrb[0].mxu0
      %v1898 = vadd.f32 0.0, %v1897
      %v1899 = vpop.f32.mrb[0].mxu0
      %v1900 = vpop.f32.mrb[0].mxu0
      %v1901 = vadd.f32 0.0, %v1900
      %v1902 = vpop.f32.mrb[0].mxu0
      %1903 = vmatprep.mubr.bf16.mxu0 0
      %1904 = vmatmul.mubr.bf16.gmra.mrb[0].mxu0 %v1269
      %v1905 = vpop.f32.mrb[0].mxu0
      %v1906 = vadd.f32 0.0, %v1905
      %v1907 = vpop.f32.mrb[0].mxu0
      %v1908 = vpop.f32.mrb[0].mxu0
      %v1909 = vadd.f32 0.0, %v1908
      %v1910 = vpop.f32.mrb[0].mxu0
      %1911 = vmatprep.mubr.bf16.mxu0 0
      %1912 = vmatmul.mubr.bf16.gmra.mrb[0].mxu0 %v1272
      %v1913 = vpop.f32.mrb[0].mxu0
      %v1914 = vadd.f32 0.0, %v1913
      %v1915 = vpop.f32.mrb[0].mxu0
      %v1916 = vpop.f32.mrb[0].mxu0
      %v1917 = vadd.f32 0.0, %v1916
      %v1918 = vpop.f32.mrb[0].mxu0
      %1919 = vmatprep.mubr.bf16.mxu0 0
      %1920 = vmatmul.mubr.bf16.gmra.mrb[0].mxu0 %v1275
      %v1921 = vpop.f32.mrb[0].mxu0
      %v1922 = vadd.f32 0.0, %v1921
      %v1923 = vpop.f32.mrb[0].mxu0
      %v1924 = vpop.f32.mrb[0].mxu0
      %v1925 = vadd.f32 0.0, %v1924
      %v1926 = vpop.f32.mrb[0].mxu0
      %1927 = vmatprep.mubr.bf16.mxu0 0
      %1928 = vmatmul.mubr.bf16.gmra.mrb[0].mxu0 %v1278
      %v1929 = vpop.f32.mrb[0].mxu0
      %v1930 = vadd.f32 0.0, %v1929
      %v1931 = vpop.f32.mrb[0].mxu0
      %v1932 = vpop.f32.mrb[0].mxu0
      %v1933 = vadd.f32 0.0, %v1932
      %v1934 = vpop.f32.mrb[0].mxu0
      %1935 = vmatprep.mubr.bf16.mxu0 0
      %1936 = vmatmul.mubr.bf16.gmra.mrb[0].mxu0 %v1281
      %v1937 = vpop.f32.mrb[0].mxu0
      %v1938 = vadd.f32 0.0, %v1937
      %v1939 = vpop.f32.mrb[0].mxu0
      %v1940 = vpop.f32.mrb[0].mxu0
      %v1941 = vadd.f32 0.0, %v1940
      %v1942 = vpop.f32.mrb[0].mxu0
      %1943 = vmatprep.mubr.bf16.mxu0 0
      %1944 = vmatmul.mubr.bf16.gmra.mrb[0].mxu0 %v1284
      %v1945 = vpop.f32.mrb[0].mxu0
      %v1946 = vadd.f32 0.0, %v1945
      %v1947 = vpop.f32.mrb[0].mxu0
      %v1948 = vpop.f32.mrb[0].mxu0
      %v1949 = vadd.f32 0.0, %v1948
      %v1950 = vpop.f32.mrb[0].mxu0
      %1951 = vmatprep.mubr.bf16.mxu0 0
      %1952 = vmatmul.mubr.bf16.gmra.mrb[0].mxu0 %v1287
      %v1953 = vpop.f32.mrb[0].mxu0
      %v1954 = vadd.f32 0.0, %v1953
      %v1955 = vpop.f32.mrb[0].mxu0
      %v1956 = vpop.f32.mrb[0].mxu0
      %v1957 = vadd.f32 0.0, %v1956
      %v1958 = vpop.f32.mrb[0].mxu0
      %1959 = vmatprep.mubr.bf16.mxu0 0
      %1960 = vmatmul.mubr.bf16.gmra.mrb[0].mxu0 %v1290
      %v1961 = vpop.f32.mrb[0].mxu0
      %v1962 = vadd.f32 0.0, %v1961
      %v1963 = vpop.f32.mrb[0].mxu0
      %v1964 = vpop.f32.mrb[0].mxu0
      %v1965 = vadd.f32 0.0, %v1964
      %v1966 = vpop.f32.mrb[0].mxu0
      %1967 = vmatprep.mubr.bf16.mxu0 0
      %1968 = vmatmul.mubr.bf16.gmra.mrb[0].mxu0 %v1293
      %v1969 = vpop.f32.mrb[0].mxu0
      %v1970 = vadd.f32 0.0, %v1969
      %v1971 = vpop.f32.mrb[0].mxu0
      %v1972 = vpop.f32.mrb[0].mxu0
      %v1973 = vadd.f32 0.0, %v1972
      %v1974 = vpop.f32.mrb[0].mxu0
      %1975 = vmatprep.mubr.bf16.mxu0 0
      %1976 = vmatmul.mubr.bf16.gmra.mrb[0].mxu0 %v1296
      %v1977 = vpop.f32.mrb[0].mxu0
      %v1978 = vadd.f32 0.0, %v1977
      %v1979 = vpop.f32.mrb[0].mxu0
      %v1980 = vpop.f32.mrb[0].mxu0
      %v1981 = vadd.f32 0.0, %v1980
      %v1982 = vpop.f32.mrb[0].mxu0
      %1983 = vmatprep.mubr.bf16.mxu0 0
      %1984 = vmatmul.mubr.bf16.gmra.mrb[0].mxu0 %v1299
      %v1985 = vpop.f32.mrb[0].mxu0
      %v1986 = vadd.f32 0.0, %v1985
      %v1987 = vpop.f32.mrb[0].mxu0
      %v1988 = vpop.f32.mrb[0].mxu0
      %v1989 = vadd.f32 0.0, %v1988
      %v1990 = vpop.f32.mrb[0].mxu0
      %1991 = vmatprep.mubr.bf16.mxu0 0
      %1992 = vmatmul.mubr.bf16.gmra.mrb[0].mxu0 %v1302
      %v1993 = vpop.f32.mrb[0].mxu0
      %v1994 = vadd.f32 0.0, %v1993
      %v1995 = vpop.f32.mrb[0].mxu0
      %v1996 = vpop.f32.mrb[0].mxu0
      %v1997 = vadd.f32 0.0, %v1996
      %v1998 = vpop.f32.mrb[0].mxu0
      %1999 = vmatprep.mubr.bf16.mxu0 0
      %2000 = vmatmul.mubr.bf16.gmra.mrb[0].mxu0 %v1305
      %v2001 = vpop.f32.mrb[0].mxu0
      %v2002 = vadd.f32 0.0, %v2001
      %v2003 = vpop.f32.mrb[0].mxu0
      %v2004 = vpop.f32.mrb[0].mxu0
      %v2005 = vadd.f32 0.0, %v2004
      %v2006 = vpop.f32.mrb[0].mxu0
      %2007 = vmatprep.mubr.bf16.mxu0 0
      %2008 = vmatmul.mubr.bf16.gmra.mrb[0].mxu0 %v1308
      %v2009 = vpop.f32.mrb[0].mxu0
      %v2010 = vadd.f32 0.0, %v2009
      %v2011 = vpop.f32.mrb[0].mxu0
      %v2012 = vpop.f32.mrb[0].mxu0
      %v2013 = vadd.f32 0.0, %v2012
      %v2014 = vpop.f32.mrb[0].mxu0
      %2015 = vmatprep.mubr.bf16.mxu0 0
      %2016 = vmatmul.mubr.bf16.gmra.mrb[0].mxu0 %v1311
      %v2017 = vpop.f32.mrb[0].mxu0
      %v2018 = vadd.f32 0.0, %v2017
      %v2019 = vpop.f32.mrb[0].mxu0
      %v2020 = vpop.f32.mrb[0].mxu0
      %v2021 = vadd.f32 0.0, %v2020
      %v2022 = vpop.f32.mrb[0].mxu0
      %2023 = vmatprep.mubr.bf16.mxu0 0
      %2024 = vmatmul.mubr.bf16.gmra.mrb[0].mxu0 %v1314
      %v2025 = vpop.f32.mrb[0].mxu0
      %v2026 = vadd.f32 0.0, %v2025
      %v2027 = vpop.f32.mrb[0].mxu0
      %v2028 = vpop.f32.mrb[0].mxu0
      %v2029 = vadd.f32 0.0, %v2028
      %v2030 = vpop.f32.mrb[0].mxu0
      %2031 = vmatprep.mubr.bf16.mxu0 0
      %2032 = vmatmul.mubr.bf16.gmra.mrb[0].mxu0 %v1317
      %v2033 = vpop.f32.mrb[0].mxu0
      %v2034 = vadd.f32 0.0, %v2033
      %v2035 = vpop.f32.mrb[0].mxu0
      %v2036 = vpop.f32.mrb[0].mxu0
      %v2037 = vadd.f32 0.0, %v2036
      %v2038 = vpop.f32.mrb[0].mxu0
      %2039 = vmatprep.mubr.bf16.mxu0 0
      %2040 = vmatmul.mubr.bf16.gmra.mrb[0].mxu0 %v1320
      %v2041 = vpop.f32.mrb[0].mxu0
      %v2042 = vadd.f32 0.0, %v2041
      %v2043 = vpop.f32.mrb[0].mxu0
      %v2044 = vpop.f32.mrb[0].mxu0
      %v2045 = vadd.f32 0.0, %v2044
      %v2046 = vpop.f32.mrb[0].mxu0
      %2047 = vmatprep.mubr.bf16.mxu0 0
      %2048 = vmatmul.mubr.bf16.gmra.mrb[0].mxu0 %v1323
      %v2049 = vpop.f32.mrb[0].mxu0
      %v2050 = vadd.f32 0.0, %v2049
      %v2051 = vpop.f32.mrb[0].mxu0
      %v2052 = vpop.f32.mrb[0].mxu0
      %v2053 = vadd.f32 0.0, %v2052
      %v2054 = vpop.f32.mrb[0].mxu0
      %2055 = vmatprep.mubr.bf16.mxu0 0
      %2056 = vmatmul.mubr.bf16.gmra.mrb[0].mxu0 %v1326
      %v2057 = vpop.f32.mrb[0].mxu0
      %v2058 = vadd.f32 0.0, %v2057
      %v2059 = vpop.f32.mrb[0].mxu0
      %v2060 = vpop.f32.mrb[0].mxu0
      %v2061 = vadd.f32 0.0, %v2060
      %v2062 = vpop.f32.mrb[0].mxu0
      %2063 = vmatprep.mubr.bf16.mxu0 0
      %2064 = vmatmul.mubr.bf16.gmra.mrb[0].mxu0 %v1329
      %v2065 = vpop.f32.mrb[0].mxu0
      %v2066 = vadd.f32 0.0, %v2065
      %v2067 = vpop.f32.mrb[0].mxu0
      %v2068 = vpop.f32.mrb[0].mxu0
      %v2069 = vadd.f32 0.0, %v2068
      %v2070 = vpop.f32.mrb[0].mxu0
      %2071 = vmatprep.mubr.bf16.mxu0 0
      %2072 = vmatmul.mubr.bf16.gmra.mrb[0].mxu0 %v1332
      %v2073 = vpop.f32.mrb[0].mxu0
      %v2074 = vadd.f32 0.0, %v2073
      %v2075 = vpop.f32.mrb[0].mxu0
      %v2076 = vpop.f32.mrb[0].mxu0
      %v2077 = vadd.f32 0.0, %v2076
      %v2078 = vpop.f32.mrb[0].mxu0
      %2079 = vmatprep.mubr.bf16.mxu0 0
      %2080 = vmatmul.mubr.bf16.gmra.mrb[0].mxu0 %v1335
      %v2081 = vpop.f32.mrb[0].mxu0
      %v2082 = vadd.f32 0.0, %v2081
      %v2083 = vpop.f32.mrb[0].mxu0
      %v2084 = vpop.f32.mrb[0].mxu0
      %v2085 = vadd.f32 0.0, %v2084
      %v2086 = vpop.f32.mrb[0].mxu0
      %2087 = vmatprep.mubr.bf16.mxu0 0
      %2088 = vmatmul.mubr.bf16.gmra.mrb[0].mxu0 %v1338
      %v2089 = vpop.f32.mrb[0].mxu0
      %v2090 = vadd.f32 0.0, %v2089
      %v2091 = vpop.f32.mrb[0].mxu0
      %v2092 = vpop.f32.mrb[0].mxu0
      %v2093 = vadd.f32 0.0, %v2092
      %v2094 = vpop.f32.mrb[0].mxu0
      %2095 = vmatprep.mubr.bf16.mxu0 0
      %2096 = vmatmul.mubr.bf16.gmra.mrb[0].mxu0 %v1341
      %v2097 = vpop.f32.mrb[0].mxu0
      %v2098 = vadd.f32 0.0, %v2097
      %v2099 = vpop.f32.mrb[0].mxu0
      %v2100 = vpop.f32.mrb[0].mxu0
      %v2101 = vadd.f32 0.0, %v2100
      %v2102 = vpop.f32.mrb[0].mxu0
      %2103 = vmatprep.mubr.bf16.mxu0 0
      %2104 = vmatmul.mubr.bf16.gmra.mrb[0].mxu0 %v1344
      %v2105 = vpop.f32.mrb[0].mxu0
      %v2106 = vadd.f32 0.0, %v2105
      %v2107 = vpop.f32.mrb[0].mxu0
      %v2108 = vpop.f32.mrb[0].mxu0
      %v2109 = vadd.f32 0.0, %v2108
      %v2110 = vpop.f32.mrb[0].mxu0
      %2111 = vmatprep.mubr.bf16.mxu0 0
      %2112 = vmatmul.mubr.bf16.gmra.mrb[0].mxu0 %v1347
      %v2113 = vpop.f32.mrb[0].mxu0
      %v2114 = vadd.f32 0.0, %v2113
      %v2115 = vpop.f32.mrb[0].mxu0
      %v2116 = vpop.f32.mrb[0].mxu0
      %v2117 = vadd.f32 0.0, %v2116
      %v2118 = vpop.f32.mrb[0].mxu0
      %2119 = vmatprep.mubr.bf16.mxu0 0
      %2120 = vmatmul.mubr.bf16.gmra.mrb[0].mxu0 %v1350
      %v2121 = vpop.f32.mrb[0].mxu0
      %v2122 = vadd.f32 0.0, %v2121
      %v2123 = vpop.f32.mrb[0].mxu0
      %v2124 = vpop.f32.mrb[0].mxu0
      %v2125 = vadd.f32 0.0, %v2124
      %v2126 = vpop.f32.mrb[0].mxu0
      %2127 = vmatprep.mubr.bf16.mxu0 0
      %2128 = vmatmul.mubr.bf16.gmra.mrb[0].mxu0 %v1353
      %v2129 = vpop.f32.mrb[0].mxu0
      %v2130 = vadd.f32 0.0, %v2129
      %v2131 = vpop.f32.mrb[0].mxu0
      %v2132 = vpop.f32.mrb[0].mxu0
      %v2133 = vadd.f32 0.0, %v2132
      %v2134 = vpop.f32.mrb[0].mxu0
      %2135 = vmatprep.mubr.bf16.mxu0 0
      %2136 = vmatmul.mubr.bf16.gmra.mrb[0].mxu0 %v1356
      %v2137 = vpop.f32.mrb[0].mxu0
      %v2138 = vadd.f32 0.0, %v2137
      %v2139 = vpop.f32.mrb[0].mxu0
      %v2140 = vpop.f32.mrb[0].mxu0
      %v2141 = vadd.f32 0.0, %v2140
      %v2142 = vpop.f32.mrb[0].mxu0
      %2143 = vmatprep.mubr.bf16.mxu0 0
      %2144 = vmatmul.mubr.bf16.gmra.mrb[0].mxu0 %v1359
      %v2145 = vpop.f32.mrb[0].mxu0
      %v2146 = vadd.f32 0.0, %v2145
      %v2147 = vpop.f32.mrb[0].mxu0
      %v2148 = vpop.f32.mrb[0].mxu0
      %v2149 = vadd.f32 0.0, %v2148
      %v2150 = vpop.f32.mrb[0].mxu0
      %2151 = vmatprep.mubr.bf16.mxu0 0
      %2152 = vmatmul.mubr.bf16.gmra.mrb[0].mxu0 %v1362
      %v2153 = vpop.f32.mrb[0].mxu0
      %v2154 = vadd.f32 0.0, %v2153
      %v2155 = vpop.f32.mrb[0].mxu0
      %v2156 = vpop.f32.mrb[0].mxu0
      %v2157 = vadd.f32 0.0, %v2156
      %v2158 = vpop.f32.mrb[0].mxu0
      %2159 = vmatprep.mubr.bf16.mxu0 0
      %2160 = vmatmul.mubr.bf16.gmra.mrb[0].mxu0 %v1365
      %v2161 = vpop.f32.mrb[0].mxu0
      %v2162 = vadd.f32 0.0, %v2161
      %v2163 = vpop.f32.mrb[0].mxu0
      %v2164 = vpop.f32.mrb[0].mxu0
      %v2165 = vadd.f32 0.0, %v2164
      %v2166 = vpop.f32.mrb[0].mxu0
      %2167 = vmatprep.mubr.bf16.mxu0 0
      %2168 = vmatmul.mubr.bf16.gmra.mrb[0].mxu0 %v1368
      %v2169 = vpop.f32.mrb[0].mxu0
      %v2170 = vadd.f32 0.0, %v2169
      %v2171 = vpop.f32.mrb[0].mxu0
      %v2172 = vpop.f32.mrb[0].mxu0
      %v2173 = vadd.f32 0.0, %v2172
      %v2174 = vpop.f32.mrb[0].mxu0
      %2175 = vmatprep.mubr.bf16.mxu0 0
      %2176 = vmatmul.mubr.bf16.gmra.mrb[0].mxu0 %v1371
      %v2177 = vpop.f32.mrb[0].mxu0
      %v2178 = vadd.f32 0.0, %v2177
      %v2179 = vpop.f32.mrb[0].mxu0
      %v2180 = vpop.f32.mrb[0].mxu0
      %v2181 = vadd.f32 0.0, %v2180
      %v2182 = vpop.f32.mrb[0].mxu0
      %2183 = vmatprep.mubr.bf16.mxu0 0
      %2184 = vmatmul.mubr.bf16.gmra.mrb[0].mxu0 %v1374
      %v2185 = vpop.f32.mrb[0].mxu0
      %v2186 = vadd.f32 0.0, %v2185
      %v2187 = vpop.f32.mrb[0].mxu0
      %v2188 = vpop.f32.mrb[0].mxu0
      %v2189 = vadd.f32 0.0, %v2188
      %v2190 = vpop.f32.mrb[0].mxu0
      %2191 = vmatprep.mubr.bf16.mxu0 0
      %2192 = vmatmul.mubr.bf16.gmra.mrb[0].mxu0 %v1377
      %v2193 = vpop.f32.mrb[0].mxu0
      %v2194 = vadd.f32 0.0, %v2193
      %v2195 = vpop.f32.mrb[0].mxu0
      %v2196 = vpop.f32.mrb[0].mxu0
      %v2197 = vadd.f32 0.0, %v2196
      %v2198 = vpop.f32.mrb[0].mxu0
      %2199 = vmatprep.mubr.bf16.mxu0 0
      %2200 = vmatmul.mubr.bf16.gmra.mrb[0].mxu0 %v1380
      %v2201 = vpop.f32.mrb[0].mxu0
      %v2202 = vadd.f32 0.0, %v2201
      %v2203 = vpop.f32.mrb[0].mxu0
      %v2204 = vpop.f32.mrb[0].mxu0
      %v2205 = vadd.f32 0.0, %v2204
      %v2206 = vpop.f32.mrb[0].mxu0
      %2207 = vmatprep.mubr.bf16.mxu0 0
      %2208 = vmatmul.mubr.bf16.gmra.mrb[0].mxu0 %v1383
      %v2209 = vpop.f32.mrb[0].mxu0
      %v2210 = vadd.f32 0.0, %v2209
      %v2211 = vpop.f32.mrb[0].mxu0
      %v2212 = vpop.f32.mrb[0].mxu0
      %v2213 = vadd.f32 0.0, %v2212
      %v2214 = vpop.f32.mrb[0].mxu0
      %2215 = vmatprep.mubr.bf16.mxu0 0
      %2216 = vmatmul.mubr.bf16.gmra.mrb[0].mxu0 %v1386
      %v2217 = vpop.f32.mrb[0].mxu0
      %v2218 = vadd.f32 0.0, %v2217
      %v2219 = vpop.f32.mrb[0].mxu0
      %v2220 = vpop.f32.mrb[0].mxu0
      %v2221 = vadd.f32 0.0, %v2220
      %v2222 = vpop.f32.mrb[0].mxu0
      %2223 = vmatprep.mubr.bf16.mxu0 0
      %2224 = vmatmul.mubr.bf16.gmra.mrb[0].mxu0 %v1389
      %v2225 = vpop.f32.mrb[0].mxu0
      %v2226 = vadd.f32 0.0, %v2225
      %v2227 = vpop.f32.mrb[0].mxu0
      %v2228 = vpop.f32.mrb[0].mxu0
      %v2229 = vadd.f32 0.0, %v2228
      %v2230 = vpop.f32.mrb[0].mxu0
      %2231 = vmatprep.mubr.bf16.mxu0 0
      %2232 = vmatmul.mubr.bf16.gmra.mrb[0].mxu0 %v1392
      %v2233 = vpop.f32.mrb[0].mxu0
      %v2234 = vadd.f32 0.0, %v2233
      %v2235 = vpop.f32.mrb[0].mxu0
      %v2236 = vpop.f32.mrb[0].mxu0
      %v2237 = vadd.f32 0.0, %v2236
      %v2238 = vpop.f32.mrb[0].mxu0
      %2239 = vmatprep.mubr.bf16.mxu0 0
      %2240 = vmatmul.mubr.bf16.gmra.mrb[0].mxu0 %v1395
      %v2241 = vpop.f32.mrb[0].mxu0
      %v2242 = vadd.f32 0.0, %v2241
      %v2243 = vpop.f32.mrb[0].mxu0
      %v2244 = vpop.f32.mrb[0].mxu0
      %v2245 = vadd.f32 0.0, %v2244
      %v2246 = vpop.f32.mrb[0].mxu0
      %2247 = vmatprep.mubr.bf16.mxu0 0
      %2248 = vmatmul.mubr.bf16.gmra.mrb[0].mxu0 %v1398
      %v2249 = vpop.f32.mrb[0].mxu0
      %v2250 = vadd.f32 0.0, %v2249
      %v2251 = vpop.f32.mrb[0].mxu0
      %v2252 = vpop.f32.mrb[0].mxu0
      %v2253 = vadd.f32 0.0, %v2252
      %v2254 = vpop.f32.mrb[0].mxu0
      %2255 = vmatprep.mubr.bf16.mxu0 0
      %2256 = vmatmul.mubr.bf16.gmra.mrb[0].mxu0 %v1401
      %v2257 = vpop.f32.mrb[0].mxu0
      %v2258 = vadd.f32 0.0, %v2257
      %v2259 = vpop.f32.mrb[0].mxu0
      %v2260 = vpop.f32.mrb[0].mxu0
      %v2261 = vadd.f32 0.0, %v2260
      %v2262 = vpop.f32.mrb[0].mxu0
      %2263 = vmatprep.mubr.bf16.mxu0 0
      %2264 = vmatmul.mubr.bf16.gmra.mrb[0].mxu0 %v1404
      %v2265 = vpop.f32.mrb[0].mxu0
      %v2266 = vadd.f32 0.0, %v2265
      %v2267 = vpop.f32.mrb[0].mxu0
      %v2268 = vpop.f32.mrb[0].mxu0
      %v2269 = vadd.f32 0.0, %v2268
      %v2270 = vpop.f32.mrb[0].mxu0
      %2271 = vmatprep.mubr.bf16.mxu0 0
      %2272 = vmatmul.mubr.bf16.gmra.mrb[0].mxu0 %v1407
      %v2273 = vpop.f32.mrb[0].mxu0
      %v2274 = vadd.f32 0.0, %v2273
      %v2275 = vpop.f32.mrb[0].mxu0
      %v2276 = vpop.f32.mrb[0].mxu0
      %v2277 = vadd.f32 0.0, %v2276
      %v2278 = vpop.f32.mrb[0].mxu0
      %2279 = vmatprep.mubr.bf16.mxu0 0
      %2280 = vmatmul.mubr.bf16.gmra.mrb[0].mxu0 %v1410
      %v2281 = vpop.f32.mrb[0].mxu0
      %v2282 = vadd.f32 0.0, %v2281
      %v2283 = vpop.f32.mrb[0].mxu0
      %v2284 = vpop.f32.mrb[0].mxu0
      %v2285 = vadd.f32 0.0, %v2284
      %v2286 = vpop.f32.mrb[0].mxu0
      %2287 = vmatprep.mubr.bf16.mxu0 0
      %2288 = vmatmul.mubr.bf16.gmra.mrb[0].mxu0 %v1413
      %v2289 = vpop.f32.mrb[0].mxu0
      %v2290 = vadd.f32 0.0, %v2289
      %v2291 = vpop.f32.mrb[0].mxu0
      %v2292 = vpop.f32.mrb[0].mxu0
      %v2293 = vadd.f32 0.0, %v2292
      %v2294 = vpop.f32.mrb[0].mxu0
      %2295 = vmatprep.mubr.bf16.mxu0 0
      %2296 = vmatmul.mubr.bf16.gmra.mrb[0].mxu0 %v1416
      %v2297 = vpop.f32.mrb[0].mxu0
      %v2298 = vadd.f32 0.0, %v2297
      %v2299 = vpop.f32.mrb[0].mxu0
      %v2300 = vpop.f32.mrb[0].mxu0
      %v2301 = vadd.f32 0.0, %v2300
      %v2302 = vpop.f32.mrb[0].mxu0
      %2303 = vmatprep.mubr.bf16.mxu0 0
      %2304 = vmatmul.mubr.bf16.gmra.mrb[0].mxu0 %v1419
      %v2305 = vpop.f32.mrb[0].mxu0
      %v2306 = vadd.f32 0.0, %v2305
      %v2307 = vpop.f32.mrb[0].mxu0
      %v2308 = vpop.f32.mrb[0].mxu0
      %v2309 = vadd.f32 0.0, %v2308
      %v2310 = vpop.f32.mrb[0].mxu0
      %2311 = vmatprep.mubr.bf16.mxu0 0
      %2312 = vmatmul.mubr.bf16.gmra.mrb[0].mxu0 %v1422
      %v2313 = vpop.f32.mrb[0].mxu0
      %v2314 = vadd.f32 0.0, %v2313
      %v2315 = vpop.f32.mrb[0].mxu0
      %v2316 = vpop.f32.mrb[0].mxu0
      %v2317 = vadd.f32 0.0, %v2316
      %v2318 = vpop.f32.mrb[0].mxu0
      %2319 = vmatprep.mubr.bf16.mxu0 0
      %2320 = vmatmul.mubr.bf16.gmra.mrb[0].mxu0 %v1425
      %v2321 = vpop.f32.mrb[0].mxu0
      %v2322 = vadd.f32 0.0, %v2321
      %v2323 = vpop.f32.mrb[0].mxu0
      %v2324 = vpop.f32.mrb[0].mxu0
      %v2325 = vadd.f32 0.0, %v2324
      %v2326 = vpop.f32.mrb[0].mxu0
      %2327 = vmatprep.mubr.bf16.mxu0 0
      %2328 = vmatmul.mubr.bf16.gmra.mrb[0].mxu0 %v1428
      %v2329 = vpop.f32.mrb[0].mxu0
      %v2330 = vadd.f32 0.0, %v2329
      %v2331 = vpop.f32.mrb[0].mxu0
      %v2332 = vpop.f32.mrb[0].mxu0
      %v2333 = vadd.f32 0.0, %v2332
      %v2334 = vpop.f32.mrb[0].mxu0
      %2335 = vmatprep.mubr.bf16.mxu0 0
      %2336 = vmatmul.mubr.bf16.gmra.mrb[0].mxu0 %v1431
      %v2337 = vpop.f32.mrb[0].mxu0
      %v2338 = vadd.f32 0.0, %v2337
      %v2339 = vpop.f32.mrb[0].mxu0
      %v2340 = vpop.f32.mrb[0].mxu0
      %v2341 = vadd.f32 0.0, %v2340
      %v2342 = vpop.f32.mrb[0].mxu0
      %2343 = vmatprep.mubr.bf16.mxu0 0
      %2344 = vmatmul.mubr.bf16.gmra.mrb[0].mxu0 %v1434
      %v2345 = vpop.f32.mrb[0].mxu0
      %v2346 = vadd.f32 0.0, %v2345
      %v2347 = vpop.f32.mrb[0].mxu0
      %v2348 = vpop.f32.mrb[0].mxu0
      %v2349 = vadd.f32 0.0, %v2348
      %v2350 = vpop.f32.mrb[0].mxu0
      %2351 = vmatprep.mubr.bf16.mxu0 0
      %2352 = vmatmul.mubr.bf16.gmra.mrb[0].mxu0 %v1437
      %v2353 = vpop.f32.mrb[0].mxu0
      %v2354 = vadd.f32 0.0, %v2353
      %v2355 = vpop.f32.mrb[0].mxu0
      %v2356 = vpop.f32.mrb[0].mxu0
      %v2357 = vadd.f32 0.0, %v2356
      %v2358 = vpop.f32.mrb[0].mxu0
      %2359 = vmatprep.mubr.bf16.mxu0 0
      %2360 = vmatmul.mubr.bf16.gmra.mrb[0].mxu0 %v1440
      %v2361 = vpop.f32.mrb[0].mxu0
      %v2362 = vadd.f32 0.0, %v2361
      %v2363 = vpop.f32.mrb[0].mxu0
      %v2364 = vpop.f32.mrb[0].mxu0
      %v2365 = vadd.f32 0.0, %v2364
      %v2366 = vpop.f32.mrb[0].mxu0
      %2367 = vmatprep.mubr.bf16.mxu0 0
      %2368 = vmatmul.mubr.bf16.gmra.mrb[0].mxu0 %v1443
      %v2369 = vpop.f32.mrb[0].mxu0
      %v2370 = vadd.f32 0.0, %v2369
      %v2371 = vpop.f32.mrb[0].mxu0
      %v2372 = vpop.f32.mrb[0].mxu0
      %v2373 = vadd.f32 0.0, %v2372
      %v2374 = vpop.f32.mrb[0].mxu0
      %2375 = vmatprep.mubr.bf16.mxu0 0
      %2376 = vmatmul.mubr.bf16.gmra.mrb[0].mxu0 %v1446
      %v2377 = vpop.f32.mrb[0].mxu0
      %v2378 = vadd.f32 0.0, %v2377
      %v2379 = vpop.f32.mrb[0].mxu0
      %v2380 = vpop.f32.mrb[0].mxu0
      %v2381 = vadd.f32 0.0, %v2380
      %v2382 = vpop.f32.mrb[0].mxu0
      %2383 = vmatprep.mubr.bf16.mxu0 0
      %2384 = vmatmul.mubr.bf16.gmra.mrb[0].mxu0 %v1449
      %v2385 = vpop.f32.mrb[0].mxu0
      %v2386 = vadd.f32 0.0, %v2385
      %v2387 = vpop.f32.mrb[0].mxu0
      %v2388 = vpop.f32.mrb[0].mxu0
      %v2389 = vadd.f32 0.0, %v2388
      %v2390 = vpop.f32.mrb[0].mxu0
      %2391 = vmatprep.mubr.bf16.mxu0 0
      %2392 = vmatmul.mubr.bf16.gmra.mrb[0].mxu0 %v1452
      %v2393 = vpop.f32.mrb[0].mxu0
      %v2394 = vadd.f32 0.0, %v2393
      %v2395 = vpop.f32.mrb[0].mxu0
      %v2396 = vpop.f32.mrb[0].mxu0
      %v2397 = vadd.f32 0.0, %v2396
      %v2398 = vpop.f32.mrb[0].mxu0
      %2399 = vmatprep.mubr.bf16.mxu0 0
      %2400 = vmatmul.mubr.bf16.gmra.mrb[0].mxu0 %v1455
      %v2401 = vpop.f32.mrb[0].mxu0
      %v2402 = vadd.f32 0.0, %v2401
      %v2403 = vpop.f32.mrb[0].mxu0
      %v2404 = vpop.f32.mrb[0].mxu0
      %v2405 = vadd.f32 0.0, %v2404
      %v2406 = vpop.f32.mrb[0].mxu0
      %2407 = vmatprep.mubr.bf16.mxu0 0
      %2408 = vmatmul.mubr.bf16.gmra.mrb[0].mxu0 %v1458
      %v2409 = vpop.f32.mrb[0].mxu0
      %v2410 = vadd.f32 0.0, %v2409
      %v2411 = vpop.f32.mrb[0].mxu0
      %v2412 = vpop.f32.mrb[0].mxu0
      %v2413 = vadd.f32 0.0, %v2412
      %v2414 = vpop.f32.mrb[0].mxu0
      %2415 = vmatprep.mubr.bf16.mxu0 0
      %2416 = vmatmul.mubr.bf16.gmra.mrb[0].mxu0 %v1461
      %v2417 = vpop.f32.mrb[0].mxu0
      %v2418 = vadd.f32 0.0, %v2417
      %v2419 = vpop.f32.mrb[0].mxu0
      %v2420 = vpop.f32.mrb[0].mxu0
      %v2421 = vadd.f32 0.0, %v2420
      %v2422 = vpop.f32.mrb[0].mxu0
      %2423 = vmatprep.mubr.bf16.mxu0 0
      %2424 = vmatmul.mubr.bf16.gmra.mrb[0].mxu0 %v1464
      %v2425 = vpop.f32.mrb[0].mxu0
      %v2426 = vadd.f32 0.0, %v2425
      %v2427 = vpop.f32.mrb[0].mxu0
      %v2428 = vpop.f32.mrb[0].mxu0
      %v2429 = vadd.f32 0.0, %v2428
      %v2430 = vpop.f32.mrb[0].mxu0
      %2431 = vmatprep.mubr.bf16.mxu0 0
      %2432 = vmatmul.mubr.bf16.gmra.mrb[0].mxu0 %v1467
      %v2433 = vpop.f32.mrb[0].mxu0
      %v2434 = vadd.f32 0.0, %v2433
      %v2435 = vpop.f32.mrb[0].mxu0
      %v2436 = vpop.f32.mrb[0].mxu0
      %v2437 = vadd.f32 0.0, %v2436
      %v2438 = vpop.f32.mrb[0].mxu0
      %2439 = vmatprep.mubr.bf16.mxu0 0
      %2440 = vmatmul.mubr.bf16.gmra.mrb[0].mxu0 %v1470
      %v2441 = vpop.f32.mrb[0].mxu0
      %v2442 = vadd.f32 0.0, %v2441
      %v2443 = vpop.f32.mrb[0].mxu0
      %v2444 = vpop.f32.mrb[0].mxu0
      %v2445 = vadd.f32 0.0, %v2444
      %v2446 = vpop.f32.mrb[0].mxu0
      %2447 = vmatprep.mubr.bf16.mxu0 0
      %2448 = vmatmul.mubr.bf16.gmra.mrb[0].mxu0 %v1473
      %v2449 = vpop.f32.mrb[0].mxu0
      %v2450 = vadd.f32 0.0, %v2449
      %v2451 = vpop.f32.mrb[0].mxu0
      %v2452 = vpop.f32.mrb[0].mxu0
      %v2453 = vadd.f32 0.0, %v2452
      %v2454 = vpop.f32.mrb[0].mxu0
      %2455 = vmatprep.mubr.bf16.mxu0 0
      %2456 = vmatmul.mubr.bf16.gmra.mrb[0].mxu0 %v1476
      %v2457 = vpop.f32.mrb[0].mxu0
      %v2458 = vadd.f32 0.0, %v2457
      %v2459 = vpop.f32.mrb[0].mxu0
      %v2460 = vpop.f32.mrb[0].mxu0
      %v2461 = vadd.f32 0.0, %v2460
      %v2462 = vpop.f32.mrb[0].mxu0
      %2463 = vmatprep.mubr.bf16.mxu0 0
      %2464 = vmatmul.mubr.bf16.gmra.mrb[0].mxu0 %v1479
      %v2465 = vpop.f32.mrb[0].mxu0
      %v2466 = vadd.f32 0.0, %v2465
      %v2467 = vpop.f32.mrb[0].mxu0
      %v2468 = vpop.f32.mrb[0].mxu0
      %v2469 = vadd.f32 0.0, %v2468
      %v2470 = vpop.f32.mrb[0].mxu0
      %2471 = vmatprep.mubr.bf16.mxu0 0
      %2472 = vmatmul.mubr.bf16.gmra.mrb[0].mxu0 %v1482
      %v2473 = vpop.f32.mrb[0].mxu0
      %v2474 = vadd.f32 0.0, %v2473
      %v2475 = vpop.f32.mrb[0].mxu0
      %v2476 = vpop.f32.mrb[0].mxu0
      %v2477 = vadd.f32 0.0, %v2476
      %v2478 = vpop.f32.mrb[0].mxu0
      %2479 = vmatprep.mubr.bf16.mxu0 0
      %2480 = vmatmul.mubr.bf16.gmra.mrb[0].mxu0 %v1485
      %v2481 = vpop.f32.mrb[0].mxu0
      %v2482 = vadd.f32 0.0, %v2481
      %v2483 = vpop.f32.mrb[0].mxu0
      %v2484 = vpop.f32.mrb[0].mxu0
      %v2485 = vadd.f32 0.0, %v2484
      %v2486 = vpop.f32.mrb[0].mxu0
      %2487 = vmatprep.mubr.bf16.mxu0 0
      %2488 = vmatmul.mubr.bf16.gmra.mrb[0].mxu0 %v1488
      %v2489 = vpop.f32.mrb[0].mxu0
      %v2490 = vadd.f32 0.0, %v2489
      %v2491 = vpop.f32.mrb[0].mxu0
      %v2492 = vpop.f32.mrb[0].mxu0
      %v2493 = vadd.f32 0.0, %v2492
      %v2494 = vpop.f32.mrb[0].mxu0
      %2495 = vmatprep.mubr.bf16.mxu0 0
      %2496 = vmatmul.mubr.bf16.gmra.mrb[0].mxu0 %v1491
      %v2497 = vpop.f32.mrb[0].mxu0
      %v2498 = vadd.f32 0.0, %v2497
      %v2499 = vpop.f32.mrb[0].mxu0
      %v2500 = vpop.f32.mrb[0].mxu0
      %v2501 = vadd.f32 0.0, %v2500
      %v2502 = vpop.f32.mrb[0].mxu0
      %2503 = vmatprep.mubr.bf16.mxu0 0
      %2504 = vmatmul.mubr.bf16.gmra.mrb[0].mxu0 %v1494
      %v2505 = vpop.f32.mrb[0].mxu0
      %v2506 = vadd.f32 0.0, %v2505
      %v2507 = vpop.f32.mrb[0].mxu0
      %v2508 = vpop.f32.mrb[0].mxu0
      %v2509 = vadd.f32 0.0, %v2508
      %v2510 = vpop.f32.mrb[0].mxu0
      %2511 = vmatprep.mubr.bf16.mxu0 0
      %2512 = vmatmul.mubr.bf16.gmra.mrb[0].mxu0 %v1497
      %v2513 = vpop.f32.mrb[0].mxu0
      %v2514 = vadd.f32 0.0, %v2513
      %v2515 = vpop.f32.mrb[0].mxu0
      %v2516 = vpop.f32.mrb[0].mxu0
      %v2517 = vadd.f32 0.0, %v2516
      %v2518 = vpop.f32.mrb[0].mxu0
      %2519 = vmatprep.mubr.bf16.mxu0 0
      %2520 = vmatmul.mubr.bf16.gmra.mrb[0].mxu0 %v1500
      %v2521 = vpop.f32.mrb[0].mxu0
      %v2522 = vadd.f32 0.0, %v2521
      %v2523 = vpop.f32.mrb[0].mxu0
      %v2524 = vpop.f32.mrb[0].mxu0
      %v2525 = vadd.f32 0.0, %v2524
      %v2526 = vpop.f32.mrb[0].mxu0
      %2527 = vmatprep.mubr.bf16.mxu0 0
      %2528 = vmatmul.mubr.bf16.gmra.mrb[0].mxu0 %v1503
      %v2529 = vpop.f32.mrb[0].mxu0
      %v2530 = vadd.f32 0.0, %v2529
      %v2531 = vpop.f32.mrb[0].mxu0
      %v2532 = vpop.f32.mrb[0].mxu0
      %v2533 = vadd.f32 0.0, %v2532
      %v2534 = vpop.f32.mrb[0].mxu0
      %2535 = vmatprep.mubr.bf16.mxu0 0
      %2536 = vmatmul.mubr.bf16.gmra.mrb[0].mxu0 %v1506
      %v2537 = vpop.f32.mrb[0].mxu0
      %v2538 = vadd.f32 0.0, %v2537
      %v2539 = vpop.f32.mrb[0].mxu0
      %v2540 = vpop.f32.mrb[0].mxu0
      %v2541 = vadd.f32 0.0, %v2540
      %v2542 = vpop.f32.mrb[0].mxu0
      %2543 = vmatprep.mubr.bf16.mxu0 0
      %2544 = vmatmul.mubr.bf16.gmra.mrb[0].mxu0 %v1509
      %v2545 = vpop.f32.mrb[0].mxu0
      %v2546 = vadd.f32 0.0, %v2545
      %v2547 = vpop.f32.mrb[0].mxu0
      %v2548 = vpop.f32.mrb[0].mxu0
      %v2549 = vadd.f32 0.0, %v2548
      %v2550 = vpop.f32.mrb[0].mxu0
      %2551 = vmatprep.mubr.bf16.mxu0 0
      %2552 = vmatmul.mubr.bf16.gmra.mrb[0].mxu0 %v1512
      %v2553 = vpop.f32.mrb[0].mxu0
      %v2554 = vadd.f32 0.0, %v2553
      %v2555 = vpop.f32.mrb[0].mxu0
      %v2556 = vpop.f32.mrb[0].mxu0
      %v2557 = vadd.f32 0.0, %v2556
      %v2558 = vpop.f32.mrb[0].mxu0
      %2559 = vmatprep.mubr.bf16.mxu0 0
      %2560 = vmatmul.mubr.bf16.gmra.mrb[0].mxu0 %v1515
      %v2561 = vpop.f32.mrb[0].mxu0
      %v2562 = vadd.f32 0.0, %v2561
      %v2563 = vpop.f32.mrb[0].mxu0
      %v2564 = vpop.f32.mrb[0].mxu0
      %v2565 = vadd.f32 0.0, %v2564
      %v2566 = vpop.f32.mrb[0].mxu0
      %2567 = vmatprep.mubr.bf16.mxu0 0
      %2568 = vmatmul.mubr.bf16.gmra.mrb[0].mxu0 %v1518
      %v2569 = vpop.f32.mrb[0].mxu0
      %v2570 = vadd.f32 0.0, %v2569
      %v2571 = vpop.f32.mrb[0].mxu0
      %v2572 = vpop.f32.mrb[0].mxu0
      %v2573 = vadd.f32 0.0, %v2572
      %v2574 = vpop.f32.mrb[0].mxu0
      %2575 = vmatprep.mubr.bf16.mxu0 0
      %2576 = vmatmul.mubr.bf16.gmra.mrb[0].mxu0 %v1521
      %v2577 = vpop.f32.mrb[0].mxu0
      %v2578 = vadd.f32 0.0, %v2577
      %v2579 = vpop.f32.mrb[0].mxu0
      %v2580 = vpop.f32.mrb[0].mxu0
      %v2581 = vadd.f32 0.0, %v2580
      %v2582 = vpop.f32.mrb[0].mxu0
      %2583 = vdwg.mxu0
      %v2584 = vmax.f32 %v1562, 0.0
      %v2585 = vmax.f32 %v1565, 0.0
      %v2586 = vmax.f32 %v1570, 0.0
      %v2587 = vmax.f32 %v1573, 0.0
      %v2588 = vmax.f32 %v1578, 0.0
      %v2589 = vmax.f32 %v1581, 0.0
      %v2590 = vmax.f32 %v1586, 0.0
      %v2591 = vmax.f32 %v1589, 0.0
      %v2592 = vmax.f32 %v1594, 0.0
      %v2593 = vmax.f32 %v1597, 0.0
      %v2594 = vmax.f32 %v1602, 0.0
      %v2595 = vmax.f32 %v1605, 0.0
      %v2596 = vmax.f32 %v1610, 0.0
      %v2597 = vmax.f32 %v1613, 0.0
      %v2598 = vmax.f32 %v1618, 0.0
      %v2599 = vmax.f32 %v1621, 0.0
      %v2600 = vmax.f32 %v1626, 0.0
      %v2601 = vmax.f32 %v1629, 0.0
      %v2602 = vmax.f32 %v1634, 0.0
      %v2603 = vmax.f32 %v1637, 0.0
      %v2604 = vmax.f32 %v1642, 0.0
      %v2605 = vmax.f32 %v1645, 0.0
      %v2606 = vmax.f32 %v1650, 0.0
      %v2607 = vmax.f32 %v1653, 0.0
      %v2608 = vmax.f32 %v1658, 0.0
      %v2609 = vmax.f32 %v1661, 0.0
      %v2610 = vmax.f32 %v1666, 0.0
      %v2611 = vmax.f32 %v1669, 0.0
      %v2612 = vmax.f32 %v1674, 0.0
      %v2613 = vmax.f32 %v1677, 0.0
      %v2614 = vmax.f32 %v1682, 0.0
      %v2615 = vmax.f32 %v1685, 0.0
      %v2616 = vmax.f32 %v1690, 0.0
      %v2617 = vmax.f32 %v1693, 0.0
      %v2618 = vmax.f32 %v1698, 0.0
      %v2619 = vmax.f32 %v1701, 0.0
      %v2620 = vmax.f32 %v1706, 0.0
      %v2621 = vmax.f32 %v1709, 0.0
      %v2622 = vmax.f32 %v1714, 0.0
      %v2623 = vmax.f32 %v1717, 0.0
      %v2624 = vmax.f32 %v1722, 0.0
      %v2625 = vmax.f32 %v1725, 0.0
      %v2626 = vmax.f32 %v1730, 0.0
      %v2627 = vmax.f32 %v1733, 0.0
      %v2628 = vmax.f32 %v1738, 0.0
      %v2629 = vmax.f32 %v1741, 0.0
      %v2630 = vmax.f32 %v1746, 0.0
      %v2631 = vmax.f32 %v1749, 0.0
      %v2632 = vmax.f32 %v1754, 0.0
      %v2633 = vmax.f32 %v1757, 0.0
      %v2634 = vmax.f32 %v1762, 0.0
      %v2635 = vmax.f32 %v1765, 0.0
      %v2636 = vmax.f32 %v1770, 0.0
      %v2637 = vmax.f32 %v1773, 0.0
      %v2638 = vmax.f32 %v1778, 0.0
      %v2639 = vmax.f32 %v1781, 0.0
      %v2640 = vmax.f32 %v1786, 0.0
      %v2641 = vmax.f32 %v1789, 0.0
      %v2642 = vmax.f32 %v1794, 0.0
      %v2643 = vmax.f32 %v1797, 0.0
      %v2644 = vmax.f32 %v1802, 0.0
      %v2645 = vmax.f32 %v1805, 0.0
      %v2646 = vmax.f32 %v1810, 0.0
      %v2647 = vmax.f32 %v1813, 0.0
      %v2648 = vmax.f32 %v1818, 0.0
      %v2649 = vmax.f32 %v1821, 0.0
      %v2650 = vmax.f32 %v1826, 0.0
      %v2651 = vmax.f32 %v1829, 0.0
      %v2652 = vmax.f32 %v1834, 0.0
      %v2653 = vmax.f32 %v1837, 0.0
      %v2654 = vmax.f32 %v1842, 0.0
      %v2655 = vmax.f32 %v1845, 0.0
      %v2656 = vmax.f32 %v1850, 0.0
      %v2657 = vmax.f32 %v1853, 0.0
      %v2658 = vmax.f32 %v1858, 0.0
      %v2659 = vmax.f32 %v1861, 0.0
      %v2660 = vmax.f32 %v1866, 0.0
      %v2661 = vmax.f32 %v1869, 0.0
      %v2662 = vmax.f32 %v1874, 0.0
      %v2663 = vmax.f32 %v1877, 0.0
      %v2664 = vmax.f32 %v1882, 0.0
      %v2665 = vmax.f32 %v1885, 0.0
      %v2666 = vmax.f32 %v1890, 0.0
      %v2667 = vmax.f32 %v1893, 0.0
      %v2668 = vmax.f32 %v1898, 0.0
      %v2669 = vmax.f32 %v1901, 0.0
      %v2670 = vmax.f32 %v1906, 0.0
      %v2671 = vmax.f32 %v1909, 0.0
      %v2672 = vmax.f32 %v1914, 0.0
      %v2673 = vmax.f32 %v1917, 0.0
      %v2674 = vmax.f32 %v1922, 0.0
      %v2675 = vmax.f32 %v1925, 0.0
      %v2676 = vmax.f32 %v1930, 0.0
      %v2677 = vmax.f32 %v1933, 0.0
      %v2678 = vmax.f32 %v1938, 0.0
      %v2679 = vmax.f32 %v1941, 0.0
      %v2680 = vmax.f32 %v1946, 0.0
      %v2681 = vmax.f32 %v1949, 0.0
      %v2682 = vmax.f32 %v1954, 0.0
      %v2683 = vmax.f32 %v1957, 0.0
      %v2684 = vmax.f32 %v1962, 0.0
      %v2685 = vmax.f32 %v1965, 0.0
      %v2686 = vmax.f32 %v1970, 0.0
      %v2687 = vmax.f32 %v1973, 0.0
      %v2688 = vmax.f32 %v1978, 0.0
      %v2689 = vmax.f32 %v1981, 0.0
      %v2690 = vmax.f32 %v1986, 0.0
      %v2691 = vmax.f32 %v1989, 0.0
      %v2692 = vmax.f32 %v1994, 0.0
      %v2693 = vmax.f32 %v1997, 0.0
      %v2694 = vmax.f32 %v2002, 0.0
      %v2695 = vmax.f32 %v2005, 0.0
      %v2696 = vmax.f32 %v2010, 0.0
      %v2697 = vmax.f32 %v2013, 0.0
      %v2698 = vmax.f32 %v2018, 0.0
      %v2699 = vmax.f32 %v2021, 0.0
      %v2700 = vmax.f32 %v2026, 0.0
      %v2701 = vmax.f32 %v2029, 0.0
      %v2702 = vmax.f32 %v2034, 0.0
      %v2703 = vmax.f32 %v2037, 0.0
      %v2704 = vmax.f32 %v2042, 0.0
      %v2705 = vmax.f32 %v2045, 0.0
      %v2706 = vmax.f32 %v2050, 0.0
      %v2707 = vmax.f32 %v2053, 0.0
      %v2708 = vmax.f32 %v2058, 0.0
      %v2709 = vmax.f32 %v2061, 0.0
      %v2710 = vmax.f32 %v2066, 0.0
      %v2711 = vmax.f32 %v2069, 0.0
      %v2712 = vmax.f32 %v2074, 0.0
      %v2713 = vmax.f32 %v2077, 0.0
      %v2714 = vmax.f32 %v2082, 0.0
      %v2715 = vmax.f32 %v2085, 0.0
      %v2716 = vmax.f32 %v2090, 0.0
      %v2717 = vmax.f32 %v2093, 0.0
      %v2718 = vmax.f32 %v2098, 0.0
      %v2719 = vmax.f32 %v2101, 0.0
      %v2720 = vmax.f32 %v2106, 0.0
      %v2721 = vmax.f32 %v2109, 0.0
      %v2722 = vmax.f32 %v2114, 0.0
      %v2723 = vmax.f32 %v2117, 0.0
      %v2724 = vmax.f32 %v2122, 0.0
      %v2725 = vmax.f32 %v2125, 0.0
      %v2726 = vmax.f32 %v2130, 0.0
      %v2727 = vmax.f32 %v2133, 0.0
      %v2728 = vmax.f32 %v2138, 0.0
      %v2729 = vmax.f32 %v2141, 0.0
      %v2730 = vmax.f32 %v2146, 0.0
      %v2731 = vmax.f32 %v2149, 0.0
      %v2732 = vmax.f32 %v2154, 0.0
      %v2733 = vmax.f32 %v2157, 0.0
      %v2734 = vmax.f32 %v2162, 0.0
      %v2735 = vmax.f32 %v2165, 0.0
      %v2736 = vmax.f32 %v2170, 0.0
      %v2737 = vmax.f32 %v2173, 0.0
      %v2738 = vmax.f32 %v2178, 0.0
      %v2739 = vmax.f32 %v2181, 0.0
      %v2740 = vmax.f32 %v2186, 0.0
      %v2741 = vmax.f32 %v2189, 0.0
      %v2742 = vmax.f32 %v2194, 0.0
      %v2743 = vmax.f32 %v2197, 0.0
      %v2744 = vmax.f32 %v2202, 0.0
      %v2745 = vmax.f32 %v2205, 0.0
      %v2746 = vmax.f32 %v2210, 0.0
      %v2747 = vmax.f32 %v2213, 0.0
      %v2748 = vmax.f32 %v2218, 0.0
      %v2749 = vmax.f32 %v2221, 0.0
      %v2750 = vmax.f32 %v2226, 0.0
      %v2751 = vmax.f32 %v2229, 0.0
      %v2752 = vmax.f32 %v2234, 0.0
      %v2753 = vmax.f32 %v2237, 0.0
      %v2754 = vmax.f32 %v2242, 0.0
      %v2755 = vmax.f32 %v2245, 0.0
      %v2756 = vmax.f32 %v2250, 0.0
      %v2757 = vmax.f32 %v2253, 0.0
      %v2758 = vmax.f32 %v2258, 0.0
      %v2759 = vmax.f32 %v2261, 0.0
      %v2760 = vmax.f32 %v2266, 0.0
      %v2761 = vmax.f32 %v2269, 0.0
      %v2762 = vmax.f32 %v2274, 0.0
      %v2763 = vmax.f32 %v2277, 0.0
      %v2764 = vmax.f32 %v2282, 0.0
      %v2765 = vmax.f32 %v2285, 0.0
      %v2766 = vmax.f32 %v2290, 0.0
      %v2767 = vmax.f32 %v2293, 0.0
      %v2768 = vmax.f32 %v2298, 0.0
      %v2769 = vmax.f32 %v2301, 0.0
      %v2770 = vmax.f32 %v2306, 0.0
      %v2771 = vmax.f32 %v2309, 0.0
      %v2772 = vmax.f32 %v2314, 0.0
      %v2773 = vmax.f32 %v2317, 0.0
      %v2774 = vmax.f32 %v2322, 0.0
      %v2775 = vmax.f32 %v2325, 0.0
      %v2776 = vmax.f32 %v2330, 0.0
      %v2777 = vmax.f32 %v2333, 0.0
      %v2778 = vmax.f32 %v2338, 0.0
      %v2779 = vmax.f32 %v2341, 0.0
      %v2780 = vmax.f32 %v2346, 0.0
      %v2781 = vmax.f32 %v2349, 0.0
      %v2782 = vmax.f32 %v2354, 0.0
      %v2783 = vmax.f32 %v2357, 0.0
      %v2784 = vmax.f32 %v2362, 0.0
      %v2785 = vmax.f32 %v2365, 0.0
      %v2786 = vmax.f32 %v2370, 0.0
      %v2787 = vmax.f32 %v2373, 0.0
      %v2788 = vmax.f32 %v2378, 0.0
      %v2789 = vmax.f32 %v2381, 0.0
      %v2790 = vmax.f32 %v2386, 0.0
      %v2791 = vmax.f32 %v2389, 0.0
      %v2792 = vmax.f32 %v2394, 0.0
      %v2793 = vmax.f32 %v2397, 0.0
      %v2794 = vmax.f32 %v2402, 0.0
      %v2795 = vmax.f32 %v2405, 0.0
      %v2796 = vmax.f32 %v2410, 0.0
      %v2797 = vmax.f32 %v2413, 0.0
      %v2798 = vmax.f32 %v2418, 0.0
      %v2799 = vmax.f32 %v2421, 0.0
      %v2800 = vmax.f32 %v2426, 0.0
      %v2801 = vmax.f32 %v2429, 0.0
      %v2802 = vmax.f32 %v2434, 0.0
      %v2803 = vmax.f32 %v2437, 0.0
      %v2804 = vmax.f32 %v2442, 0.0
      %v2805 = vmax.f32 %v2445, 0.0
      %v2806 = vmax.f32 %v2450, 0.0
      %v2807 = vmax.f32 %v2453, 0.0
      %v2808 = vmax.f32 %v2458, 0.0
      %v2809 = vmax.f32 %v2461, 0.0
      %v2810 = vmax.f32 %v2466, 0.0
      %v2811 = vmax.f32 %v2469, 0.0
      %v2812 = vmax.f32 %v2474, 0.0
      %v2813 = vmax.f32 %v2477, 0.0
      %v2814 = vmax.f32 %v2482, 0.0
      %v2815 = vmax.f32 %v2485, 0.0
      %v2816 = vmax.f32 %v2490, 0.0
      %v2817 = vmax.f32 %v2493, 0.0
      %v2818 = vmax.f32 %v2498, 0.0
      %v2819 = vmax.f32 %v2501, 0.0
      %v2820 = vmax.f32 %v2506, 0.0
      %v2821 = vmax.f32 %v2509, 0.0
      %v2822 = vmax.f32 %v2514, 0.0
      %v2823 = vmax.f32 %v2517, 0.0
      %v2824 = vmax.f32 %v2522, 0.0
      %v2825 = vmax.f32 %v2525, 0.0
      %v2826 = vmax.f32 %v2530, 0.0
      %v2827 = vmax.f32 %v2533, 0.0
      %v2828 = vmax.f32 %v2538, 0.0
      %v2829 = vmax.f32 %v2541, 0.0
      %v2830 = vmax.f32 %v2546, 0.0
      %v2831 = vmax.f32 %v2549, 0.0
      %v2832 = vmax.f32 %v2554, 0.0
      %v2833 = vmax.f32 %v2557, 0.0
      %v2834 = vmax.f32 %v2562, 0.0
      %v2835 = vmax.f32 %v2565, 0.0
      %v2836 = vmax.f32 %v2570, 0.0
      %v2837 = vmax.f32 %v2573, 0.0
      %v2838 = vmax.f32 %v2578, 0.0
      %v2839 = vmax.f32 %v2581, 0.0
      %v2840 = vld [vmem:[%s2] sm:$0xff]
      %v2841 = vld [vmem:[%s2 + $0x8] sm:$0xff]
      %v2842 = vld [vmem:[%s2 + $0x10] sm:$0xff]
      %v2843 = vld [vmem:[%s2 + $0x18] sm:$0xff]
      %v2844 = vld [vmem:[%s2 + $0x20] sm:$0xff]
      %v2845 = vld [vmem:[%s2 + $0x28] sm:$0xff]
      %v2846 = vld [vmem:[%s2 + $0x30] sm:$0xff]
      %v2847 = vld [vmem:[%s2 + $0x38] sm:$0xff]
      %v2848 = vpack.c.bf16 %v2585, %v2584
      %v2849 = vpack.c.bf16 %v2587, %v2586
      %v2850 = vpack.c.bf16 %v2589, %v2588
      %v2851 = vpack.c.bf16 %v2591, %v2590
      %v2852 = vpack.c.bf16 %v2593, %v2592
      %v2853 = vpack.c.bf16 %v2595, %v2594
      %v2854 = vpack.c.bf16 %v2597, %v2596
      %v2855 = vpack.c.bf16 %v2599, %v2598
      %v2856 = vpack.c.bf16 %v2601, %v2600
      %v2857 = vpack.c.bf16 %v2603, %v2602
      %v2858 = vpack.c.bf16 %v2605, %v2604
      %v2859 = vpack.c.bf16 %v2607, %v2606
      %v2860 = vpack.c.bf16 %v2609, %v2608
      %v2861 = vpack.c.bf16 %v2611, %v2610
      %v2862 = vpack.c.bf16 %v2613, %v2612
      %v2863 = vpack.c.bf16 %v2615, %v2614
      %v2864 = vpack.c.bf16 %v2617, %v2616
      %v2865 = vpack.c.bf16 %v2619, %v2618
      %v2866 = vpack.c.bf16 %v2621, %v2620
      %v2867 = vpack.c.bf16 %v2623, %v2622
      %v2868 = vpack.c.bf16 %v2625, %v2624
      %v2869 = vpack.c.bf16 %v2627, %v2626
      %v2870 = vpack.c.bf16 %v2629, %v2628
      %v2871 = vpack.c.bf16 %v2631, %v2630
      %v2872 = vpack.c.bf16 %v2633, %v2632
      %v2873 = vpack.c.bf16 %v2635, %v2634
      %v2874 = vpack.c.bf16 %v2637, %v2636
      %v2875 = vpack.c.bf16 %v2639, %v2638
      %v2876 = vpack.c.bf16 %v2641, %v2640
      %v2877 = vpack.c.bf16 %v2643, %v2642
      %v2878 = vpack.c.bf16 %v2645, %v2644
      %v2879 = vpack.c.bf16 %v2647, %v2646
      %v2880 = vpack.c.bf16 %v2649, %v2648
      %v2881 = vpack.c.bf16 %v2651, %v2650
      %v2882 = vpack.c.bf16 %v2653, %v2652
      %v2883 = vpack.c.bf16 %v2655, %v2654
      %v2884 = vpack.c.bf16 %v2657, %v2656
      %v2885 = vpack.c.bf16 %v2659, %v2658
      %v2886 = vpack.c.bf16 %v2661, %v2660
      %v2887 = vpack.c.bf16 %v2663, %v2662
      %v2888 = vpack.c.bf16 %v2665, %v2664
      %v2889 = vpack.c.bf16 %v2667, %v2666
      %v2890 = vpack.c.bf16 %v2669, %v2668
      %v2891 = vpack.c.bf16 %v2671, %v2670
      %v2892 = vpack.c.bf16 %v2673, %v2672
      %v2893 = vpack.c.bf16 %v2675, %v2674
      %v2894 = vpack.c.bf16 %v2677, %v2676
      %v2895 = vpack.c.bf16 %v2679, %v2678
      %v2896 = vpack.c.bf16 %v2681, %v2680
      %v2897 = vpack.c.bf16 %v2683, %v2682
      %v2898 = vpack.c.bf16 %v2685, %v2684
      %v2899 = vpack.c.bf16 %v2687, %v2686
      %v2900 = vpack.c.bf16 %v2689, %v2688
      %v2901 = vpack.c.bf16 %v2691, %v2690
      %v2902 = vpack.c.bf16 %v2693, %v2692
      %v2903 = vpack.c.bf16 %v2695, %v2694
      %v2904 = vpack.c.bf16 %v2697, %v2696
      %v2905 = vpack.c.bf16 %v2699, %v2698
      %v2906 = vpack.c.bf16 %v2701, %v2700
      %v2907 = vpack.c.bf16 %v2703, %v2702
      %v2908 = vpack.c.bf16 %v2705, %v2704
      %v2909 = vpack.c.bf16 %v2707, %v2706
      %v2910 = vpack.c.bf16 %v2709, %v2708
      %v2911 = vpack.c.bf16 %v2711, %v2710
      %v2912 = vpack.c.bf16 %v2713, %v2712
      %v2913 = vpack.c.bf16 %v2715, %v2714
      %v2914 = vpack.c.bf16 %v2717, %v2716
      %v2915 = vpack.c.bf16 %v2719, %v2718
      %v2916 = vpack.c.bf16 %v2721, %v2720
      %v2917 = vpack.c.bf16 %v2723, %v2722
      %v2918 = vpack.c.bf16 %v2725, %v2724
      %v2919 = vpack.c.bf16 %v2727, %v2726
      %v2920 = vpack.c.bf16 %v2729, %v2728
      %v2921 = vpack.c.bf16 %v2731, %v2730
      %v2922 = vpack.c.bf16 %v2733, %v2732
      %v2923 = vpack.c.bf16 %v2735, %v2734
      %v2924 = vpack.c.bf16 %v2737, %v2736
      %v2925 = vpack.c.bf16 %v2739, %v2738
      %v2926 = vpack.c.bf16 %v2741, %v2740
      %v2927 = vpack.c.bf16 %v2743, %v2742
      %v2928 = vpack.c.bf16 %v2745, %v2744
      %v2929 = vpack.c.bf16 %v2747, %v2746
      %v2930 = vpack.c.bf16 %v2749, %v2748
      %v2931 = vpack.c.bf16 %v2751, %v2750
      %v2932 = vpack.c.bf16 %v2753, %v2752
      %v2933 = vpack.c.bf16 %v2755, %v2754
      %v2934 = vpack.c.bf16 %v2757, %v2756
      %v2935 = vpack.c.bf16 %v2759, %v2758
      %v2936 = vpack.c.bf16 %v2761, %v2760
      %v2937 = vpack.c.bf16 %v2763, %v2762
      %v2938 = vpack.c.bf16 %v2765, %v2764
      %v2939 = vpack.c.bf16 %v2767, %v2766
      %v2940 = vpack.c.bf16 %v2769, %v2768
      %v2941 = vpack.c.bf16 %v2771, %v2770
      %v2942 = vpack.c.bf16 %v2773, %v2772
      %v2943 = vpack.c.bf16 %v2775, %v2774
      %v2944 = vpack.c.bf16 %v2777, %v2776
      %v2945 = vpack.c.bf16 %v2779, %v2778
      %v2946 = vpack.c.bf16 %v2781, %v2780
      %v2947 = vpack.c.bf16 %v2783, %v2782
      %v2948 = vpack.c.bf16 %v2785, %v2784
      %v2949 = vpack.c.bf16 %v2787, %v2786
      %v2950 = vpack.c.bf16 %v2789, %v2788
      %v2951 = vpack.c.bf16 %v2791, %v2790
      %v2952 = vpack.c.bf16 %v2793, %v2792
      %v2953 = vpack.c.bf16 %v2795, %v2794
      %v2954 = vpack.c.bf16 %v2797, %v2796
      %v2955 = vpack.c.bf16 %v2799, %v2798
      %v2956 = vpack.c.bf16 %v2801, %v2800
      %v2957 = vpack.c.bf16 %v2803, %v2802
      %v2958 = vpack.c.bf16 %v2805, %v2804
      %v2959 = vpack.c.bf16 %v2807, %v2806
      %v2960 = vpack.c.bf16 %v2809, %v2808
      %v2961 = vpack.c.bf16 %v2811, %v2810
      %v2962 = vpack.c.bf16 %v2813, %v2812
      %v2963 = vpack.c.bf16 %v2815, %v2814
      %v2964 = vpack.c.bf16 %v2817, %v2816
      %v2965 = vpack.c.bf16 %v2819, %v2818
      %v2966 = vpack.c.bf16 %v2821, %v2820
      %v2967 = vpack.c.bf16 %v2823, %v2822
      %v2968 = vpack.c.bf16 %v2825, %v2824
      %v2969 = vpack.c.bf16 %v2827, %v2826
      %v2970 = vpack.c.bf16 %v2829, %v2828
      %v2971 = vpack.c.bf16 %v2831, %v2830
      %v2972 = vpack.c.bf16 %v2833, %v2832
      %v2973 = vpack.c.bf16 %v2835, %v2834
      %v2974 = vpack.c.bf16 %v2837, %v2836
      %v2975 = vpack.c.bf16 %v2839, %v2838
      %v2984 = vunpack.c.l.b16 %v2840
      %v2985 = vunpack.c.h.b16 %v2840
      %v2986 = vunpack.c.l.b16 %v2841
      %v2987 = vunpack.c.h.b16 %v2841
      %v2988 = vunpack.c.l.b16 %v2842
      %v2989 = vunpack.c.h.b16 %v2842
      %v2990 = vunpack.c.l.b16 %v2843
      %v2991 = vunpack.c.h.b16 %v2843
      %v2992 = vunpack.c.l.b16 %v2844
      %v2993 = vunpack.c.h.b16 %v2844
      %v2994 = vunpack.c.l.b16 %v2845
      %v2995 = vunpack.c.h.b16 %v2845
      %v2996 = vunpack.c.l.b16 %v2846
      %v2997 = vunpack.c.h.b16 %v2846
      %v2998 = vunpack.c.l.b16 %v2847
      %v2999 = vunpack.c.h.b16 %v2847
      %v3000 = vpack.c.b16 %v2984, %v2984
      %v3001 = vpack.c.b16 %v2985, %v2985
      %v3002 = vpack.c.b16 %v2986, %v2986
      %v3003 = vpack.c.b16 %v2987, %v2987
      %v3004 = vpack.c.b16 %v2988, %v2988
      %v3005 = vpack.c.b16 %v2989, %v2989
      %v3006 = vpack.c.b16 %v2990, %v2990
      %v3007 = vpack.c.b16 %v2991, %v2991
      %v3008 = vpack.c.b16 %v2992, %v2992
      %v3009 = vpack.c.b16 %v2993, %v2993
      %v3010 = vpack.c.b16 %v2994, %v2994
      %v3011 = vpack.c.b16 %v2995, %v2995
      %v3012 = vpack.c.b16 %v2996, %v2996
      %v3013 = vpack.c.b16 %v2997, %v2997
      %v3014 = vpack.c.b16 %v2998, %v2998
      %v3015 = vpack.c.b16 %v2999, %v2999
      %3032 = vmatprep.subr.bf16.mxu0 0
      %3033 = vmatpush1.bf16.msra.mxu0 %v2848
      %3034 = vmatprep.subr.bf16.mxu0 0
      %3035 = vmatpush1.bf16.msra.mxu0 %v2849
      %3036 = vmatprep.subr.bf16.mxu0 0
      %3037 = vmatpush1.bf16.msra.mxu0 %v2850
      %3038 = vmatprep.subr.bf16.mxu0 0
      %3039 = vmatpush1.bf16.msra.mxu0 %v2851
      %3040 = vmatprep.subr.bf16.mxu0 0
      %3041 = vmatpush1.bf16.msra.mxu0 %v2852
      %3042 = vmatprep.subr.bf16.mxu0 0
      %3043 = vmatpush1.bf16.msra.mxu0 %v2853
      %3044 = vmatprep.subr.bf16.mxu0 0
      %3045 = vmatpush1.bf16.msra.mxu0 %v2854
      %3046 = vmatprep.subr.bf16.mxu0 0
      %3047 = vmatpush1.bf16.msra.mxu0 %v2855
      %3048 = vmatprep.subr.bf16.mxu0 0
      %3049 = vmatpush1.bf16.msra.mxu0 %v2856
      %3050 = vmatprep.subr.bf16.mxu0 0
      %3051 = vmatpush1.bf16.msra.mxu0 %v2857
      %3052 = vmatprep.subr.bf16.mxu0 0
      %3053 = vmatpush1.bf16.msra.mxu0 %v2858
      %3054 = vmatprep.subr.bf16.mxu0 0
      %3055 = vmatpush1.bf16.msra.mxu0 %v2859
      %3056 = vmatprep.subr.bf16.mxu0 0
      %3057 = vmatpush1.bf16.msra.mxu0 %v2860
      %3058 = vmatprep.subr.bf16.mxu0 0
      %3059 = vmatpush1.bf16.msra.mxu0 %v2861
      %3060 = vmatprep.subr.bf16.mxu0 0
      %3061 = vmatpush1.bf16.msra.mxu0 %v2862
      %3062 = vmatprep.subr.bf16.mxu0 0
      %3063 = vmatpush1.bf16.msra.mxu0 %v2863
      %3064 = vmatprep.mubr.bf16.mxu0 %v3001
      %3065 = vmatmul.mubr.bf16.gmra.mrb[0].mxu0 %v3000
      %v3066 = vpop.f32.mrb[0].mxu0
      %v3067 = vadd.f32 0.0, %v3066
      %v3068 = vpop.f32.mrb[0].mxu0
      %v3069 = vpop.f32.mrb[0].mxu0
      %v3070 = vpop.f32.mrb[0].mxu0
      %3071 = vdwg.mxu0
      %3072 = vmatprep.subr.bf16.mxu0 0
      %3073 = vmatpush1.bf16.msra.mxu0 %v2864
      %3074 = vmatprep.subr.bf16.mxu0 0
      %3075 = vmatpush1.bf16.msra.mxu0 %v2865
      %3076 = vmatprep.subr.bf16.mxu0 0
      %3077 = vmatpush1.bf16.msra.mxu0 %v2866
      %3078 = vmatprep.subr.bf16.mxu0 0
      %3079 = vmatpush1.bf16.msra.mxu0 %v2867
      %3080 = vmatprep.subr.bf16.mxu0 0
      %3081 = vmatpush1.bf16.msra.mxu0 %v2868
      %3082 = vmatprep.subr.bf16.mxu0 0
      %3083 = vmatpush1.bf16.msra.mxu0 %v2869
      %3084 = vmatprep.subr.bf16.mxu0 0
      %3085 = vmatpush1.bf16.msra.mxu0 %v2870
      %3086 = vmatprep.subr.bf16.mxu0 0
      %3087 = vmatpush1.bf16.msra.mxu0 %v2871
      %3088 = vmatprep.subr.bf16.mxu0 0
      %3089 = vmatpush1.bf16.msra.mxu0 %v2872
      %3090 = vmatprep.subr.bf16.mxu0 0
      %3091 = vmatpush1.bf16.msra.mxu0 %v2873
      %3092 = vmatprep.subr.bf16.mxu0 0
      %3093 = vmatpush1.bf16.msra.mxu0 %v2874
      %3094 = vmatprep.subr.bf16.mxu0 0
      %3095 = vmatpush1.bf16.msra.mxu0 %v2875
      %3096 = vmatprep.subr.bf16.mxu0 0
      %3097 = vmatpush1.bf16.msra.mxu0 %v2876
      %3098 = vmatprep.subr.bf16.mxu0 0
      %3099 = vmatpush1.bf16.msra.mxu0 %v2877
      %3100 = vmatprep.subr.bf16.mxu0 0
      %3101 = vmatpush1.bf16.msra.mxu0 %v2878
      %3102 = vmatprep.subr.bf16.mxu0 0
      %3103 = vmatpush1.bf16.msra.mxu0 %v2879
      %3104 = vmatprep.mubr.bf16.mxu0 %v3003
      %3105 = vmatmul.mubr.bf16.gmra.mrb[0].mxu0 %v3002
      %v3106 = vpop.f32.mrb[0].mxu0
      %v3107 = vadd.f32 %v3067, %v3106
      %v3108 = vpop.f32.mrb[0].mxu0
      %v3109 = vpop.f32.mrb[0].mxu0
      %v3110 = vpop.f32.mrb[0].mxu0
      %3111 = vdwg.mxu0
      %3112 = vmatprep.subr.bf16.mxu0 0
      %3113 = vmatpush1.bf16.msra.mxu0 %v2880
      %3114 = vmatprep.subr.bf16.mxu0 0
      %3115 = vmatpush1.bf16.msra.mxu0 %v2881
      %3116 = vmatprep.subr.bf16.mxu0 0
      %3117 = vmatpush1.bf16.msra.mxu0 %v2882
      %3118 = vmatprep.subr.bf16.mxu0 0
      %3119 = vmatpush1.bf16.msra.mxu0 %v2883
      %3120 = vmatprep.subr.bf16.mxu0 0
      %3121 = vmatpush1.bf16.msra.mxu0 %v2884
      %3122 = vmatprep.subr.bf16.mxu0 0
      %3123 = vmatpush1.bf16.msra.mxu0 %v2885
      %3124 = vmatprep.subr.bf16.mxu0 0
      %3125 = vmatpush1.bf16.msra.mxu0 %v2886
      %3126 = vmatprep.subr.bf16.mxu0 0
      %3127 = vmatpush1.bf16.msra.mxu0 %v2887
      %3128 = vmatprep.subr.bf16.mxu0 0
      %3129 = vmatpush1.bf16.msra.mxu0 %v2888
      %3130 = vmatprep.subr.bf16.mxu0 0
      %3131 = vmatpush1.bf16.msra.mxu0 %v2889
      %3132 = vmatprep.subr.bf16.mxu0 0
      %3133 = vmatpush1.bf16.msra.mxu0 %v2890
      %3134 = vmatprep.subr.bf16.mxu0 0
      %3135 = vmatpush1.bf16.msra.mxu0 %v2891
      %3136 = vmatprep.subr.bf16.mxu0 0
      %3137 = vmatpush1.bf16.msra.mxu0 %v2892
      %3138 = vmatprep.subr.bf16.mxu0 0
      %3139 = vmatpush1.bf16.msra.mxu0 %v2893
      %3140 = vmatprep.subr.bf16.mxu0 0
      %3141 = vmatpush1.bf16.msra.mxu0 %v2894
      %3142 = vmatprep.subr.bf16.mxu0 0
      %3143 = vmatpush1.bf16.msra.mxu0 %v2895
      %3144 = vmatprep.mubr.bf16.mxu0 %v3005
      %3145 = vmatmul.mubr.bf16.gmra.mrb[0].mxu0 %v3004
      %v3146 = vpop.f32.mrb[0].mxu0
      %v3147 = vadd.f32 %v3107, %v3146
      %v3148 = vpop.f32.mrb[0].mxu0
      %v3149 = vpop.f32.mrb[0].mxu0
      %v3150 = vpop.f32.mrb[0].mxu0
      %3151 = vdwg.mxu0
      %3152 = vmatprep.subr.bf16.mxu0 0
      %3153 = vmatpush1.bf16.msra.mxu0 %v2896
      %3154 = vmatprep.subr.bf16.mxu0 0
      %3155 = vmatpush1.bf16.msra.mxu0 %v2897
      %3156 = vmatprep.subr.bf16.mxu0 0
      %3157 = vmatpush1.bf16.msra.mxu0 %v2898
      %3158 = vmatprep.subr.bf16.mxu0 0
      %3159 = vmatpush1.bf16.msra.mxu0 %v2899
      %3160 = vmatprep.subr.bf16.mxu0 0
      %3161 = vmatpush1.bf16.msra.mxu0 %v2900
      %3162 = vmatprep.subr.bf16.mxu0 0
      %3163 = vmatpush1.bf16.msra.mxu0 %v2901
      %3164 = vmatprep.subr.bf16.mxu0 0
      %3165 = vmatpush1.bf16.msra.mxu0 %v2902
      %3166 = vmatprep.subr.bf16.mxu0 0
      %3167 = vmatpush1.bf16.msra.mxu0 %v2903
      %3168 = vmatprep.subr.bf16.mxu0 0
      %3169 = vmatpush1.bf16.msra.mxu0 %v2904
      %3170 = vmatprep.subr.bf16.mxu0 0
      %3171 = vmatpush1.bf16.msra.mxu0 %v2905
      %3172 = vmatprep.subr.bf16.mxu0 0
      %3173 = vmatpush1.bf16.msra.mxu0 %v2906
      %3174 = vmatprep.subr.bf16.mxu0 0
      %3175 = vmatpush1.bf16.msra.mxu0 %v2907
      %3176 = vmatprep.subr.bf16.mxu0 0
      %3177 = vmatpush1.bf16.msra.mxu0 %v2908
      %3178 = vmatprep.subr.bf16.mxu0 0
      %3179 = vmatpush1.bf16.msra.mxu0 %v2909
      %3180 = vmatprep.subr.bf16.mxu0 0
      %3181 = vmatpush1.bf16.msra.mxu0 %v2910
      %3182 = vmatprep.subr.bf16.mxu0 0
      %3183 = vmatpush1.bf16.msra.mxu0 %v2911
      %3184 = vmatprep.mubr.bf16.mxu0 %v3007
      %3185 = vmatmul.mubr.bf16.gmra.mrb[0].mxu0 %v3006
      %v3186 = vpop.f32.mrb[0].mxu0
      %v3187 = vadd.f32 %v3147, %v3186
      %v3188 = vpop.f32.mrb[0].mxu0
      %v3189 = vpop.f32.mrb[0].mxu0
      %v3190 = vpop.f32.mrb[0].mxu0
      %3191 = vdwg.mxu0
      %3192 = vmatprep.subr.bf16.mxu0 0
      %3193 = vmatpush1.bf16.msra.mxu0 %v2912
      %3194 = vmatprep.subr.bf16.mxu0 0
      %3195 = vmatpush1.bf16.msra.mxu0 %v2913
      %3196 = vmatprep.subr.bf16.mxu0 0
      %3197 = vmatpush1.bf16.msra.mxu0 %v2914
      %3198 = vmatprep.subr.bf16.mxu0 0
      %3199 = vmatpush1.bf16.msra.mxu0 %v2915
      %3200 = vmatprep.subr.bf16.mxu0 0
      %3201 = vmatpush1.bf16.msra.mxu0 %v2916
      %3202 = vmatprep.subr.bf16.mxu0 0
      %3203 = vmatpush1.bf16.msra.mxu0 %v2917
      %3204 = vmatprep.subr.bf16.mxu0 0
      %3205 = vmatpush1.bf16.msra.mxu0 %v2918
      %3206 = vmatprep.subr.bf16.mxu0 0
      %3207 = vmatpush1.bf16.msra.mxu0 %v2919
      %3208 = vmatprep.subr.bf16.mxu0 0
      %3209 = vmatpush1.bf16.msra.mxu0 %v2920
      %3210 = vmatprep.subr.bf16.mxu0 0
      %3211 = vmatpush1.bf16.msra.mxu0 %v2921
      %3212 = vmatprep.subr.bf16.mxu0 0
      %3213 = vmatpush1.bf16.msra.mxu0 %v2922
      %3214 = vmatprep.subr.bf16.mxu0 0
      %3215 = vmatpush1.bf16.msra.mxu0 %v2923
      %3216 = vmatprep.subr.bf16.mxu0 0
      %3217 = vmatpush1.bf16.msra.mxu0 %v2924
      %3218 = vmatprep.subr.bf16.mxu0 0
      %3219 = vmatpush1.bf16.msra.mxu0 %v2925
      %3220 = vmatprep.subr.bf16.mxu0 0
      %3221 = vmatpush1.bf16.msra.mxu0 %v2926
      %3222 = vmatprep.subr.bf16.mxu0 0
      %3223 = vmatpush1.bf16.msra.mxu0 %v2927
      %3224 = vmatprep.mubr.bf16.mxu0 %v3009
      %3225 = vmatmul.mubr.bf16.gmra.mrb[0].mxu0 %v3008
      %v3226 = vpop.f32.mrb[0].mxu0
      %v3227 = vadd.f32 %v3187, %v3226
      %v3228 = vpop.f32.mrb[0].mxu0
      %v3229 = vpop.f32.mrb[0].mxu0
      %v3230 = vpop.f32.mrb[0].mxu0
      %3231 = vdwg.mxu0
      %3232 = vmatprep.subr.bf16.mxu0 0
      %3233 = vmatpush1.bf16.msra.mxu0 %v2928
      %3234 = vmatprep.subr.bf16.mxu0 0
      %3235 = vmatpush1.bf16.msra.mxu0 %v2929
      %3236 = vmatprep.subr.bf16.mxu0 0
      %3237 = vmatpush1.bf16.msra.mxu0 %v2930
      %3238 = vmatprep.subr.bf16.mxu0 0
      %3239 = vmatpush1.bf16.msra.mxu0 %v2931
      %3240 = vmatprep.subr.bf16.mxu0 0
      %3241 = vmatpush1.bf16.msra.mxu0 %v2932
      %3242 = vmatprep.subr.bf16.mxu0 0
      %3243 = vmatpush1.bf16.msra.mxu0 %v2933
      %3244 = vmatprep.subr.bf16.mxu0 0
      %3245 = vmatpush1.bf16.msra.mxu0 %v2934
      %3246 = vmatprep.subr.bf16.mxu0 0
      %3247 = vmatpush1.bf16.msra.mxu0 %v2935
      %3248 = vmatprep.subr.bf16.mxu0 0
      %3249 = vmatpush1.bf16.msra.mxu0 %v2936
      %3250 = vmatprep.subr.bf16.mxu0 0
      %3251 = vmatpush1.bf16.msra.mxu0 %v2937
      %3252 = vmatprep.subr.bf16.mxu0 0
      %3253 = vmatpush1.bf16.msra.mxu0 %v2938
      %3254 = vmatprep.subr.bf16.mxu0 0
      %3255 = vmatpush1.bf16.msra.mxu0 %v2939
      %3256 = vmatprep.subr.bf16.mxu0 0
      %3257 = vmatpush1.bf16.msra.mxu0 %v2940
      %3258 = vmatprep.subr.bf16.mxu0 0
      %3259 = vmatpush1.bf16.msra.mxu0 %v2941
      %3260 = vmatprep.subr.bf16.mxu0 0
      %3261 = vmatpush1.bf16.msra.mxu0 %v2942
      %3262 = vmatprep.subr.bf16.mxu0 0
      %3263 = vmatpush1.bf16.msra.mxu0 %v2943
      %3264 = vmatprep.mubr.bf16.mxu0 %v3011
      %3265 = vmatmul.mubr.bf16.gmra.mrb[0].mxu0 %v3010
      %v3266 = vpop.f32.mrb[0].mxu0
      %v3267 = vadd.f32 %v3227, %v3266
      %v3268 = vpop.f32.mrb[0].mxu0
      %v3269 = vpop.f32.mrb[0].mxu0
      %v3270 = vpop.f32.mrb[0].mxu0
      %3271 = vdwg.mxu0
      %3272 = vmatprep.subr.bf16.mxu0 0
      %3273 = vmatpush1.bf16.msra.mxu0 %v2944
      %3274 = vmatprep.subr.bf16.mxu0 0
      %3275 = vmatpush1.bf16.msra.mxu0 %v2945
      %3276 = vmatprep.subr.bf16.mxu0 0
      %3277 = vmatpush1.bf16.msra.mxu0 %v2946
      %3278 = vmatprep.subr.bf16.mxu0 0
      %3279 = vmatpush1.bf16.msra.mxu0 %v2947
      %3280 = vmatprep.subr.bf16.mxu0 0
      %3281 = vmatpush1.bf16.msra.mxu0 %v2948
      %3282 = vmatprep.subr.bf16.mxu0 0
      %3283 = vmatpush1.bf16.msra.mxu0 %v2949
      %3284 = vmatprep.subr.bf16.mxu0 0
      %3285 = vmatpush1.bf16.msra.mxu0 %v2950
      %3286 = vmatprep.subr.bf16.mxu0 0
      %3287 = vmatpush1.bf16.msra.mxu0 %v2951
      %3288 = vmatprep.subr.bf16.mxu0 0
      %3289 = vmatpush1.bf16.msra.mxu0 %v2952
      %3290 = vmatprep.subr.bf16.mxu0 0
      %3291 = vmatpush1.bf16.msra.mxu0 %v2953
      %3292 = vmatprep.subr.bf16.mxu0 0
      %3293 = vmatpush1.bf16.msra.mxu0 %v2954
      %3294 = vmatprep.subr.bf16.mxu0 0
      %3295 = vmatpush1.bf16.msra.mxu0 %v2955
      %3296 = vmatprep.subr.bf16.mxu0 0
      %3297 = vmatpush1.bf16.msra.mxu0 %v2956
      %3298 = vmatprep.subr.bf16.mxu0 0
      %3299 = vmatpush1.bf16.msra.mxu0 %v2957
      %3300 = vmatprep.subr.bf16.mxu0 0
      %3301 = vmatpush1.bf16.msra.mxu0 %v2958
      %3302 = vmatprep.subr.bf16.mxu0 0
      %3303 = vmatpush1.bf16.msra.mxu0 %v2959
      %3304 = vmatprep.mubr.bf16.mxu0 %v3013
      %3305 = vmatmul.mubr.bf16.gmra.mrb[0].mxu0 %v3012
      %v3306 = vpop.f32.mrb[0].mxu0
      %v3307 = vadd.f32 %v3267, %v3306
      %v3308 = vpop.f32.mrb[0].mxu0
      %v3309 = vpop.f32.mrb[0].mxu0
      %v3310 = vpop.f32.mrb[0].mxu0
      %3311 = vdwg.mxu0
      %3312 = vmatprep.subr.bf16.mxu0 0
      %3313 = vmatpush1.bf16.msra.mxu0 %v2960
      %3314 = vmatprep.subr.bf16.mxu0 0
      %3315 = vmatpush1.bf16.msra.mxu0 %v2961
      %3316 = vmatprep.subr.bf16.mxu0 0
      %3317 = vmatpush1.bf16.msra.mxu0 %v2962
      %3318 = vmatprep.subr.bf16.mxu0 0
      %3319 = vmatpush1.bf16.msra.mxu0 %v2963
      %3320 = vmatprep.subr.bf16.mxu0 0
      %3321 = vmatpush1.bf16.msra.mxu0 %v2964
      %3322 = vmatprep.subr.bf16.mxu0 0
      %3323 = vmatpush1.bf16.msra.mxu0 %v2965
      %3324 = vmatprep.subr.bf16.mxu0 0
      %3325 = vmatpush1.bf16.msra.mxu0 %v2966
      %3326 = vmatprep.subr.bf16.mxu0 0
      %3327 = vmatpush1.bf16.msra.mxu0 %v2967
      %3328 = vmatprep.subr.bf16.mxu0 0
      %3329 = vmatpush1.bf16.msra.mxu0 %v2968
      %3330 = vmatprep.subr.bf16.mxu0 0
      %3331 = vmatpush1.bf16.msra.mxu0 %v2969
      %3332 = vmatprep.subr.bf16.mxu0 0
      %3333 = vmatpush1.bf16.msra.mxu0 %v2970
      %3334 = vmatprep.subr.bf16.mxu0 0
      %3335 = vmatpush1.bf16.msra.mxu0 %v2971
      %3336 = vmatprep.subr.bf16.mxu0 0
      %3337 = vmatpush1.bf16.msra.mxu0 %v2972
      %3338 = vmatprep.subr.bf16.mxu0 0
      %3339 = vmatpush1.bf16.msra.mxu0 %v2973
      %3340 = vmatprep.subr.bf16.mxu0 0
      %3341 = vmatpush1.bf16.msra.mxu0 %v2974
      %3342 = vmatprep.subr.bf16.mxu0 0
      %3343 = vmatpush1.bf16.msra.mxu0 %v2975
      %3344 = vmatprep.mubr.bf16.mxu0 %v3015
      %3345 = vmatmul.mubr.bf16.gmra.mrb[0].mxu0 %v3014
      %v3346 = vpop.f32.mrb[0].mxu0
      %v3347 = vadd.f32 %v3307, %v3346
      %v3348 = vpop.f32.mrb[0].mxu0
      %v3349 = vpop.f32.mrb[0].mxu0
      %v3350 = vpop.f32.mrb[0].mxu0
      %3351 = vdwg.mxu0
      %v3352 = vpack.c.bf16 %v3347, %v3347
      %v3353 = vld [vmem:[%s3] sm:$0xf]
      %v3354 = vld [vmem:[%s3 + $0x4] sm:$0xf]
      %v3355 = vld [vmem:[%s3 + $0x8] sm:$0xf]
      %v3356 = vld [vmem:[%s3 + $0xc] sm:$0xf]
      %v3357 = vld [vmem:[%s3 + $0x10] sm:$0xf]
      %v3358 = vld [vmem:[%s3 + $0x14] sm:$0xf]
      %v3359 = vld [vmem:[%s3 + $0x18] sm:$0xf]
      %v3360 = vld [vmem:[%s3 + $0x1c] sm:$0xf]
      %v3361 = vld [vmem:[%s3 + $0x20] sm:$0xf]
      %v3362 = vld [vmem:[%s3 + $0x24] sm:$0xf]
      %v3363 = vld [vmem:[%s3 + $0x28] sm:$0xf]
      %v3364 = vld [vmem:[%s3 + $0x2c] sm:$0xf]
      %v3365 = vld [vmem:[%s3 + $0x30] sm:$0xf]
      %v3366 = vld [vmem:[%s3 + $0x34] sm:$0xf]
      %v3367 = vld [vmem:[%s3 + $0x38] sm:$0xf]
      %v3368 = vld [vmem:[%s3 + $0x3c] sm:$0xf]
      %v3369 = vld [vmem:[%s4] sm:$0x1]
      %v3371 = vlaneseq
      %v3372 = vshrl.u32 %v3371, 7
      %v3373 = vsub.s32 0, %v3372
      %v3374 = vrot.slane %v3369, %v3373
      %v3392 = vunpack.c.l.b16 %v3353
      %v3393 = vunpack.c.l.b16 %v3354
      %v3394 = vunpack.c.l.b16 %v3355
      %v3395 = vunpack.c.l.b16 %v3356
      %v3396 = vunpack.c.l.b16 %v3357
      %v3397 = vunpack.c.l.b16 %v3358
      %v3398 = vunpack.c.l.b16 %v3359
      %v3399 = vunpack.c.l.b16 %v3360
      %v3400 = vunpack.c.l.b16 %v3361
      %v3401 = vunpack.c.l.b16 %v3362
      %v3402 = vunpack.c.l.b16 %v3363
      %v3403 = vunpack.c.l.b16 %v3364
      %v3404 = vunpack.c.l.b16 %v3365
      %v3405 = vunpack.c.l.b16 %v3366
      %v3406 = vunpack.c.l.b16 %v3367
      %v3407 = vunpack.c.l.b16 %v3368
      %v3408 = vpack.c.b16 %v3393, %v3392
      %v3409 = vpack.c.b16 %v3395, %v3394
      %v3410 = vpack.c.b16 %v3397, %v3396
      %v3411 = vpack.c.b16 %v3399, %v3398
      %v3412 = vpack.c.b16 %v3401, %v3400
      %v3413 = vpack.c.b16 %v3403, %v3402
      %v3414 = vpack.c.b16 %v3405, %v3404
      %v3415 = vpack.c.b16 %v3407, %v3406
      %3424 = vmatprep.subr.bf16.mxu0 0
      %3425 = vmatpush1.bf16.msra.mxu0 %v3408
      %3426 = vmatprep.subr.bf16.mxu0 0
      %3427 = vmatpush1.bf16.msra.mxu0 %v3409
      %3428 = vmatprep.subr.bf16.mxu0 0
      %3429 = vmatpush1.bf16.msra.mxu0 %v3410
      %3430 = vmatprep.subr.bf16.mxu0 0
      %3431 = vmatpush1.bf16.msra.mxu0 %v3411
      %3432 = vmatprep.subr.bf16.mxu0 0
      %3433 = vmatpush1.bf16.msra.mxu0 %v3412
      %3434 = vmatprep.subr.bf16.mxu0 0
      %3435 = vmatpush1.bf16.msra.mxu0 %v3413
      %3436 = vmatprep.subr.bf16.mxu0 0
      %3437 = vmatpush1.bf16.msra.mxu0 %v3414
      %3438 = vmatprep.subr.bf16.mxu0 0
      %3439 = vmatpush1.bf16.msra.mxu0 %v3415
      %3440 = vmatprep.subr.bf16.mxu0 0
      %3441 = vmatpush1.bf16.msra.mxu0 0
      %3442 = vmatprep.subr.bf16.mxu0 0
      %3443 = vmatpush1.bf16.msra.mxu0 0
      %3444 = vmatprep.subr.bf16.mxu0 0
      %3445 = vmatpush1.bf16.msra.mxu0 0
      %3446 = vmatprep.subr.bf16.mxu0 0
      %3447 = vmatpush1.bf16.msra.mxu0 0
      %3448 = vmatprep.subr.bf16.mxu0 0
      %3449 = vmatpush1.bf16.msra.mxu0 0
      %3450 = vmatprep.subr.bf16.mxu0 0
      %3451 = vmatpush1.bf16.msra.mxu0 0
      %3452 = vmatprep.subr.bf16.mxu0 0
      %3453 = vmatpush1.bf16.msra.mxu0 0
      %3454 = vmatprep.subr.bf16.mxu0 0
      %3455 = vmatpush1.bf16.msra.mxu0 0
      %3456 = vmatprep.mubr.bf16.mxu0 0
      %3457 = vmatmul.mubr.bf16.gmra.mrb[0].mxu0 %v3352
      %v3458 = vpop.f32.mrb[0].mxu0
      %v3459 = vadd.f32 %v3374, %v3458
      %v3460 = vpop.f32.mrb[0].mxu0
      %v3461 = vpop.f32.mrb[0].mxu0
      %v3462 = vpop.f32.mrb[0].mxu0
      %3463 = vdwg.mxu0
      %v3464 = vmax.f32 %v3459, 0.0
      %v3466 = vrot.slane %v3464, 2
      %v3468 = vadd.f32 %v3464, %v3466
      %v3469 = vrot.slane %v3464, 4
      %v3471 = vadd.f32 %v3468, %v3469
      %v3472 = vrot.slane %v3464, 6
      %v3474 = vadd.f32 %v3471, %v3472
      %3475 = vst [vmem:[%s239] sm:$0x3] %v3474
      %p3476 = scmp.lt.s32.totalorder %s16, 1
      %s3477 = scalar_select %p3476, %s16, 1
      %s3478 = smul.addr %s3477, 2
      %s3479 = scalar_lea.vmem %s5, %s3478
      // Predicated region
      $region41: #{_lambda_.1} parent=39 // pred_check
        %p3480 = pneg %p149
      $region42: #{_lambda_.1} parent=39 // pred_check_branch
        %3482 = sbr.rel (%p3480) target = $region44
      $region43: #{_lambda_.1} parent=39 // pred_region
        _
      $region44: #{_lambda_.1} parent=39 // pred_fallthru
        _
    $region40: #{_lambda_.1} parent=5 // pred_fallthru
      _
    %p3483 = scmp.le.s32.totalorder 2, %s11
    // Predicated region
    $region45: #{_lambda_.1} parent=5 // pred_check
      %p3484 = pneg %p3483
    $region46: #{_lambda_.1} parent=5 // pred_check_branch
      %3486 = sbr.rel (%p3484) target = $region48
    $region47: #{_lambda_.1} parent=5 // pred_region
      %s3487 = ssub.s32 %s11, 2
      // Predicated region
      $region49: #{_lambda_.1} parent=47 // pred_check
        %p3488 = pneg %p155
      $region50: #{_lambda_.1} parent=47 // pred_check_branch
        %3490 = sbr.rel (%p3488) target = $region52
      $region51: #{_lambda_.1} parent=47 // pred_region
        %p3491 = scmp.lt.s32.totalorder %s17, 1
        %s3492 = scalar_select %p3491, %s17, 1
        %s3493 = smul.addr %s3492, 2
        %s3494 = scalar_lea.vmem %s5, %s3493
      $region52: #{_lambda_.1} parent=47 // pred_fallthru
        _
    $region48: #{_lambda_.1} parent=5 // pred_fallthru
      _
  $region6: #{_lambda_.1} parent=0 // loop_footer
    %s15 = sadd.s32 1, %s11
  $region7: #{_lambda_.1} parent=0 // loop_footer_branch
    %10 = sbr.rel target = $region3
  $region8: #{_lambda_.1} parent=0 // loop_exit
    _

</llo_original>
